<compile_context>
chip_gen: v7x
topology: tpu7x:2x2x1
jax: 0.10.0
libtpu: 0.0.40
codegen_flags: <defaults>
</compile_context>

<pallas_src>
import functools

import jax
import jax.numpy as jnp
from jax import lax
from jax.experimental import pallas as pl
from jax.experimental.pallas import tpu as pltpu


# ----------------------------- kernel helpers -------------------------------


def _flash_attention(q, k, v, *, kv_chunk):
    """softmax(q @ k^T) @ v with online softmax over static kv chunks.

    q: (N, Dq), k: (N, Dq), v: (N, Dv) f32.  MXU operands are bf16, all softmax
    statistics and the accumulator stay f32.  kv_chunk must divide N (chosen by
    the wrapper).  The (N, kv_chunk) score tile is the only N-by-chunk
    temporary, so VMEM use is O(N * kv_chunk) rather than O(N^2).
    """
    n = k.shape[0]
    dv = v.shape[1]
    num_chunks = n // kv_chunk

    q16 = q.astype(jnp.bfloat16)
    m_i = jnp.full((n, 1), -jnp.inf, jnp.float32)
    l_i = jnp.zeros((n, 1), jnp.float32)
    acc = jnp.zeros((n, dv), jnp.float32)

    for c in range(num_chunks):                      # static unroll
        lo, hi = c * kv_chunk, (c + 1) * kv_chunk
        ks = k[lo:hi].astype(jnp.bfloat16)           # (chunk, Dq)
        vs = v[lo:hi].astype(jnp.bfloat16)           # (chunk, Dv)
        # NT matmul: contract axis 1 of both operands (no materialized k.T).
        s = lax.dot_general(q16, ks,
                            dimension_numbers=(((1,), (1,)), ((), ())),
                            preferred_element_type=jnp.float32)  # (N, chunk)
        m_new = jnp.maximum(m_i, jnp.max(s, axis=-1, keepdims=True))
        alpha = jnp.exp(m_i - m_new)
        # TODO(synk): on v6e/v7x the exp could run on bf16 inputs (EUP supports
        # bf16 there); kept f32 so the same kernel is numerically safe on v5e.
        p = jnp.exp(s - m_new)
        l_i = alpha * l_i + jnp.sum(p, axis=-1, keepdims=True)
        acc = alpha * acc + jnp.dot(p.astype(jnp.bfloat16), vs,
                                    preferred_element_type=jnp.float32)
        m_i = m_new

    return acc * pl.reciprocal(l_i, approx=True)     # (N, Dv) f32


def _channel_std(f, eps=1e-5):
    """Per-channel std over positions, unbiased (n-1) variance like torch.var.

    Two-pass (mean, then centered sum of squares) to avoid the E[x^2]-E[x]^2
    cancellation flagged in review.  Reductions are tiny ((1, Cp) outputs); if
    they ever show up as XLU-bound, push them to the MXU via ones(1,N) @ f."""
    n = f.shape[0]
    mean = jnp.sum(f, axis=0, keepdims=True) * (1.0 / n)
    d = f - mean
    var = jnp.sum(d * d, axis=0, keepdims=True) * (1.0 / (n - 1))
    return jnp.sqrt(var + eps)                       # (1, C)


def fb_fmm_fused_kernel(x_ref, m_ref, sa_w_ref, sa_b_ref,
                        fb_wq_ref, fb_bq_ref, fb_wkv_ref, fb_bkv_ref,
                        sa_g_ref, fb_g_ref, o_ref, *, c8p, kv_chunk):
    x = x_ref[...]                                   # (N, CP) f32
    x16 = x.astype(jnp.bfloat16)

    # ------------------------- Self_Attn ------------------------------------
    # Fused [q | k | v] projection: one lane-dense bf16 matmul, f32 accumulate,
    # biases folded in as a single row add.
    qkv = jnp.dot(x16, sa_w_ref[...],
                  preferred_element_type=jnp.float32) + sa_b_ref[...]
    q = qkv[:, :c8p]
    k = qkv[:, c8p:2 * c8p]
    v = qkv[:, 2 * c8p:]
    sa_out = _flash_attention(q, k, v, kv_chunk=kv_chunk)
    x1 = sa_g_ref[0] * sa_out + x                    # residual, f32

    # ------------------------- FB_FMM body ----------------------------------
    m = m_ref[...]                                   # (N, 1)
    feat_f = m * x1                                  # mask * input
    feat_b = x1 - feat_f                             # (1 - mask) * input

    qf = jnp.dot(feat_f.astype(jnp.bfloat16), fb_wq_ref[...],
                 preferred_element_type=jnp.float32) + fb_bq_ref[...]
    kv = jnp.dot(feat_b.astype(jnp.bfloat16), fb_wkv_ref[...],
                 preferred_element_type=jnp.float32) + fb_bkv_ref[...]
    kb = kv[:, :c8p]
    vb = kv[:, c8p:]
    sw_bg = _flash_attention(qf, kb, vb, kv_chunk=kv_chunk)      # (N, CP)

    # fmm(feature_f, sw_bg): feature_f * (std(sw_bg) / std(feature_f)).
    # Exact divide: it is one (1, CP) row, and it tightens the error budget.
    bg_std = _channel_std(sw_bg)
    fb_std = _channel_std(feat_f)
    o_ref[...] = x1 + fb_g_ref[0] * (feat_f * (bg_std / fb_std))


# --------------------------- pallas wrapper ----------------------------------


def _round_up(x, m):
    return (x + m - 1) // m * m


def _pad2(a, rows, cols):
    r, c = a.shape
    return jnp.pad(a, ((0, rows - r), (0, cols - c)))


def prepare_params(p, C):
    """Pad / fuse / cast the projection weights ONCE (not per forward call).

    Weights are stored bf16 (halves weight DMA + VMEM residency); biases stay
    f32 and are added to the f32 accumulator; gammas become (1,) SMEM scalars.
    """
    C8 = C // 8
    CP = _round_up(C, 128)       # lane-dense channel width
    C8P = _round_up(C8, 128)     # lane-dense q/k width
    wdt = jnp.bfloat16
    return {
        "sa_w": jnp.concatenate([_pad2(p["sa_wq"], CP, C8P),
                                 _pad2(p["sa_wk"], CP, C8P),
                                 _pad2(p["sa_wv"], CP, CP)], axis=1).astype(wdt),
        "sa_b": jnp.concatenate([_pad2(p["sa_bq"], 1, C8P),
                                 _pad2(p["sa_bk"], 1, C8P),
                                 _pad2(p["sa_bv"], 1, CP)], axis=1),
        "fb_wq": _pad2(p["wq"], CP, C8P).astype(wdt),
        "fb_bq": _pad2(p["bq"], 1, C8P),
        "fb_wkv": jnp.concatenate([_pad2(p["wk"], CP, C8P),
                                   _pad2(p["wv"], CP, CP)], axis=1).astype(wdt),
        "fb_bkv": jnp.concatenate([_pad2(p["bk"], 1, C8P),
                                   _pad2(p["bv"], 1, CP)], axis=1),
        "g_sa": p["sa_gamma"].reshape(-1)[:1].astype(jnp.float32),
        "g_fb": p["gamma"].reshape(-1)[:1].astype(jnp.float32),
    }


def _vmem_budget_bytes(N, CP, C8P, kv_chunk):
    """Per-kernel VMEM request derived from the real block footprint.

    Clamped to 48 MiB so we never request the entirety of a v7x TensorCore's
    64 MiB physical VMEM (v5e/v6e have 128 MiB, so the clamp is harmless there).
    """
    f32, bf16 = 4, 2
    # double-buffered I/O blocks (the (N, 1) mask column pads to one lane group)
    io = 2 * (2 * N * CP * f32 + N * 128 * f32)
    # resident (constant-index) weights + biases, counted double-buffered
    w = 2 * ((CP * (2 * C8P + CP) + CP * C8P + CP * (C8P + CP)) * bf16
             + 8 * (4 * C8P + 3 * CP) * f32)
    # in-kernel temporaries: ~10 (N, CP) f32 slabs, projection outputs, and the
    # per-chunk softmax score/prob tiles.
    tmp = (10 * N * CP + N * (2 * C8P + CP) + N * (C8P + CP)
           + 4 * N * kv_chunk) * f32
    budget = io + w + tmp + (4 << 20)                # scheduler headroom
    return int(max(16 << 20, min(budget, 48 << 20)))


def fb_fmm_forward(x_nchw, mask_nchw, prep, *, kv_chunk=128):
    """Full FB_FMM.forward. x_nchw: (B,C,H,W), mask_nchw: (B,1,H,W).

    `prep` comes from prepare_params() (built once, reused across calls).
    """
    B, C, H, W = x_nchw.shape
    N = H * W
    CP, C8P = prep["fb_wq"].shape
    kvc = kv_chunk if (N >= kv_chunk and N % kv_chunk == 0) else N

    x = jnp.transpose(x_nchw, (0, 2, 3, 1)).reshape(B, N, C)
    x = jnp.pad(x, ((0, 0), (0, 0), (0, CP - C)))                # (B, N, CP)
    m = jnp.transpose(mask_nchw, (0, 2, 3, 1)).reshape(B, N, 1)  # (B, N, 1)

    kernel = functools.partial(fb_fmm_fused_kernel, c8p=C8P, kv_chunk=kvc)
    smem = pl.BlockSpec(memory_space=pltpu.MemorySpace.SMEM)

    out_p = pl.pallas_call(
        kernel,
        out_shape=jax.ShapeDtypeStruct((B, N, CP), jnp.float32),
        grid_spec=pltpu.PrefetchScalarGridSpec(
            num_scalar_prefetch=0,
            grid=(B,),
            in_specs=[
                pl.BlockSpec((pl.Squeezed(), N, CP), lambda b: (b, 0, 0)),
                pl.BlockSpec((pl.Squeezed(), N, 1), lambda b: (b, 0, 0)),
                pl.BlockSpec((CP, 2 * C8P + CP), lambda b: (0, 0)),
                pl.BlockSpec((1, 2 * C8P + CP), lambda b: (0, 0)),
                pl.BlockSpec((CP, C8P), lambda b: (0, 0)),
                pl.BlockSpec((1, C8P), lambda b: (0, 0)),
                pl.BlockSpec((CP, C8P + CP), lambda b: (0, 0)),
                pl.BlockSpec((1, C8P + CP), lambda b: (0, 0)),
                smem,
                smem,
            ],
            out_specs=pl.BlockSpec((pl.Squeezed(), N, CP), lambda b: (b, 0, 0)),
        ),
        compiler_params=pltpu.CompilerParams(
            dimension_semantics=("parallel",),
            vmem_limit_bytes=_vmem_budget_bytes(N, CP, C8P, kvc)),
    )(x, m, prep["sa_w"], prep["sa_b"], prep["fb_wq"], prep["fb_bq"],
      prep["fb_wkv"], prep["fb_bkv"], prep["g_sa"], prep["g_fb"])

    out = out_p[:, :, :C]                                        # drop lane padding
    return jnp.transpose(out.reshape(B, H, W, C), (0, 3, 1, 2))


# ---------------------- pure-JAX reference (torch semantics) ----------------


def _conv1x1(x_nchw, w_cin_cout, b_cout):
    y = jnp.einsum("bchw,co->bohw", x_nchw, w_cin_cout)
    return y + b_cout.reshape(1, -1, 1, 1)


def _calc_mean_std(feat, eps=1e-5):
    B, C = feat.shape[:2]
    var = jnp.var(feat.reshape(B, C, -1), axis=2, ddof=1) + eps
    std = jnp.sqrt(var).reshape(B, C, 1, 1)
    mean = jnp.mean(feat.reshape(B, C, -1), axis=2).reshape(B, C, 1, 1)
    return mean, std


def _fmm(fb_feat, bg_feat):
    _, bg_std = _calc_mean_std(bg_feat)
    _, fb_std = _calc_mean_std(fb_feat)
    return fb_feat * (bg_std / fb_std)


def _attn_block(x, wq, bq, wk, bk, wv, bv, q_in, k_in, v_in):
    B, C, H, W = x.shape
    N = H * W
    q = _conv1x1(q_in, wq, bq[0]).reshape(B, -1, N).transpose(0, 2, 1)   # (B,N,C8)
    k = _conv1x1(k_in, wk, bk[0]).reshape(B, -1, N)                      # (B,C8,N)
    energy = jnp.einsum("bnc,bcm->bnm", q, k)                            # (B,N,N)
    attn = jax.nn.softmax(energy, axis=-1)
    v = _conv1x1(v_in, wv, bv[0]).reshape(B, -1, N)                      # (B,C,N)
    out = jnp.einsum("bcn,bmn->bcm", v, attn)                            # bmm(v, attn^T)
    return out.reshape(B, C, H, W)


def fb_fmm_reference(x, mask, p):
    # Self_Attn
    sa_out = _attn_block(x, p["sa_wq"], p["sa_bq"], p["sa_wk"], p["sa_bk"],
                         p["sa_wv"], p["sa_bv"], x, x, x)
    x = p["sa_gamma"][0, 0] * sa_out + x
    # FB_FMM body
    reverse_mask = -1.0 * (mask - 1.0)
    feature_b = reverse_mask * x
    feature_f = mask * x
    sw_bg = _attn_block(x, p["wq"], p["bq"], p["wk"], p["bk"], p["wv"], p["bv"],
                        feature_f, feature_b, feature_b)
    return x + p["gamma"][0, 0] * _fmm(feature_f, sw_bg)


# --------------------------------- main --------------------------------------


def init_params(key, C):
    C8 = C // 8
    ks = jax.random.split(key, 12)
    s = 0.1

    def w(k, shape):
        return jax.random.normal(k, shape, jnp.float32) * s

    return {
        # Self_Attn params
        "sa_wq": w(ks[0], (C, C8)), "sa_bq": w(ks[1], (1, C8)),
        "sa_wk": w(ks[2], (C, C8)), "sa_bk": w(ks[3], (1, C8)),
        "sa_wv": w(ks[4], (C, C)),  "sa_bv": w(ks[5], (1, C)),
        # gamma is nn.Parameter(torch.zeros(1)) in __init__; use a nonzero
        # deterministic value so the attention path is actually exercised.
        "sa_gamma": jnp.full((1, 1), 0.5, jnp.float32),
        # FB_FMM params
        "wq": w(ks[6], (C, C8)), "bq": w(ks[7], (1, C8)),
        "wk": w(ks[8], (C, C8)), "bk": w(ks[9], (1, C8)),
        "wv": w(ks[10], (C, C)), "bv": w(ks[11], (1, C)),
        "gamma": jnp.full((1, 1), 0.5, jnp.float32),
    }


if __name__ == "__main__":
    # H = W = 16 -> N = 256, so the online-softmax path runs two 128-wide
    # kv chunks per attention (the flash branch is actually exercised).
    B, C, H, W = 2, 32, 16, 16
    key = jax.random.PRNGKey(0)
    kx, km, kp = jax.random.split(key, 3)

    x = jax.random.normal(kx, (B, C, H, W), jnp.float32)
    mask = jax.random.bernoulli(km, 0.5, (B, 1, H, W)).astype(jnp.float32)
    params = init_params(kp, C)
    prep = prepare_params(params, C)          # weight pad/fuse/bf16 cast, once

    out = jax.block_until_ready(fb_fmm_forward(x, mask, prep, kv_chunk=128))
    ref = jax.block_until_ready(fb_fmm_reference(x, mask, params))

    assert out.shape == (B, C, H, W)
    # All matmuls (projections + attention) use bf16 MXU operands and the
    # softmax denominator uses an approximate reciprocal => relaxed tolerance
    # vs the pure-f32 reference.
    assert jnp.allclose(out, ref, atol=5e-2, rtol=5e-2), (
        f"max abs diff {jnp.max(jnp.abs(out - ref))}")

    print("KERNEL_OK")
</pallas_src>

<mosaic_0001>
module attributes {stable_mosaic.version = 11 : i64} {
  func.func @fb_fmm_fused_kernel(%arg0: i32, %arg1: memref<1x256x128xf32, #tpu.memory_space<vmem>>, %arg2: memref<1x256x1xf32, #tpu.memory_space<vmem>>, %arg3: memref<128x384xbf16, #tpu.memory_space<vmem>>, %arg4: memref<1x384xf32, #tpu.memory_space<vmem>>, %arg5: memref<128x128xbf16, #tpu.memory_space<vmem>>, %arg6: memref<1x128xf32, #tpu.memory_space<vmem>>, %arg7: memref<128x256xbf16, #tpu.memory_space<vmem>>, %arg8: memref<1x256xf32, #tpu.memory_space<vmem>>, %arg9: memref<1xf32, #tpu.memory_space<smem>>, %arg10: memref<1xf32, #tpu.memory_space<smem>>, %arg11: memref<1x256x128xf32, #tpu.memory_space<vmem>>) attributes {dimension_semantics = [#tpu.dimension_semantics<parallel>], iteration_bounds = array<i64: 2>, scalar_prefetch = 0 : i64, scratch_operands = 0 : i64, tpu.core_type = #tpu.core_type<tc>, window_params = [{transform_indices = @transform_0, window_bounds = array<i64: 1, 256, 128>}, {transform_indices = @transform_1, window_bounds = array<i64: 1, 256, 1>}, {pipeline_mode = #tpu.pipeline_mode<synchronous>, transform_indices = @transform_2, window_bounds = array<i64: 128, 384>}, {pipeline_mode = #tpu.pipeline_mode<synchronous>, transform_indices = @transform_3, window_bounds = array<i64: 1, 384>}, {pipeline_mode = #tpu.pipeline_mode<synchronous>, transform_indices = @transform_4, window_bounds = array<i64: 128, 128>}, {pipeline_mode = #tpu.pipeline_mode<synchronous>, transform_indices = @transform_5, window_bounds = array<i64: 1, 128>}, {pipeline_mode = #tpu.pipeline_mode<synchronous>, transform_indices = @transform_6, window_bounds = array<i64: 128, 256>}, {pipeline_mode = #tpu.pipeline_mode<synchronous>, transform_indices = @transform_7, window_bounds = array<i64: 1, 256>}, {transform_indices = @transform_8, window_bounds = array<i64: 1>}, {transform_indices = @transform_9, window_bounds = array<i64: 1>}, {transform_indices = @transform_10, window_bounds = array<i64: 1, 256, 128>}]} {
    %c0 = arith.constant 0 : index
    %c0_0 = arith.constant 0 : index
    %c0_1 = arith.constant 0 : index
    %0 = vector.load %arg1[%c0, %c0_0, %c0_1] : memref<1x256x128xf32, #tpu.memory_space<vmem>>, vector<1x256x128xf32>
    %1 = vector.shape_cast %0 : vector<1x256x128xf32> to vector<256x128xf32>
    %2 = arith.truncf %1 : vector<256x128xf32> to vector<256x128xbf16>
    %c0_2 = arith.constant 0 : index
    %c0_3 = arith.constant 0 : index
    %3 = vector.load %arg3[%c0_2, %c0_3] : memref<128x384xbf16, #tpu.memory_space<vmem>>, vector<128x384xbf16>
    %cst = arith.constant dense<0.000000e+00> : vector<256x384xf32>
    %4 = tpu.matmul %2, %3, %cst {dimension_numbers = #tpu.dot_dimension_numbers<[1], [0], [0], [1], [0, 0, 1, 1], [], []>} : vector<256x128xbf16>, vector<128x384xbf16>, vector<256x384xf32> -> vector<256x384xf32>
    %c0_4 = arith.constant 0 : index
    %c0_5 = arith.constant 0 : index
    %5 = vector.load %arg4[%c0_4, %c0_5] : memref<1x384xf32, #tpu.memory_space<vmem>>, vector<1x384xf32>
    %6 = vector.broadcast %5 : vector<1x384xf32> to vector<256x384xf32>
    %7 = arith.addf %4, %6 : vector<256x384xf32>
    %8 = vector.extract_strided_slice %7 {offsets = [0, 0], sizes = [256, 128], strides = [1, 1]} : vector<256x384xf32> to vector<256x128xf32>
    %9 = vector.extract_strided_slice %7 {offsets = [0, 128], sizes = [256, 128], strides = [1, 1]} : vector<256x384xf32> to vector<256x128xf32>
    %10 = vector.extract_strided_slice %7 {offsets = [0, 256], sizes = [256, 128], strides = [1, 1]} : vector<256x384xf32> to vector<256x128xf32>
    %11 = arith.truncf %8 : vector<256x128xf32> to vector<256x128xbf16>
    %cst_6 = arith.constant 0xFF800000 : f32
    %12 = vector.broadcast %cst_6 : f32 to vector<256x1xf32>
    %cst_7 = arith.constant 0.000000e+00 : f32
    %13 = vector.broadcast %cst_7 : f32 to vector<256x1xf32>
    %cst_8 = arith.constant 0.000000e+00 : f32
    %14 = vector.broadcast %cst_8 : f32 to vector<256x128xf32>
    %15 = vector.extract_strided_slice %9 {offsets = [0, 0], sizes = [128, 128], strides = [1, 1]} : vector<256x128xf32> to vector<128x128xf32>
    %16 = arith.truncf %15 : vector<128x128xf32> to vector<128x128xbf16>
    %17 = vector.extract_strided_slice %10 {offsets = [0, 0], sizes = [128, 128], strides = [1, 1]} : vector<256x128xf32> to vector<128x128xf32>
    %18 = arith.truncf %17 : vector<128x128xf32> to vector<128x128xbf16>
    %cst_9 = arith.constant dense<0.000000e+00> : vector<256x128xf32>
    %19 = tpu.matmul %11, %16, %cst_9 {dimension_numbers = #tpu.dot_dimension_numbers<[1], [1], [0], [0], [0, 0, 1, 0], [], []>} : vector<256x128xbf16>, vector<128x128xbf16>, vector<256x128xf32> -> vector<256x128xf32>
    %cst_10 = arith.constant dense<0xFF800000> : vector<256xf32>
    %20 = vector.multi_reduction <maximumf>, %19, %cst_10 [1] : vector<256x128xf32> to vector<256xf32>
    %21 = vector.shape_cast %20 : vector<256xf32> to vector<256x1xf32>
    %22 = arith.maximumf %12, %21 : vector<256x1xf32>
    %23 = arith.subf %12, %22 : vector<256x1xf32>
    %24 = math.exp %23 : vector<256x1xf32>
    %25 = vector.broadcast %22 : vector<256x1xf32> to vector<256x128xf32>
    %26 = arith.subf %19, %25 : vector<256x128xf32>
    %27 = math.exp %26 : vector<256x128xf32>
    %28 = arith.mulf %24, %13 : vector<256x1xf32>
    %cst_11 = arith.constant dense<0.000000e+00> : vector<256xf32>
    %29 = vector.multi_reduction <add>, %27, %cst_11 [1] : vector<256x128xf32> to vector<256xf32>
    %30 = vector.shape_cast %29 : vector<256xf32> to vector<256x1xf32>
    %31 = arith.addf %28, %30 : vector<256x1xf32>
    %32 = vector.broadcast %24 : vector<256x1xf32> to vector<256x128xf32>
    %33 = arith.mulf %32, %14 : vector<256x128xf32>
    %34 = arith.truncf %27 : vector<256x128xf32> to vector<256x128xbf16>
    %cst_12 = arith.constant dense<0.000000e+00> : vector<256x128xf32>
    %35 = tpu.matmul %34, %18, %cst_12 {dimension_numbers = #tpu.dot_dimension_numbers<[1], [0], [0], [1], [0, 0, 1, 1], [], []>} : vector<256x128xbf16>, vector<128x128xbf16>, vector<256x128xf32> -> vector<256x128xf32>
    %36 = arith.addf %33, %35 : vector<256x128xf32>
    %37 = vector.extract_strided_slice %9 {offsets = [128, 0], sizes = [128, 128], strides = [1, 1]} : vector<256x128xf32> to vector<128x128xf32>
    %38 = arith.truncf %37 : vector<128x128xf32> to vector<128x128xbf16>
    %39 = vector.extract_strided_slice %10 {offsets = [128, 0], sizes = [128, 128], strides = [1, 1]} : vector<256x128xf32> to vector<128x128xf32>
    %40 = arith.truncf %39 : vector<128x128xf32> to vector<128x128xbf16>
    %cst_13 = arith.constant dense<0.000000e+00> : vector<256x128xf32>
    %41 = tpu.matmul %11, %38, %cst_13 {dimension_numbers = #tpu.dot_dimension_numbers<[1], [1], [0], [0], [0, 0, 1, 0], [], []>} : vector<256x128xbf16>, vector<128x128xbf16>, vector<256x128xf32> -> vector<256x128xf32>
    %cst_14 = arith.constant dense<0xFF800000> : vector<256xf32>
    %42 = vector.multi_reduction <maximumf>, %41, %cst_14 [1] : vector<256x128xf32> to vector<256xf32>
    %43 = vector.shape_cast %42 : vector<256xf32> to vector<256x1xf32>
    %44 = arith.maximumf %22, %43 : vector<256x1xf32>
    %45 = arith.subf %22, %44 : vector<256x1xf32>
    %46 = math.exp %45 : vector<256x1xf32>
    %47 = vector.broadcast %44 : vector<256x1xf32> to vector<256x128xf32>
    %48 = arith.subf %41, %47 : vector<256x128xf32>
    %49 = math.exp %48 : vector<256x128xf32>
    %50 = arith.mulf %46, %31 : vector<256x1xf32>
    %cst_15 = arith.constant dense<0.000000e+00> : vector<256xf32>
    %51 = vector.multi_reduction <add>, %49, %cst_15 [1] : vector<256x128xf32> to vector<256xf32>
    %52 = vector.shape_cast %51 : vector<256xf32> to vector<256x1xf32>
    %53 = arith.addf %50, %52 : vector<256x1xf32>
    %54 = vector.broadcast %46 : vector<256x1xf32> to vector<256x128xf32>
    %55 = arith.mulf %54, %36 : vector<256x128xf32>
    %56 = arith.truncf %49 : vector<256x128xf32> to vector<256x128xbf16>
    %cst_16 = arith.constant dense<0.000000e+00> : vector<256x128xf32>
    %57 = tpu.matmul %56, %40, %cst_16 {dimension_numbers = #tpu.dot_dimension_numbers<[1], [0], [0], [1], [0, 0, 1, 1], [], []>} : vector<256x128xbf16>, vector<128x128xbf16>, vector<256x128xf32> -> vector<256x128xf32>
    %58 = arith.addf %55, %57 : vector<256x128xf32>
    %59 = tpu.reciprocal %53 {approx = true} : vector<256x1xf32> -> vector<256x1xf32>
    %60 = vector.broadcast %59 : vector<256x1xf32> to vector<256x128xf32>
    %61 = arith.mulf %58, %60 : vector<256x128xf32>
    %c0_17 = arith.constant 0 : index
    %62 = memref.load %arg9[%c0_17] : memref<1xf32, #tpu.memory_space<smem>>
    %63 = vector.broadcast %62 : f32 to vector<256x128xf32>
    %64 = arith.mulf %63, %61 : vector<256x128xf32>
    %65 = arith.addf %64, %1 : vector<256x128xf32>
    %c0_18 = arith.constant 0 : index
    %c0_19 = arith.constant 0 : index
    %c0_20 = arith.constant 0 : index
    %66 = vector.load %arg2[%c0_18, %c0_19, %c0_20] : memref<1x256x1xf32, #tpu.memory_space<vmem>>, vector<1x256x1xf32>
    %67 = vector.shape_cast %66 : vector<1x256x1xf32> to vector<256x1xf32>
    %68 = vector.broadcast %67 : vector<256x1xf32> to vector<256x128xf32>
    %69 = arith.mulf %68, %65 : vector<256x128xf32>
    %70 = arith.subf %65, %69 : vector<256x128xf32>
    %71 = arith.truncf %69 : vector<256x128xf32> to vector<256x128xbf16>
    %c0_21 = arith.constant 0 : index
    %c0_22 = arith.constant 0 : index
    %72 = vector.load %arg5[%c0_21, %c0_22] : memref<128x128xbf16, #tpu.memory_space<vmem>>, vector<128x128xbf16>
    %cst_23 = arith.constant dense<0.000000e+00> : vector<256x128xf32>
    %73 = tpu.matmul %71, %72, %cst_23 {dimension_numbers = #tpu.dot_dimension_numbers<[1], [0], [0], [1], [0, 0, 1, 1], [], []>} : vector<256x128xbf16>, vector<128x128xbf16>, vector<256x128xf32> -> vector<256x128xf32>
    %c0_24 = arith.constant 0 : index
    %c0_25 = arith.constant 0 : index
    %74 = vector.load %arg6[%c0_24, %c0_25] : memref<1x128xf32, #tpu.memory_space<vmem>>, vector<1x128xf32>
    %75 = vector.broadcast %74 : vector<1x128xf32> to vector<256x128xf32>
    %76 = arith.addf %73, %75 : vector<256x128xf32>
    %77 = arith.truncf %70 : vector<256x128xf32> to vector<256x128xbf16>
    %c0_26 = arith.constant 0 : index
    %c0_27 = arith.constant 0 : index
    %78 = vector.load %arg7[%c0_26, %c0_27] : memref<128x256xbf16, #tpu.memory_space<vmem>>, vector<128x256xbf16>
    %cst_28 = arith.constant dense<0.000000e+00> : vector<256x256xf32>
    %79 = tpu.matmul %77, %78, %cst_28 {dimension_numbers = #tpu.dot_dimension_numbers<[1], [0], [0], [1], [0, 0, 1, 1], [], []>} : vector<256x128xbf16>, vector<128x256xbf16>, vector<256x256xf32> -> vector<256x256xf32>
    %c0_29 = arith.constant 0 : index
    %c0_30 = arith.constant 0 : index
    %80 = vector.load %arg8[%c0_29, %c0_30] : memref<1x256xf32, #tpu.memory_space<vmem>>, vector<1x256xf32>
    %81 = vector.broadcast %80 : vector<1x256xf32> to vector<256x256xf32>
    %82 = arith.addf %79, %81 : vector<256x256xf32>
    %83 = vector.extract_strided_slice %82 {offsets = [0, 0], sizes = [256, 128], strides = [1, 1]} : vector<256x256xf32> to vector<256x128xf32>
    %84 = vector.extract_strided_slice %82 {offsets = [0, 128], sizes = [256, 128], strides = [1, 1]} : vector<256x256xf32> to vector<256x128xf32>
    %85 = arith.truncf %76 : vector<256x128xf32> to vector<256x128xbf16>
    %cst_31 = arith.constant 0xFF800000 : f32
    %86 = vector.broadcast %cst_31 : f32 to vector<256x1xf32>
    %cst_32 = arith.constant 0.000000e+00 : f32
    %87 = vector.broadcast %cst_32 : f32 to vector<256x1xf32>
    %cst_33 = arith.constant 0.000000e+00 : f32
    %88 = vector.broadcast %cst_33 : f32 to vector<256x128xf32>
    %89 = vector.extract_strided_slice %83 {offsets = [0, 0], sizes = [128, 128], strides = [1, 1]} : vector<256x128xf32> to vector<128x128xf32>
    %90 = arith.truncf %89 : vector<128x128xf32> to vector<128x128xbf16>
    %91 = vector.extract_strided_slice %84 {offsets = [0, 0], sizes = [128, 128], strides = [1, 1]} : vector<256x128xf32> to vector<128x128xf32>
    %92 = arith.truncf %91 : vector<128x128xf32> to vector<128x128xbf16>
    %cst_34 = arith.constant dense<0.000000e+00> : vector<256x128xf32>
    %93 = tpu.matmul %85, %90, %cst_34 {dimension_numbers = #tpu.dot_dimension_numbers<[1], [1], [0], [0], [0, 0, 1, 0], [], []>} : vector<256x128xbf16>, vector<128x128xbf16>, vector<256x128xf32> -> vector<256x128xf32>
    %cst_35 = arith.constant dense<0xFF800000> : vector<256xf32>
    %94 = vector.multi_reduction <maximumf>, %93, %cst_35 [1] : vector<256x128xf32> to vector<256xf32>
    %95 = vector.shape_cast %94 : vector<256xf32> to vector<256x1xf32>
    %96 = arith.maximumf %86, %95 : vector<256x1xf32>
    %97 = arith.subf %86, %96 : vector<256x1xf32>
    %98 = math.exp %97 : vector<256x1xf32>
    %99 = vector.broadcast %96 : vector<256x1xf32> to vector<256x128xf32>
    %100 = arith.subf %93, %99 : vector<256x128xf32>
    %101 = math.exp %100 : vector<256x128xf32>
    %102 = arith.mulf %98, %87 : vector<256x1xf32>
    %cst_36 = arith.constant dense<0.000000e+00> : vector<256xf32>
    %103 = vector.multi_reduction <add>, %101, %cst_36 [1] : vector<256x128xf32> to vector<256xf32>
    %104 = vector.shape_cast %103 : vector<256xf32> to vector<256x1xf32>
    %105 = arith.addf %102, %104 : vector<256x1xf32>
    %106 = vector.broadcast %98 : vector<256x1xf32> to vector<256x128xf32>
    %107 = arith.mulf %106, %88 : vector<256x128xf32>
    %108 = arith.truncf %101 : vector<256x128xf32> to vector<256x128xbf16>
    %cst_37 = arith.constant dense<0.000000e+00> : vector<256x128xf32>
    %109 = tpu.matmul %108, %92, %cst_37 {dimension_numbers = #tpu.dot_dimension_numbers<[1], [0], [0], [1], [0, 0, 1, 1], [], []>} : vector<256x128xbf16>, vector<128x128xbf16>, vector<256x128xf32> -> vector<256x128xf32>
    %110 = arith.addf %107, %109 : vector<256x128xf32>
    %111 = vector.extract_strided_slice %83 {offsets = [128, 0], sizes = [128, 128], strides = [1, 1]} : vector<256x128xf32> to vector<128x128xf32>
    %112 = arith.truncf %111 : vector<128x128xf32> to vector<128x128xbf16>
    %113 = vector.extract_strided_slice %84 {offsets = [128, 0], sizes = [128, 128], strides = [1, 1]} : vector<256x128xf32> to vector<128x128xf32>
    %114 = arith.truncf %113 : vector<128x128xf32> to vector<128x128xbf16>
    %cst_38 = arith.constant dense<0.000000e+00> : vector<256x128xf32>
    %115 = tpu.matmul %85, %112, %cst_38 {dimension_numbers = #tpu.dot_dimension_numbers<[1], [1], [0], [0], [0, 0, 1, 0], [], []>} : vector<256x128xbf16>, vector<128x128xbf16>, vector<256x128xf32> -> vector<256x128xf32>
    %cst_39 = arith.constant dense<0xFF800000> : vector<256xf32>
    %116 = vector.multi_reduction <maximumf>, %115, %cst_39 [1] : vector<256x128xf32> to vector<256xf32>
    %117 = vector.shape_cast %116 : vector<256xf32> to vector<256x1xf32>
    %118 = arith.maximumf %96, %117 : vector<256x1xf32>
    %119 = arith.subf %96, %118 : vector<256x1xf32>
    %120 = math.exp %119 : vector<256x1xf32>
    %121 = vector.broadcast %118 : vector<256x1xf32> to vector<256x128xf32>
    %122 = arith.subf %115, %121 : vector<256x128xf32>
    %123 = math.exp %122 : vector<256x128xf32>
    %124 = arith.mulf %120, %105 : vector<256x1xf32>
    %cst_40 = arith.constant dense<0.000000e+00> : vector<256xf32>
    %125 = vector.multi_reduction <add>, %123, %cst_40 [1] : vector<256x128xf32> to vector<256xf32>
    %126 = vector.shape_cast %125 : vector<256xf32> to vector<256x1xf32>
    %127 = arith.addf %124, %126 : vector<256x1xf32>
    %128 = vector.broadcast %120 : vector<256x1xf32> to vector<256x128xf32>
    %129 = arith.mulf %128, %110 : vector<256x128xf32>
    %130 = arith.truncf %123 : vector<256x128xf32> to vector<256x128xbf16>
    %cst_41 = arith.constant dense<0.000000e+00> : vector<256x128xf32>
    %131 = tpu.matmul %130, %114, %cst_41 {dimension_numbers = #tpu.dot_dimension_numbers<[1], [0], [0], [1], [0, 0, 1, 1], [], []>} : vector<256x128xbf16>, vector<128x128xbf16>, vector<256x128xf32> -> vector<256x128xf32>
    %132 = arith.addf %129, %131 : vector<256x128xf32>
    %133 = tpu.reciprocal %127 {approx = true} : vector<256x1xf32> -> vector<256x1xf32>
    %134 = vector.broadcast %133 : vector<256x1xf32> to vector<256x128xf32>
    %135 = arith.mulf %132, %134 : vector<256x128xf32>
    %cst_42 = arith.constant dense<0.000000e+00> : vector<128xf32>
    %136 = vector.multi_reduction <add>, %135, %cst_42 [0] : vector<256x128xf32> to vector<128xf32>
    %137 = vector.shape_cast %136 : vector<128xf32> to vector<1x128xf32>
    %cst_43 = arith.constant 3.906250e-03 : f32
    %138 = vector.broadcast %cst_43 : f32 to vector<1x128xf32>
    %139 = arith.mulf %137, %138 : vector<1x128xf32>
    %140 = vector.broadcast %139 : vector<1x128xf32> to vector<256x128xf32>
    %141 = arith.subf %135, %140 : vector<256x128xf32>
    %142 = arith.mulf %141, %141 : vector<256x128xf32>
    %cst_44 = arith.constant dense<0.000000e+00> : vector<128xf32>
    %143 = vector.multi_reduction <add>, %142, %cst_44 [0] : vector<256x128xf32> to vector<128xf32>
    %144 = vector.shape_cast %143 : vector<128xf32> to vector<1x128xf32>
    %cst_45 = arith.constant 0.00392156886 : f32
    %145 = vector.broadcast %cst_45 : f32 to vector<1x128xf32>
    %146 = arith.mulf %144, %145 : vector<1x128xf32>
    %cst_46 = arith.constant 9.99999974E-6 : f32
    %147 = vector.broadcast %cst_46 : f32 to vector<1x128xf32>
    %148 = arith.addf %146, %147 : vector<1x128xf32>
    %149 = math.sqrt %148 : vector<1x128xf32>
    %cst_47 = arith.constant dense<0.000000e+00> : vector<128xf32>
    %150 = vector.multi_reduction <add>, %69, %cst_47 [0] : vector<256x128xf32> to vector<128xf32>
    %151 = vector.shape_cast %150 : vector<128xf32> to vector<1x128xf32>
    %cst_48 = arith.constant 3.906250e-03 : f32
    %152 = vector.broadcast %cst_48 : f32 to vector<1x128xf32>
    %153 = arith.mulf %151, %152 : vector<1x128xf32>
    %154 = vector.broadcast %153 : vector<1x128xf32> to vector<256x128xf32>
    %155 = arith.subf %69, %154 : vector<256x128xf32>
    %156 = arith.mulf %155, %155 : vector<256x128xf32>
    %cst_49 = arith.constant dense<0.000000e+00> : vector<128xf32>
    %157 = vector.multi_reduction <add>, %156, %cst_49 [0] : vector<256x128xf32> to vector<128xf32>
    %158 = vector.shape_cast %157 : vector<128xf32> to vector<1x128xf32>
    %cst_50 = arith.constant 0.00392156886 : f32
    %159 = vector.broadcast %cst_50 : f32 to vector<1x128xf32>
    %160 = arith.mulf %158, %159 : vector<1x128xf32>
    %cst_51 = arith.constant 9.99999974E-6 : f32
    %161 = vector.broadcast %cst_51 : f32 to vector<1x128xf32>
    %162 = arith.addf %160, %161 : vector<1x128xf32>
    %163 = math.sqrt %162 : vector<1x128xf32>
    %c0_52 = arith.constant 0 : index
    %164 = memref.load %arg10[%c0_52] : memref<1xf32, #tpu.memory_space<smem>>
    %165 = arith.divf %149, %163 : vector<1x128xf32>
    %166 = vector.broadcast %165 : vector<1x128xf32> to vector<256x128xf32>
    %167 = arith.mulf %69, %166 : vector<256x128xf32>
    %168 = vector.broadcast %164 : f32 to vector<256x128xf32>
    %169 = arith.mulf %168, %167 : vector<256x128xf32>
    %170 = arith.addf %65, %169 : vector<256x128xf32>
    %c0_53 = arith.constant 0 : index
    %c0_54 = arith.constant 0 : index
    %c0_55 = arith.constant 0 : index
    %171 = vector.load %arg11[%c0_53, %c0_54, %c0_55] : memref<1x256x128xf32, #tpu.memory_space<vmem>>, vector<1x256x128xf32>
    %172 = vector.shape_cast %171 : vector<1x256x128xf32> to vector<256x128xf32>
    %173 = vector.shape_cast %170 : vector<256x128xf32> to vector<1x256x128xf32>
    tpu.vector_store %arg11[%c0_53, %c0_54, %c0_55], %173 {strides = array<i32>} : memref<1x256x128xf32, #tpu.memory_space<vmem>>, vector<1x256x128xf32>,
    return
  }
  func.func @transform_0(%arg0: i32) -> (i32, i32, i32) {
    %c0_i32 = arith.constant 0 : i32
    %c0_i32_0 = arith.constant 0 : i32
    %c0_i32_1 = arith.constant 0 : i32
    return %arg0, %c0_i32, %c0_i32_0 : i32, i32, i32
  }
  func.func @transform_1(%arg0: i32) -> (i32, i32, i32) {
    %c0_i32 = arith.constant 0 : i32
    %c0_i32_0 = arith.constant 0 : i32
    %c0_i32_1 = arith.constant 0 : i32
    return %arg0, %c0_i32, %c0_i32_0 : i32, i32, i32
  }
  func.func @transform_2(%arg0: i32) -> (i32, i32) {
    %c0_i32 = arith.constant 0 : i32
    %c0_i32_0 = arith.constant 0 : i32
    %c0_i32_1 = arith.constant 0 : i32
    return %c0_i32, %c0_i32_0 : i32, i32
  }
  func.func @transform_3(%arg0: i32) -> (i32, i32) {
    %c0_i32 = arith.constant 0 : i32
    %c0_i32_0 = arith.constant 0 : i32
    %c0_i32_1 = arith.constant 0 : i32
    return %c0_i32, %c0_i32_0 : i32, i32
  }
  func.func @transform_4(%arg0: i32) -> (i32, i32) {
    %c0_i32 = arith.constant 0 : i32
    %c0_i32_0 = arith.constant 0 : i32
    %c0_i32_1 = arith.constant 0 : i32
    return %c0_i32, %c0_i32_0 : i32, i32
  }
  func.func @transform_5(%arg0: i32) -> (i32, i32) {
    %c0_i32 = arith.constant 0 : i32
    %c0_i32_0 = arith.constant 0 : i32
    %c0_i32_1 = arith.constant 0 : i32
    return %c0_i32, %c0_i32_0 : i32, i32
  }
  func.func @transform_6(%arg0: i32) -> (i32, i32) {
    %c0_i32 = arith.constant 0 : i32
    %c0_i32_0 = arith.constant 0 : i32
    %c0_i32_1 = arith.constant 0 : i32
    return %c0_i32, %c0_i32_0 : i32, i32
  }
  func.func @transform_7(%arg0: i32) -> (i32, i32) {
    %c0_i32 = arith.constant 0 : i32
    %c0_i32_0 = arith.constant 0 : i32
    %c0_i32_1 = arith.constant 0 : i32
    return %c0_i32, %c0_i32_0 : i32, i32
  }
  func.func @transform_8(%arg0: i32) -> i32 {
    %c0_i32 = arith.constant 0 : i32
    %c0_i32_0 = arith.constant 0 : i32
    return %c0_i32 : i32
  }
  func.func @transform_9(%arg0: i32) -> i32 {
    %c0_i32 = arith.constant 0 : i32
    %c0_i32_0 = arith.constant 0 : i32
    return %c0_i32 : i32
  }
  func.func @transform_10(%arg0: i32) -> (i32, i32, i32) {
    %c0_i32 = arith.constant 0 : i32
    %c0_i32_0 = arith.constant 0 : i32
    %c0_i32_1 = arith.constant 0 : i32
    return %arg0, %c0_i32, %c0_i32_0 : i32, i32, i32
  }
}

</mosaic_0001>

<llo_original>
// kernel: tpu_custom_call.1
$region0: #{tpu_custom_call.1}
  #allocation0 [shape = 'u32[]', space=smem, size = 0x4, offset = 0x4, fixed_abs, tag = 'smem constant byte address 0x4 - core index']
  #allocation1 [shape = 'u32[144,128]{1,0:T(1,128)}', space=vmem, size = 0x12000, scoped, tag = 'internal scratch']
  #allocation2 [shape = 'f32[1]{0:T(128)S(6)}', space=smem, size = 0x200, scoped, tag = 'scoped memory for tpu_custom_call.1']
  #allocation3 [shape = 'f32[1]{0:T(128)S(6)}', space=smem, size = 0x200, scoped, tag = 'scoped memory for tpu_custom_call.1']
  %s0 = inlined_call_operand.vmem [shape: f32[2,256,128], index: 0, kind: input, shape index: {}]
  %s1 = inlined_call_operand.vmem [shape: f32[2,256,1], index: 1, kind: input, shape index: {}]
  %s2 = inlined_call_operand.hbm [shape: bf16[128,384], index: 2, kind: input, shape index: {}]
  %s3 = inlined_call_operand.vmem [shape: f32[1,384], index: 3, kind: input, shape index: {}]
  %s4 = inlined_call_operand.hbm [shape: bf16[128,128], index: 4, kind: input, shape index: {}]
  %s5 = inlined_call_operand.vmem [shape: f32[1,128], index: 5, kind: input, shape index: {}]
  %s6 = inlined_call_operand.hbm [shape: bf16[128,256], index: 6, kind: input, shape index: {}]
  %s7 = inlined_call_operand.vmem [shape: f32[1,256], index: 7, kind: input, shape index: {}]
  %s8 = inlined_call_operand.<no memory space> [shape: f32[1], index: 8, kind: input, shape index: {}]
  %s9 = inlined_call_operand.<no memory space> [shape: f32[1], index: 9, kind: input, shape index: {}]
  %s10 = inlined_call_operand.hbm [shape: f32[2,256,128], index: 10, kind: output, shape index: {}]
  %s11 = sld [smem:[#allocation0]]
  $region85: #{tpu_custom_call.1} parent=0
    _
  %s13 = ssub.s32 1, %s11
  %s14 = scalar_select 0, %s13, %s11
  %15 = sst [smem:[#allocation2]] %s8
  %16 = sst [smem:[#allocation3]] %s9
  $region1: #{tpu_custom_call.1} parent=0
    #allocation4 [shape = 'u8[98304]{0}', space=vmem, size = 0x18000, scoped, tag = 'input window, operand 2, single buffered']
    #allocation5 [shape = 's32[2]{0}', space=sflag, size = 0x8, scoped, tag = 'scoped memory for tpu_custom_call.1']
    #allocation6 [shape = 's32[2]{0}', space=sflag, size = 0x8, scoped, tag = 'scoped memory for tpu_custom_call.1']
    #allocation7 [shape = 'u8[32768]{0}', space=vmem, size = 0x8000, scoped, tag = 'input window, operand 4, single buffered']
    #allocation8 [shape = 's32[1]{0}', space=sflag, size = 0x4, scoped, tag = 'scoped memory for tpu_custom_call.1']
    #allocation9 [shape = 'u8[65536]{0}', space=vmem, size = 0x10000, scoped, tag = 'input window, operand 6, single buffered']
    #allocation10 [shape = 'u8[262144]{0}', space=vmem, size = 0x40000, scoped, tag = 'output window, operand 0']
    %17 = vsyncpa [#allocation5], 0
    %18 = vsyncpa [#allocation8], 0
    %19 = vsyncpa [#allocation6], 0
    %s20 = scalar_lea.sflag [#allocation6], 1
    %21 = vsyncpa %s20, 0
    loop: start=0, step=1, limit=4
    $region2: #{tpu_custom_call.1} parent=1 // loop_pre_header
      _
    $region3: #{tpu_custom_call.1} parent=1 // loop_header
      %s23 = sphi 0, %s27
      %p24 = scmp.ge.s32.totalorder %s23, 4
      %s33 = sphi 0, %s35
      %s36 = sphi 0, %s33
      %s37 = sphi 0, %s36
      %s53 = sphi 0, %s37
      %s59 = sphi 0, %s61
      %s62 = sphi 0, %s59
      %s63 = sphi 0, %s62
      %s79 = sphi 0, %s63
      %s83 = sphi 0, %s83
      %s85 = sphi 0, %s83
      %s86 = sphi 0, %s85
      %s100 = sphi 0, %s86
      %s104 = sphi 0, %s104
      %s106 = sphi 0, %s104
      %s107 = sphi 0, %s106
      %s121 = sphi 0, %s107
      %s125 = sphi 0, %s125
      %s127 = sphi 0, %s125
      %s128 = sphi 0, %s127
      %s142 = sphi 0, %s128
      %s146 = sphi 0, %s146
      %s148 = sphi 0, %s146
      %s149 = sphi 0, %s148
      %s163 = sphi 0, %s149
      %s167 = sphi 0, %s167
      %s169 = sphi 0, %s167
      %s170 = sphi 0, %s169
      %s184 = sphi 0, %s170
      %s188 = sphi 0, %s188
      %s190 = sphi 0, %s188
      %s191 = sphi 0, %s190
      %s205 = sphi 0, %s191
      %s209 = sphi 0, %s209
      %s211 = sphi 0, %s209
      %s212 = sphi 0, %s211
      %s226 = sphi 0, %s212
      %s230 = sphi 0, %s230
      %s232 = sphi 0, %s230
      %s233 = sphi 0, %s232
      %s247 = sphi 0, %s233
      %s253 = sphi 0, %s255
      %s256 = sphi 0, %s253
      %s257 = sphi 0, %s256
      %s273 = sphi 0, %s257
    $region4: #{tpu_custom_call.1} parent=1 // loop_header_branch
      %26 = sbr.rel (%p24) target = $region8
    $region5: #{tpu_custom_call.1} parent=1 // loop_body
      %s28 = ssub.s32 %s23, 1
      %s29 = ssub.s32 %s23, 2
      %s30 = sadd.s32 %s23, 1
      %s31 = ssub.s32 %s23, %s30
      %p32 = scmp.eq.s32.totalorder %s31, 0
      %s34 = sadd.s32 %s33, 1
      %s35 = scalar_select %p32, %s33, %s34
      %p38 = pneg %p32
      %p39 = scmp.eq.s32.totalorder %s23, 1
      %p40 = por %p38, %p39
      %p41 = scmp.ne.s32.totalorder %s33, %s36
      %p42 = scmp.eq.s32.totalorder %s23, 0
      %p43 = por %p41, %p42
      %p44 = scmp.ne.s32.totalorder %s33, %s36
      %p45 = scmp.eq.s32.totalorder %s28, 1
      %p46 = por %p44, %p45
      %p47 = scmp.ne.s32.totalorder %s36, %s37
      %p48 = scmp.eq.s32.totalorder %s28, 0
      %p49 = por %p47, %p48
      %p50 = scmp.ne.s32.totalorder %s36, %s37
      %p51 = scmp.eq.s32.totalorder %s29, 1
      %p52 = por %p50, %p51
      %p54 = scmp.ne.s32.totalorder %s37, %s53
      %p55 = scmp.eq.s32.totalorder %s29, 0
      %p56 = por %p54, %p55
      %s57 = ssub.s32 %s23, %s30
      %p58 = scmp.eq.s32.totalorder %s57, 0
      %s60 = sadd.s32 %s59, 1
      %s61 = scalar_select %p58, %s59, %s60
      %p64 = pneg %p58
      %p65 = scmp.eq.s32.totalorder %s23, 1
      %p66 = por %p64, %p65
      %p67 = scmp.ne.s32.totalorder %s59, %s62
      %p68 = scmp.eq.s32.totalorder %s23, 0
      %p69 = por %p67, %p68
      %p70 = scmp.ne.s32.totalorder %s59, %s62
      %p71 = scmp.eq.s32.totalorder %s28, 1
      %p72 = por %p70, %p71
      %p73 = scmp.ne.s32.totalorder %s62, %s63
      %p74 = scmp.eq.s32.totalorder %s28, 0
      %p75 = por %p73, %p74
      %p76 = scmp.ne.s32.totalorder %s62, %s63
      %p77 = scmp.eq.s32.totalorder %s29, 1
      %p78 = por %p76, %p77
      %p80 = scmp.ne.s32.totalorder %s63, %s79
      %p81 = scmp.eq.s32.totalorder %s29, 0
      %p82 = por %p80, %p81
      %s84 = sadd.s32 %s83, 1
      %p87 = scmp.eq.s32.totalorder %s23, 1
      %p88 = scmp.ne.s32.totalorder %s83, %s85
      %p89 = scmp.eq.s32.totalorder %s23, 0
      %p90 = por %p88, %p89
      %p91 = scmp.ne.s32.totalorder %s83, %s85
      %p92 = scmp.eq.s32.totalorder %s28, 1
      %p93 = por %p91, %p92
      %p94 = scmp.ne.s32.totalorder %s85, %s86
      %p95 = scmp.eq.s32.totalorder %s28, 0
      %p96 = por %p94, %p95
      %p97 = scmp.ne.s32.totalorder %s85, %s86
      %p98 = scmp.eq.s32.totalorder %s29, 1
      %p99 = por %p97, %p98
      %p101 = scmp.ne.s32.totalorder %s86, %s100
      %p102 = scmp.eq.s32.totalorder %s29, 0
      %p103 = por %p101, %p102
      %s105 = sadd.s32 %s104, 1
      %p108 = scmp.eq.s32.totalorder %s23, 1
      %p109 = scmp.ne.s32.totalorder %s104, %s106
      %p110 = scmp.eq.s32.totalorder %s23, 0
      %p111 = por %p109, %p110
      %p112 = scmp.ne.s32.totalorder %s104, %s106
      %p113 = scmp.eq.s32.totalorder %s28, 1
      %p114 = por %p112, %p113
      %p115 = scmp.ne.s32.totalorder %s106, %s107
      %p116 = scmp.eq.s32.totalorder %s28, 0
      %p117 = por %p115, %p116
      %p118 = scmp.ne.s32.totalorder %s106, %s107
      %p119 = scmp.eq.s32.totalorder %s29, 1
      %p120 = por %p118, %p119
      %p122 = scmp.ne.s32.totalorder %s107, %s121
      %p123 = scmp.eq.s32.totalorder %s29, 0
      %p124 = por %p122, %p123
      %s126 = sadd.s32 %s125, 1
      %p129 = scmp.eq.s32.totalorder %s23, 1
      %p130 = scmp.ne.s32.totalorder %s125, %s127
      %p131 = scmp.eq.s32.totalorder %s23, 0
      %p132 = por %p130, %p131
      %p133 = scmp.ne.s32.totalorder %s125, %s127
      %p134 = scmp.eq.s32.totalorder %s28, 1
      %p135 = por %p133, %p134
      %p136 = scmp.ne.s32.totalorder %s127, %s128
      %p137 = scmp.eq.s32.totalorder %s28, 0
      %p138 = por %p136, %p137
      %p139 = scmp.ne.s32.totalorder %s127, %s128
      %p140 = scmp.eq.s32.totalorder %s29, 1
      %p141 = por %p139, %p140
      %p143 = scmp.ne.s32.totalorder %s128, %s142
      %p144 = scmp.eq.s32.totalorder %s29, 0
      %p145 = por %p143, %p144
      %s147 = sadd.s32 %s146, 1
      %p150 = scmp.eq.s32.totalorder %s23, 1
      %p151 = scmp.ne.s32.totalorder %s146, %s148
      %p152 = scmp.eq.s32.totalorder %s23, 0
      %p153 = por %p151, %p152
      %p154 = scmp.ne.s32.totalorder %s146, %s148
      %p155 = scmp.eq.s32.totalorder %s28, 1
      %p156 = por %p154, %p155
      %p157 = scmp.ne.s32.totalorder %s148, %s149
      %p158 = scmp.eq.s32.totalorder %s28, 0
      %p159 = por %p157, %p158
      %p160 = scmp.ne.s32.totalorder %s148, %s149
      %p161 = scmp.eq.s32.totalorder %s29, 1
      %p162 = por %p160, %p161
      %p164 = scmp.ne.s32.totalorder %s149, %s163
      %p165 = scmp.eq.s32.totalorder %s29, 0
      %p166 = por %p164, %p165
      %s168 = sadd.s32 %s167, 1
      %p171 = scmp.eq.s32.totalorder %s23, 1
      %p172 = scmp.ne.s32.totalorder %s167, %s169
      %p173 = scmp.eq.s32.totalorder %s23, 0
      %p174 = por %p172, %p173
      %p175 = scmp.ne.s32.totalorder %s167, %s169
      %p176 = scmp.eq.s32.totalorder %s28, 1
      %p177 = por %p175, %p176
      %p178 = scmp.ne.s32.totalorder %s169, %s170
      %p179 = scmp.eq.s32.totalorder %s28, 0
      %p180 = por %p178, %p179
      %p181 = scmp.ne.s32.totalorder %s169, %s170
      %p182 = scmp.eq.s32.totalorder %s29, 1
      %p183 = por %p181, %p182
      %p185 = scmp.ne.s32.totalorder %s170, %s184
      %p186 = scmp.eq.s32.totalorder %s29, 0
      %p187 = por %p185, %p186
      %s189 = sadd.s32 %s188, 1
      %p192 = scmp.eq.s32.totalorder %s23, 1
      %p193 = scmp.ne.s32.totalorder %s188, %s190
      %p194 = scmp.eq.s32.totalorder %s23, 0
      %p195 = por %p193, %p194
      %p196 = scmp.ne.s32.totalorder %s188, %s190
      %p197 = scmp.eq.s32.totalorder %s28, 1
      %p198 = por %p196, %p197
      %p199 = scmp.ne.s32.totalorder %s190, %s191
      %p200 = scmp.eq.s32.totalorder %s28, 0
      %p201 = por %p199, %p200
      %p202 = scmp.ne.s32.totalorder %s190, %s191
      %p203 = scmp.eq.s32.totalorder %s29, 1
      %p204 = por %p202, %p203
      %p206 = scmp.ne.s32.totalorder %s191, %s205
      %p207 = scmp.eq.s32.totalorder %s29, 0
      %p208 = por %p206, %p207
      %s210 = sadd.s32 %s209, 1
      %p213 = scmp.eq.s32.totalorder %s23, 1
      %p214 = scmp.ne.s32.totalorder %s209, %s211
      %p215 = scmp.eq.s32.totalorder %s23, 0
      %p216 = por %p214, %p215
      %p217 = scmp.ne.s32.totalorder %s209, %s211
      %p218 = scmp.eq.s32.totalorder %s28, 1
      %p219 = por %p217, %p218
      %p220 = scmp.ne.s32.totalorder %s211, %s212
      %p221 = scmp.eq.s32.totalorder %s28, 0
      %p222 = por %p220, %p221
      %p223 = scmp.ne.s32.totalorder %s211, %s212
      %p224 = scmp.eq.s32.totalorder %s29, 1
      %p225 = por %p223, %p224
      %p227 = scmp.ne.s32.totalorder %s212, %s226
      %p228 = scmp.eq.s32.totalorder %s29, 0
      %p229 = por %p227, %p228
      %s231 = sadd.s32 %s230, 1
      %p234 = scmp.eq.s32.totalorder %s23, 1
      %p235 = scmp.ne.s32.totalorder %s230, %s232
      %p236 = scmp.eq.s32.totalorder %s23, 0
      %p237 = por %p235, %p236
      %p238 = scmp.ne.s32.totalorder %s230, %s232
      %p239 = scmp.eq.s32.totalorder %s28, 1
      %p240 = por %p238, %p239
      %p241 = scmp.ne.s32.totalorder %s232, %s233
      %p242 = scmp.eq.s32.totalorder %s28, 0
      %p243 = por %p241, %p242
      %p244 = scmp.ne.s32.totalorder %s232, %s233
      %p245 = scmp.eq.s32.totalorder %s29, 1
      %p246 = por %p244, %p245
      %p248 = scmp.ne.s32.totalorder %s233, %s247
      %p249 = scmp.eq.s32.totalorder %s29, 0
      %p250 = por %p248, %p249
      %s251 = ssub.s32 %s23, %s30
      %p252 = scmp.eq.s32.totalorder %s251, 0
      %s254 = sadd.s32 %s253, 1
      %s255 = scalar_select %p252, %s253, %s254
      %p258 = pneg %p252
      %p259 = scmp.eq.s32.totalorder %s23, 1
      %p260 = por %p258, %p259
      %p261 = scmp.ne.s32.totalorder %s253, %s256
      %p262 = scmp.eq.s32.totalorder %s23, 0
      %p263 = por %p261, %p262
      %p264 = scmp.ne.s32.totalorder %s253, %s256
      %p265 = scmp.eq.s32.totalorder %s28, 1
      %p266 = por %p264, %p265
      %p267 = scmp.ne.s32.totalorder %s256, %s257
      %p268 = scmp.eq.s32.totalorder %s28, 0
      %p269 = por %p267, %p268
      %p270 = scmp.ne.s32.totalorder %s256, %s257
      %p271 = scmp.eq.s32.totalorder %s29, 1
      %p272 = por %p270, %p271
      %p274 = scmp.ne.s32.totalorder %s257, %s273
      %p275 = scmp.eq.s32.totalorder %s29, 0
      %p276 = por %p274, %p275
      %p277 = scmp.le.s32.totalorder 1, %s23
      %p278 = scmp.lt.s32.totalorder %s23, 3
      %p279 = pnand %p277, %p278
      %p280 = pneg %p279
      // Predicated region
      $region9: #{tpu_custom_call.1} parent=5 // pred_check
        _
      $region10: #{tpu_custom_call.1} parent=5 // pred_check_branch
        %282 = sbr.rel (%p279) target = $region12
      $region11: #{tpu_custom_call.1} parent=5 // pred_region
        %s283 = ssub.s32 %s23, 1
        // Predicated region
        $region13: #{tpu_custom_call.1} parent=11 // pred_check
          %p284 = pneg %p96
        $region14: #{tpu_custom_call.1} parent=11 // pred_check_branch
          %286 = sbr.rel (%p284) target = $region16
        $region15: #{tpu_custom_call.1} parent=11 // pred_region
          %s288 = ssub.s32 3072, 3072
          %289 = vsyncadd [#allocation5], %s288
          %s290 = sshll.u32 [#allocation4], 4
          %s291 = int_to_ptr.vmem [resolvable:$true] %s290
          %296 = dma.hbm_to_vmem [thread:$0]  %s2, 3072, %s291, [#allocation5], 192, 192, 12
        $region16: #{tpu_custom_call.1} parent=11 // pred_fallthru
          _
        // Predicated region
        $region17: #{tpu_custom_call.1} parent=11 // pred_check
          %p297 = pneg %p117
        $region18: #{tpu_custom_call.1} parent=11 // pred_check_branch
          %299 = sbr.rel (%p297) target = $region20
        $region19: #{tpu_custom_call.1} parent=11 // pred_region
          _
        $region20: #{tpu_custom_call.1} parent=11 // pred_fallthru
          _
        // Predicated region
        $region21: #{tpu_custom_call.1} parent=11 // pred_check
          %p300 = pneg %p138
        $region22: #{tpu_custom_call.1} parent=11 // pred_check_branch
          %302 = sbr.rel (%p300) target = $region24
        $region23: #{tpu_custom_call.1} parent=11 // pred_region
          %s304 = ssub.s32 1024, 1024
          %305 = vsyncadd [#allocation8], %s304
          %s306 = sshll.u32 [#allocation7], 4
          %s307 = int_to_ptr.vmem [resolvable:$true] %s306
          %312 = dma.hbm_to_vmem [thread:$0]  %s4, 1024, %s307, [#allocation8], 64, 64, 4
        $region24: #{tpu_custom_call.1} parent=11 // pred_fallthru
          _
        // Predicated region
        $region25: #{tpu_custom_call.1} parent=11 // pred_check
          %p313 = pneg %p159
        $region26: #{tpu_custom_call.1} parent=11 // pred_check_branch
          %315 = sbr.rel (%p313) target = $region28
        $region27: #{tpu_custom_call.1} parent=11 // pred_region
          _
        $region28: #{tpu_custom_call.1} parent=11 // pred_fallthru
          _
        // Predicated region
        $region29: #{tpu_custom_call.1} parent=11 // pred_check
          %p316 = pneg %p180
        $region30: #{tpu_custom_call.1} parent=11 // pred_check_branch
          %318 = sbr.rel (%p316) target = $region32
        $region31: #{tpu_custom_call.1} parent=11 // pred_region
          %s320 = ssub.s32 2048, 2048
          %321 = vsyncadd [#allocation8], %s320
          %s322 = sshll.u32 [#allocation9], 4
          %s323 = int_to_ptr.vmem [resolvable:$true] %s322
          %328 = dma.hbm_to_vmem [thread:$0]  %s6, 2048, %s323, [#allocation8], 128, 128, 8
        $region32: #{tpu_custom_call.1} parent=11 // pred_fallthru
          _
        // Predicated region
        $region33: #{tpu_custom_call.1} parent=11 // pred_check
          %p329 = pneg %p201
        $region34: #{tpu_custom_call.1} parent=11 // pred_check_branch
          %331 = sbr.rel (%p329) target = $region36
        $region35: #{tpu_custom_call.1} parent=11 // pred_region
          _
        $region36: #{tpu_custom_call.1} parent=11 // pred_fallthru
          _
        // Predicated region
        $region37: #{tpu_custom_call.1} parent=11 // pred_check
          %p332 = pneg %p222
        $region38: #{tpu_custom_call.1} parent=11 // pred_check_branch
          %334 = sbr.rel (%p332) target = $region40
        $region39: #{tpu_custom_call.1} parent=11 // pred_region
          _
        $region40: #{tpu_custom_call.1} parent=11 // pred_fallthru
          _
        // Predicated region
        $region41: #{tpu_custom_call.1} parent=11 // pred_check
          %p335 = pneg %p243
        $region42: #{tpu_custom_call.1} parent=11 // pred_check_branch
          %337 = sbr.rel (%p335) target = $region44
        $region43: #{tpu_custom_call.1} parent=11 // pred_region
          _
        $region44: #{tpu_custom_call.1} parent=11 // pred_fallthru
          _
      $region12: #{tpu_custom_call.1} parent=5 // pred_fallthru
        _
      %p338 = scmp.lt.s32.totalorder %s23, 2
      // Predicated region
      $region45: #{tpu_custom_call.1} parent=5 // pred_check
        %p339 = pneg %p338
      $region46: #{tpu_custom_call.1} parent=5 // pred_check_branch
        %341 = sbr.rel (%p339) target = $region48
      $region47: #{tpu_custom_call.1} parent=5 // pred_region
        // Predicated region
        $region49: #{tpu_custom_call.1} parent=47 // pred_check
          %p342 = pneg %p43
        $region50: #{tpu_custom_call.1} parent=47 // pred_check_branch
          %344 = sbr.rel (%p342) target = $region52
        $region51: #{tpu_custom_call.1} parent=47 // pred_region
          %p345 = scmp.lt.s32.totalorder %s23, 1
          %s346 = scalar_select %p345, %s23, 1
          %s347 = smul.addr %s346, 32
          %s348 = smul.addr %s347, 8
          %s349 = scalar_lea.vmem %s0, %s348
        $region52: #{tpu_custom_call.1} parent=47 // pred_fallthru
          _
        // Predicated region
        $region53: #{tpu_custom_call.1} parent=47 // pred_check
          %p350 = pneg %p69
        $region54: #{tpu_custom_call.1} parent=47 // pred_check_branch
          %352 = sbr.rel (%p350) target = $region56
        $region55: #{tpu_custom_call.1} parent=47 // pred_region
          %p353 = scmp.lt.s32.totalorder %s23, 1
          %s354 = scalar_select %p353, %s23, 1
          %s355 = smul.addr %s354, 32
          %s356 = smul.addr %s355, 8
          %s357 = scalar_lea.vmem %s1, %s356
        $region56: #{tpu_custom_call.1} parent=47 // pred_fallthru
          _
      $region48: #{tpu_custom_call.1} parent=5 // pred_fallthru
        _
      %p358 = scmp.le.s32.totalorder 1, %s23
      %p359 = scmp.lt.s32.totalorder %s23, 3
      %p360 = pnand %p358, %p359
      %p361 = pneg %p360
      // Predicated region
      $region57: #{tpu_custom_call.1} parent=5 // pred_check
        _
      $region58: #{tpu_custom_call.1} parent=5 // pred_check_branch
        %363 = sbr.rel (%p360) target = $region60
      $region59: #{tpu_custom_call.1} parent=5 // pred_region
        %s364 = ssub.s32 %s23, 1
        // Predicated region
        $region61: #{tpu_custom_call.1} parent=59 // pred_check
          %p365 = pneg %p96
        $region62: #{tpu_custom_call.1} parent=59 // pred_check_branch
          %367 = sbr.rel (%p365) target = $region64
        $region63: #{tpu_custom_call.1} parent=59 // pred_region
          %368 = dma.done [#allocation5], 3072
        $region64: #{tpu_custom_call.1} parent=59 // pred_fallthru
          _
        // Predicated region
        $region65: #{tpu_custom_call.1} parent=59 // pred_check
          %p369 = pneg %p138
        $region66: #{tpu_custom_call.1} parent=59 // pred_check_branch
          %371 = sbr.rel (%p369) target = $region68
        $region67: #{tpu_custom_call.1} parent=59 // pred_region
          %372 = dma.done [#allocation8], 1024
        $region68: #{tpu_custom_call.1} parent=59 // pred_fallthru
          _
        // Predicated region
        $region69: #{tpu_custom_call.1} parent=59 // pred_check
          %p373 = pneg %p180
        $region70: #{tpu_custom_call.1} parent=59 // pred_check_branch
          %375 = sbr.rel (%p373) target = $region72
        $region71: #{tpu_custom_call.1} parent=59 // pred_region
          %376 = dma.done [#allocation8], 2048
        $region72: #{tpu_custom_call.1} parent=59 // pred_fallthru
          _
        %p377 = scmp.lt.s32.totalorder %s28, 1
        %s378 = scalar_select %p377, %s28, 1
        %s379 = smul.addr %s378, 32
        %s380 = smul.addr %s379, 8
        %s381 = scalar_lea.vmem %s0, %s380
        %p382 = pneg %p49
        %p383 = pneg %p46
        %p384 = scmp.lt.s32.totalorder %s28, 1
        %s385 = scalar_select %p384, %s28, 1
        %s386 = smul.addr %s385, 32
        %s387 = smul.addr %s386, 8
        %s388 = scalar_lea.vmem %s1, %s387
        %p389 = pneg %p75
        %p390 = pneg %p72
        %p391 = pneg %p96
        %p392 = pneg %p93
        %p393 = pneg %p117
        %p394 = pneg %p114
        %p395 = pneg %p138
        %p396 = pneg %p135
        %p397 = pneg %p159
        %p398 = pneg %p156
        %p399 = pneg %p180
        %p400 = pneg %p177
        %p401 = pneg %p201
        %p402 = pneg %p198
        %p403 = pneg %p222
        %p404 = pneg %p219
        %p405 = pneg %p243
        %p406 = pneg %p240
        %p407 = pneg %p269
        %p408 = pneg %p266
        %s409 = sand.u32 %s256, 1
        %s410 = scalar_lea.sflag [#allocation6], %s409
        %s411 = sand.u32 %s256, 1
        %s412 = smul.addr %s411, 256
        %s413 = scalar_lea.vmem [#allocation10], %s412
        %p414 = scmp.lt.s32.totalorder %s28, 1
        %s415 = scalar_select %p414, %s28, 1
        %s416 = smul.addr %s415, 32
        %s417 = smul.addr %s416, 8
        %s418 = scalar_lea.vmem %s0, %s417
        %p419 = scmp.lt.s32.totalorder %s28, 1
        %s420 = scalar_select %p419, %s28, 1
        %s421 = smul.addr %s420, 32
        %s422 = smul.addr %s421, 8
        %s423 = scalar_lea.vmem %s1, %s422
        %v425 = vld [vmem:[%s418] sm:$0xff]
        %v426 = vld [vmem:[%s418 + $0x8] sm:$0xff]
        %v427 = vld [vmem:[%s418 + $0x10] sm:$0xff]
        %v428 = vld [vmem:[%s418 + $0x18] sm:$0xff]
        %v429 = vld [vmem:[%s418 + $0x20] sm:$0xff]
        %v430 = vld [vmem:[%s418 + $0x28] sm:$0xff]
        %v431 = vld [vmem:[%s418 + $0x30] sm:$0xff]
        %v432 = vld [vmem:[%s418 + $0x38] sm:$0xff]
        %v433 = vld [vmem:[%s418 + $0x40] sm:$0xff]
        %v434 = vld [vmem:[%s418 + $0x48] sm:$0xff]
        %v435 = vld [vmem:[%s418 + $0x50] sm:$0xff]
        %v436 = vld [vmem:[%s418 + $0x58] sm:$0xff]
        %v437 = vld [vmem:[%s418 + $0x60] sm:$0xff]
        %v438 = vld [vmem:[%s418 + $0x68] sm:$0xff]
        %v439 = vld [vmem:[%s418 + $0x70] sm:$0xff]
        %v440 = vld [vmem:[%s418 + $0x78] sm:$0xff]
        %v441 = vld [vmem:[%s418 + $0x80] sm:$0xff]
        %v442 = vld [vmem:[%s418 + $0x88] sm:$0xff]
        %v443 = vld [vmem:[%s418 + $0x90] sm:$0xff]
        %v444 = vld [vmem:[%s418 + $0x98] sm:$0xff]
        %v445 = vld [vmem:[%s418 + $0xa0] sm:$0xff]
        %v446 = vld [vmem:[%s418 + $0xa8] sm:$0xff]
        %v447 = vld [vmem:[%s418 + $0xb0] sm:$0xff]
        %v448 = vld [vmem:[%s418 + $0xb8] sm:$0xff]
        %v449 = vld [vmem:[%s418 + $0xc0] sm:$0xff]
        %v450 = vld [vmem:[%s418 + $0xc8] sm:$0xff]
        %v451 = vld [vmem:[%s418 + $0xd0] sm:$0xff]
        %v452 = vld [vmem:[%s418 + $0xd8] sm:$0xff]
        %v453 = vld [vmem:[%s418 + $0xe0] sm:$0xff]
        %v454 = vld [vmem:[%s418 + $0xe8] sm:$0xff]
        %v455 = vld [vmem:[%s418 + $0xf0] sm:$0xff]
        %v456 = vld [vmem:[%s418 + $0xf8] sm:$0xff]
        %v457 = vpack.c.bf16 %v426, %v425
        %v458 = vpack.c.bf16 %v428, %v427
        %v459 = vpack.c.bf16 %v430, %v429
        %v460 = vpack.c.bf16 %v432, %v431
        %v461 = vpack.c.bf16 %v434, %v433
        %v462 = vpack.c.bf16 %v436, %v435
        %v463 = vpack.c.bf16 %v438, %v437
        %v464 = vpack.c.bf16 %v440, %v439
        %v465 = vpack.c.bf16 %v442, %v441
        %v466 = vpack.c.bf16 %v444, %v443
        %v467 = vpack.c.bf16 %v446, %v445
        %v468 = vpack.c.bf16 %v448, %v447
        %v469 = vpack.c.bf16 %v450, %v449
        %v470 = vpack.c.bf16 %v452, %v451
        %v471 = vpack.c.bf16 %v454, %v453
        %v472 = vpack.c.bf16 %v456, %v455
        %v473 = vld [vmem:[#allocation4] sm:$0xff]
        %v474 = vld [vmem:[#allocation4 + $0x8] sm:$0xf]
        %v475 = vld [vmem:[#allocation4 + $0xc] sm:$0xff]
        %v476 = vld [vmem:[#allocation4 + $0x14] sm:$0xf]
        %v477 = vld [vmem:[#allocation4 + $0x18] sm:$0xff]
        %v478 = vld [vmem:[#allocation4 + $0x20] sm:$0xf]
        %v479 = vld [vmem:[#allocation4 + $0x24] sm:$0xff]
        %v480 = vld [vmem:[#allocation4 + $0x2c] sm:$0xf]
        %v481 = vld [vmem:[#allocation4 + $0x30] sm:$0xff]
        %v482 = vld [vmem:[#allocation4 + $0x38] sm:$0xf]
        %v483 = vld [vmem:[#allocation4 + $0x3c] sm:$0xff]
        %v484 = vld [vmem:[#allocation4 + $0x44] sm:$0xf]
        %v485 = vld [vmem:[#allocation4 + $0x48] sm:$0xff]
        %v486 = vld [vmem:[#allocation4 + $0x50] sm:$0xf]
        %v487 = vld [vmem:[#allocation4 + $0x54] sm:$0xff]
        %v488 = vld [vmem:[#allocation4 + $0x5c] sm:$0xf]
        %v489 = vld [vmem:[#allocation4 + $0x60] sm:$0xff]
        %v490 = vld [vmem:[#allocation4 + $0x68] sm:$0xf]
        %v491 = vld [vmem:[#allocation4 + $0x6c] sm:$0xff]
        %v492 = vld [vmem:[#allocation4 + $0x74] sm:$0xf]
        %v493 = vld [vmem:[#allocation4 + $0x78] sm:$0xff]
        %v494 = vld [vmem:[#allocation4 + $0x80] sm:$0xf]
        %v495 = vld [vmem:[#allocation4 + $0x84] sm:$0xff]
        %v496 = vld [vmem:[#allocation4 + $0x8c] sm:$0xf]
        %v497 = vld [vmem:[#allocation4 + $0x90] sm:$0xff]
        %v498 = vld [vmem:[#allocation4 + $0x98] sm:$0xf]
        %v499 = vld [vmem:[#allocation4 + $0x9c] sm:$0xff]
        %v500 = vld [vmem:[#allocation4 + $0xa4] sm:$0xf]
        %v501 = vld [vmem:[#allocation4 + $0xa8] sm:$0xff]
        %v502 = vld [vmem:[#allocation4 + $0xb0] sm:$0xf]
        %v503 = vld [vmem:[#allocation4 + $0xb4] sm:$0xff]
        %v504 = vld [vmem:[#allocation4 + $0xbc] sm:$0xf]
        %v505 = vld [vmem:[%s3] sm:$0x7]
        %v507 = vlaneseq
        %v508 = vshrl.u32 %v507, 7
        %v509 = vsub.s32 0, %v508
        %v510 = vrot.slane %v505, %v509
        %v511 = vlaneseq
        %v512 = vshrl.u32 %v511, 7
        %v513 = vsub.s32 1, %v512
        %v514 = vrot.slane %v505, %v513
        %v515 = vlaneseq
        %v516 = vshrl.u32 %v515, 7
        %v517 = vsub.s32 2, %v516
        %v518 = vrot.slane %v505, %v517
        %v554 = vunpack.c.l.b16 %v473
        %v555 = vunpack.c.h.b16 %v473
        %v556 = vunpack.c.l.b16 %v474
        %v557 = vunpack.c.l.b16 %v475
        %v558 = vunpack.c.h.b16 %v475
        %v559 = vunpack.c.l.b16 %v476
        %v560 = vunpack.c.l.b16 %v477
        %v561 = vunpack.c.h.b16 %v477
        %v562 = vunpack.c.l.b16 %v478
        %v563 = vunpack.c.l.b16 %v479
        %v564 = vunpack.c.h.b16 %v479
        %v565 = vunpack.c.l.b16 %v480
        %v566 = vunpack.c.l.b16 %v481
        %v567 = vunpack.c.h.b16 %v481
        %v568 = vunpack.c.l.b16 %v482
        %v569 = vunpack.c.l.b16 %v483
        %v570 = vunpack.c.h.b16 %v483
        %v571 = vunpack.c.l.b16 %v484
        %v572 = vunpack.c.l.b16 %v485
        %v573 = vunpack.c.h.b16 %v485
        %v574 = vunpack.c.l.b16 %v486
        %v575 = vunpack.c.l.b16 %v487
        %v576 = vunpack.c.h.b16 %v487
        %v577 = vunpack.c.l.b16 %v488
        %v578 = vunpack.c.l.b16 %v489
        %v579 = vunpack.c.h.b16 %v489
        %v580 = vunpack.c.l.b16 %v490
        %v581 = vunpack.c.l.b16 %v491
        %v582 = vunpack.c.h.b16 %v491
        %v583 = vunpack.c.l.b16 %v492
        %v584 = vunpack.c.l.b16 %v493
        %v585 = vunpack.c.h.b16 %v493
        %v586 = vunpack.c.l.b16 %v494
        %v587 = vunpack.c.l.b16 %v495
        %v588 = vunpack.c.h.b16 %v495
        %v589 = vunpack.c.l.b16 %v496
        %v590 = vunpack.c.l.b16 %v497
        %v591 = vunpack.c.h.b16 %v497
        %v592 = vunpack.c.l.b16 %v498
        %v593 = vunpack.c.l.b16 %v499
        %v594 = vunpack.c.h.b16 %v499
        %v595 = vunpack.c.l.b16 %v500
        %v596 = vunpack.c.l.b16 %v501
        %v597 = vunpack.c.h.b16 %v501
        %v598 = vunpack.c.l.b16 %v502
        %v599 = vunpack.c.l.b16 %v503
        %v600 = vunpack.c.h.b16 %v503
        %v601 = vunpack.c.l.b16 %v504
        %v602 = vpack.c.b16 %v557, %v554
        %v603 = vpack.c.b16 %v558, %v555
        %v604 = vpack.c.b16 %v559, %v556
        %v605 = vpack.c.b16 %v563, %v560
        %v606 = vpack.c.b16 %v564, %v561
        %v607 = vpack.c.b16 %v565, %v562
        %v608 = vpack.c.b16 %v569, %v566
        %v609 = vpack.c.b16 %v570, %v567
        %v610 = vpack.c.b16 %v571, %v568
        %v611 = vpack.c.b16 %v575, %v572
        %v612 = vpack.c.b16 %v576, %v573
        %v613 = vpack.c.b16 %v577, %v574
        %v614 = vpack.c.b16 %v581, %v578
        %v615 = vpack.c.b16 %v582, %v579
        %v616 = vpack.c.b16 %v583, %v580
        %v617 = vpack.c.b16 %v587, %v584
        %v618 = vpack.c.b16 %v588, %v585
        %v619 = vpack.c.b16 %v589, %v586
        %v620 = vpack.c.b16 %v593, %v590
        %v621 = vpack.c.b16 %v594, %v591
        %v622 = vpack.c.b16 %v595, %v592
        %v623 = vpack.c.b16 %v599, %v596
        %v624 = vpack.c.b16 %v600, %v597
        %v625 = vpack.c.b16 %v601, %v598
        %650 = vmatprep.subr.bf16.mxu0 %v603
        %651 = vmatpush1.bf16.msra.mxu0 %v602
        %652 = vmatprep.subr.bf16.mxu0 %v606
        %653 = vmatpush1.bf16.msra.mxu0 %v605
        %654 = vmatprep.subr.bf16.mxu0 %v609
        %655 = vmatpush1.bf16.msra.mxu0 %v608
        %656 = vmatprep.subr.bf16.mxu0 %v612
        %657 = vmatpush1.bf16.msra.mxu0 %v611
        %658 = vmatprep.subr.bf16.mxu0 %v615
        %659 = vmatpush1.bf16.msra.mxu0 %v614
        %660 = vmatprep.subr.bf16.mxu0 %v618
        %661 = vmatpush1.bf16.msra.mxu0 %v617
        %662 = vmatprep.subr.bf16.mxu0 %v621
        %663 = vmatpush1.bf16.msra.mxu0 %v620
        %664 = vmatprep.subr.bf16.mxu0 %v624
        %665 = vmatpush1.bf16.msra.mxu0 %v623
        %666 = vmatprep.subr.bf16.mxu0 0
        %667 = vmatpush1.bf16.msra.mxu0 0
        %668 = vmatprep.subr.bf16.mxu0 0
        %669 = vmatpush1.bf16.msra.mxu0 0
        %670 = vmatprep.subr.bf16.mxu0 0
        %671 = vmatpush1.bf16.msra.mxu0 0
        %672 = vmatprep.subr.bf16.mxu0 0
        %673 = vmatpush1.bf16.msra.mxu0 0
        %674 = vmatprep.subr.bf16.mxu0 0
        %675 = vmatpush1.bf16.msra.mxu0 0
        %676 = vmatprep.subr.bf16.mxu0 0
        %677 = vmatpush1.bf16.msra.mxu0 0
        %678 = vmatprep.subr.bf16.mxu0 0
        %679 = vmatpush1.bf16.msra.mxu0 0
        %680 = vmatprep.subr.bf16.mxu0 0
        %681 = vmatpush1.bf16.msra.mxu0 0
        %682 = vmatprep.mubr.bf16.mxu0 0
        %683 = vmatmul.mubr.bf16.gmra.mrb[0].mxu0 %v457
        %v684 = vpop.f32.mrb[0].mxu0
        %v685 = vadd.f32 %v510, %v684
        %v686 = vpop.f32.mrb[0].mxu0
        %v687 = vadd.f32 %v514, %v686
        %v688 = vpop.f32.mrb[0].mxu0
        %v689 = vadd.f32 %v510, %v688
        %v690 = vpop.f32.mrb[0].mxu0
        %v691 = vadd.f32 %v514, %v690
        %692 = vmatprep.mubr.bf16.mxu0 0
        %693 = vmatmul.mubr.bf16.gmra.mrb[0].mxu0 %v458
        %v694 = vpop.f32.mrb[0].mxu0
        %v695 = vadd.f32 %v510, %v694
        %v696 = vpop.f32.mrb[0].mxu0
        %v697 = vadd.f32 %v514, %v696
        %v698 = vpop.f32.mrb[0].mxu0
        %v699 = vadd.f32 %v510, %v698
        %v700 = vpop.f32.mrb[0].mxu0
        %v701 = vadd.f32 %v514, %v700
        %702 = vmatprep.mubr.bf16.mxu0 0
        %703 = vmatmul.mubr.bf16.gmra.mrb[0].mxu0 %v459
        %v704 = vpop.f32.mrb[0].mxu0
        %v705 = vadd.f32 %v510, %v704
        %v706 = vpop.f32.mrb[0].mxu0
        %v707 = vadd.f32 %v514, %v706
        %v708 = vpop.f32.mrb[0].mxu0
        %v709 = vadd.f32 %v510, %v708
        %v710 = vpop.f32.mrb[0].mxu0
        %v711 = vadd.f32 %v514, %v710
        %712 = vmatprep.mubr.bf16.mxu0 0
        %713 = vmatmul.mubr.bf16.gmra.mrb[0].mxu0 %v460
        %v714 = vpop.f32.mrb[0].mxu0
        %v715 = vadd.f32 %v510, %v714
        %v716 = vpop.f32.mrb[0].mxu0
        %v717 = vadd.f32 %v514, %v716
        %v718 = vpop.f32.mrb[0].mxu0
        %v719 = vadd.f32 %v510, %v718
        %v720 = vpop.f32.mrb[0].mxu0
        %v721 = vadd.f32 %v514, %v720
        %722 = vmatprep.mubr.bf16.mxu0 0
        %723 = vmatmul.mubr.bf16.gmra.mrb[0].mxu0 %v461
        %v724 = vpop.f32.mrb[0].mxu0
        %v725 = vadd.f32 %v510, %v724
        %v726 = vpop.f32.mrb[0].mxu0
        %v727 = vadd.f32 %v514, %v726
        %v728 = vpop.f32.mrb[0].mxu0
        %v729 = vadd.f32 %v510, %v728
        %v730 = vpop.f32.mrb[0].mxu0
        %v731 = vadd.f32 %v514, %v730
        %732 = vmatprep.mubr.bf16.mxu0 0
        %733 = vmatmul.mubr.bf16.gmra.mrb[0].mxu0 %v462
        %v734 = vpop.f32.mrb[0].mxu0
        %v735 = vadd.f32 %v510, %v734
        %v736 = vpop.f32.mrb[0].mxu0
        %v737 = vadd.f32 %v514, %v736
        %v738 = vpop.f32.mrb[0].mxu0
        %v739 = vadd.f32 %v510, %v738
        %v740 = vpop.f32.mrb[0].mxu0
        %v741 = vadd.f32 %v514, %v740
        %742 = vmatprep.mubr.bf16.mxu0 0
        %743 = vmatmul.mubr.bf16.gmra.mrb[0].mxu0 %v463
        %v744 = vpop.f32.mrb[0].mxu0
        %v745 = vadd.f32 %v510, %v744
        %v746 = vpop.f32.mrb[0].mxu0
        %v747 = vadd.f32 %v514, %v746
        %v748 = vpop.f32.mrb[0].mxu0
        %v749 = vadd.f32 %v510, %v748
        %v750 = vpop.f32.mrb[0].mxu0
        %v751 = vadd.f32 %v514, %v750
        %752 = vmatprep.mubr.bf16.mxu0 0
        %753 = vmatmul.mubr.bf16.gmra.mrb[0].mxu0 %v464
        %v754 = vpop.f32.mrb[0].mxu0
        %v755 = vadd.f32 %v510, %v754
        %v756 = vpop.f32.mrb[0].mxu0
        %v757 = vadd.f32 %v514, %v756
        %v758 = vpop.f32.mrb[0].mxu0
        %v759 = vadd.f32 %v510, %v758
        %v760 = vpop.f32.mrb[0].mxu0
        %v761 = vadd.f32 %v514, %v760
        %762 = vmatprep.mubr.bf16.mxu0 0
        %763 = vmatmul.mubr.bf16.gmra.mrb[0].mxu0 %v465
        %v764 = vpop.f32.mrb[0].mxu0
        %v765 = vadd.f32 %v510, %v764
        %v766 = vpop.f32.mrb[0].mxu0
        %v767 = vadd.f32 %v514, %v766
        %v768 = vpop.f32.mrb[0].mxu0
        %v769 = vadd.f32 %v510, %v768
        %v770 = vpop.f32.mrb[0].mxu0
        %v771 = vadd.f32 %v514, %v770
        %772 = vmatprep.mubr.bf16.mxu0 0
        %773 = vmatmul.mubr.bf16.gmra.mrb[0].mxu0 %v466
        %v774 = vpop.f32.mrb[0].mxu0
        %v775 = vadd.f32 %v510, %v774
        %v776 = vpop.f32.mrb[0].mxu0
        %v777 = vadd.f32 %v514, %v776
        %v778 = vpop.f32.mrb[0].mxu0
        %v779 = vadd.f32 %v510, %v778
        %v780 = vpop.f32.mrb[0].mxu0
        %v781 = vadd.f32 %v514, %v780
        %782 = vmatprep.mubr.bf16.mxu0 0
        %783 = vmatmul.mubr.bf16.gmra.mrb[0].mxu0 %v467
        %v784 = vpop.f32.mrb[0].mxu0
        %v785 = vadd.f32 %v510, %v784
        %v786 = vpop.f32.mrb[0].mxu0
        %v787 = vadd.f32 %v514, %v786
        %v788 = vpop.f32.mrb[0].mxu0
        %v789 = vadd.f32 %v510, %v788
        %v790 = vpop.f32.mrb[0].mxu0
        %v791 = vadd.f32 %v514, %v790
        %792 = vmatprep.mubr.bf16.mxu0 0
        %793 = vmatmul.mubr.bf16.gmra.mrb[0].mxu0 %v468
        %v794 = vpop.f32.mrb[0].mxu0
        %v795 = vadd.f32 %v510, %v794
        %v796 = vpop.f32.mrb[0].mxu0
        %v797 = vadd.f32 %v514, %v796
        %v798 = vpop.f32.mrb[0].mxu0
        %v799 = vadd.f32 %v510, %v798
        %v800 = vpop.f32.mrb[0].mxu0
        %v801 = vadd.f32 %v514, %v800
        %802 = vmatprep.mubr.bf16.mxu0 0
        %803 = vmatmul.mubr.bf16.gmra.mrb[0].mxu0 %v469
        %v804 = vpop.f32.mrb[0].mxu0
        %v805 = vadd.f32 %v510, %v804
        %v806 = vpop.f32.mrb[0].mxu0
        %v807 = vadd.f32 %v514, %v806
        %v808 = vpop.f32.mrb[0].mxu0
        %v809 = vadd.f32 %v510, %v808
        %v810 = vpop.f32.mrb[0].mxu0
        %v811 = vadd.f32 %v514, %v810
        %812 = vmatprep.mubr.bf16.mxu0 0
        %813 = vmatmul.mubr.bf16.gmra.mrb[0].mxu0 %v470
        %v814 = vpop.f32.mrb[0].mxu0
        %v815 = vadd.f32 %v510, %v814
        %v816 = vpop.f32.mrb[0].mxu0
        %v817 = vadd.f32 %v514, %v816
        %v818 = vpop.f32.mrb[0].mxu0
        %v819 = vadd.f32 %v510, %v818
        %v820 = vpop.f32.mrb[0].mxu0
        %v821 = vadd.f32 %v514, %v820
        %822 = vmatprep.mubr.bf16.mxu0 0
        %823 = vmatmul.mubr.bf16.gmra.mrb[0].mxu0 %v471
        %v824 = vpop.f32.mrb[0].mxu0
        %v825 = vadd.f32 %v510, %v824
        %v826 = vpop.f32.mrb[0].mxu0
        %v827 = vadd.f32 %v514, %v826
        %v828 = vpop.f32.mrb[0].mxu0
        %v829 = vadd.f32 %v510, %v828
        %v830 = vpop.f32.mrb[0].mxu0
        %v831 = vadd.f32 %v514, %v830
        %832 = vmatprep.mubr.bf16.mxu0 0
        %833 = vmatmul.mubr.bf16.gmra.mrb[0].mxu0 %v472
        %v834 = vpop.f32.mrb[0].mxu0
        %v835 = vadd.f32 %v510, %v834
        %v836 = vpop.f32.mrb[0].mxu0
        %v837 = vadd.f32 %v514, %v836
        %v838 = vpop.f32.mrb[0].mxu0
        %v839 = vadd.f32 %v510, %v838
        %v840 = vpop.f32.mrb[0].mxu0
        %v841 = vadd.f32 %v514, %v840
        %842 = vdwg.mxu0
        %843 = vmatprep.subr.bf16.mxu0 0
        %844 = vmatpush1.bf16.msra.mxu0 %v604
        %845 = vmatprep.subr.bf16.mxu0 0
        %846 = vmatpush1.bf16.msra.mxu0 %v607
        %847 = vmatprep.subr.bf16.mxu0 0
        %848 = vmatpush1.bf16.msra.mxu0 %v610
        %849 = vmatprep.subr.bf16.mxu0 0
        %850 = vmatpush1.bf16.msra.mxu0 %v613
        %851 = vmatprep.subr.bf16.mxu0 0
        %852 = vmatpush1.bf16.msra.mxu0 %v616
        %853 = vmatprep.subr.bf16.mxu0 0
        %854 = vmatpush1.bf16.msra.mxu0 %v619
        %855 = vmatprep.subr.bf16.mxu0 0
        %856 = vmatpush1.bf16.msra.mxu0 %v622
        %857 = vmatprep.subr.bf16.mxu0 0
        %858 = vmatpush1.bf16.msra.mxu0 %v625
        %859 = vmatprep.subr.bf16.mxu0 0
        %860 = vmatpush1.bf16.msra.mxu0 0
        %861 = vmatprep.subr.bf16.mxu0 0
        %862 = vmatpush1.bf16.msra.mxu0 0
        %863 = vmatprep.subr.bf16.mxu0 0
        %864 = vmatpush1.bf16.msra.mxu0 0
        %865 = vmatprep.subr.bf16.mxu0 0
        %866 = vmatpush1.bf16.msra.mxu0 0
        %867 = vmatprep.subr.bf16.mxu0 0
        %868 = vmatpush1.bf16.msra.mxu0 0
        %869 = vmatprep.subr.bf16.mxu0 0
        %870 = vmatpush1.bf16.msra.mxu0 0
        %871 = vmatprep.subr.bf16.mxu0 0
        %872 = vmatpush1.bf16.msra.mxu0 0
        %873 = vmatprep.subr.bf16.mxu0 0
        %874 = vmatpush1.bf16.msra.mxu0 0
        %875 = vmatprep.mubr.bf16.mxu0 0
        %876 = vmatmul.mubr.bf16.gmra.mrb[0].mxu0 %v457
        %v877 = vpop.f32.mrb[0].mxu0
        %v878 = vadd.f32 %v518, %v877
        %v879 = vpop.f32.mrb[0].mxu0
        %v880 = vpop.f32.mrb[0].mxu0
        %v881 = vadd.f32 %v518, %v880
        %v882 = vpop.f32.mrb[0].mxu0
        %883 = vmatprep.mubr.bf16.mxu0 0
        %884 = vmatmul.mubr.bf16.gmra.mrb[0].mxu0 %v458
        %v885 = vpop.f32.mrb[0].mxu0
        %v886 = vadd.f32 %v518, %v885
        %v887 = vpop.f32.mrb[0].mxu0
        %v888 = vpop.f32.mrb[0].mxu0
        %v889 = vadd.f32 %v518, %v888
        %v890 = vpop.f32.mrb[0].mxu0
        %891 = vmatprep.mubr.bf16.mxu0 0
        %892 = vmatmul.mubr.bf16.gmra.mrb[0].mxu0 %v459
        %v893 = vpop.f32.mrb[0].mxu0
        %v894 = vadd.f32 %v518, %v893
        %v895 = vpop.f32.mrb[0].mxu0
        %v896 = vpop.f32.mrb[0].mxu0
        %v897 = vadd.f32 %v518, %v896
        %v898 = vpop.f32.mrb[0].mxu0
        %899 = vmatprep.mubr.bf16.mxu0 0
        %900 = vmatmul.mubr.bf16.gmra.mrb[0].mxu0 %v460
        %v901 = vpop.f32.mrb[0].mxu0
        %v902 = vadd.f32 %v518, %v901
        %v903 = vpop.f32.mrb[0].mxu0
        %v904 = vpop.f32.mrb[0].mxu0
        %v905 = vadd.f32 %v518, %v904
        %v906 = vpop.f32.mrb[0].mxu0
        %907 = vmatprep.mubr.bf16.mxu0 0
        %908 = vmatmul.mubr.bf16.gmra.mrb[0].mxu0 %v461
        %v909 = vpop.f32.mrb[0].mxu0
        %v910 = vadd.f32 %v518, %v909
        %v911 = vpop.f32.mrb[0].mxu0
        %v912 = vpop.f32.mrb[0].mxu0
        %v913 = vadd.f32 %v518, %v912
        %v914 = vpop.f32.mrb[0].mxu0
        %915 = vmatprep.mubr.bf16.mxu0 0
        %916 = vmatmul.mubr.bf16.gmra.mrb[0].mxu0 %v462
        %v917 = vpop.f32.mrb[0].mxu0
        %v918 = vadd.f32 %v518, %v917
        %v919 = vpop.f32.mrb[0].mxu0
        %v920 = vpop.f32.mrb[0].mxu0
        %v921 = vadd.f32 %v518, %v920
        %v922 = vpop.f32.mrb[0].mxu0
        %923 = vmatprep.mubr.bf16.mxu0 0
        %924 = vmatmul.mubr.bf16.gmra.mrb[0].mxu0 %v463
        %v925 = vpop.f32.mrb[0].mxu0
        %v926 = vadd.f32 %v518, %v925
        %v927 = vpop.f32.mrb[0].mxu0
        %v928 = vpop.f32.mrb[0].mxu0
        %v929 = vadd.f32 %v518, %v928
        %v930 = vpop.f32.mrb[0].mxu0
        %931 = vmatprep.mubr.bf16.mxu0 0
        %932 = vmatmul.mubr.bf16.gmra.mrb[0].mxu0 %v464
        %v933 = vpop.f32.mrb[0].mxu0
        %v934 = vadd.f32 %v518, %v933
        %v935 = vpop.f32.mrb[0].mxu0
        %v936 = vpop.f32.mrb[0].mxu0
        %v937 = vadd.f32 %v518, %v936
        %v938 = vpop.f32.mrb[0].mxu0
        %939 = vmatprep.mubr.bf16.mxu0 0
        %940 = vmatmul.mubr.bf16.gmra.mrb[0].mxu0 %v465
        %v941 = vpop.f32.mrb[0].mxu0
        %v942 = vadd.f32 %v518, %v941
        %v943 = vpop.f32.mrb[0].mxu0
        %v944 = vpop.f32.mrb[0].mxu0
        %v945 = vadd.f32 %v518, %v944
        %v946 = vpop.f32.mrb[0].mxu0
        %947 = vmatprep.mubr.bf16.mxu0 0
        %948 = vmatmul.mubr.bf16.gmra.mrb[0].mxu0 %v466
        %v949 = vpop.f32.mrb[0].mxu0
        %v950 = vadd.f32 %v518, %v949
        %v951 = vpop.f32.mrb[0].mxu0
        %v952 = vpop.f32.mrb[0].mxu0
        %v953 = vadd.f32 %v518, %v952
        %v954 = vpop.f32.mrb[0].mxu0
        %955 = vmatprep.mubr.bf16.mxu0 0
        %956 = vmatmul.mubr.bf16.gmra.mrb[0].mxu0 %v467
        %v957 = vpop.f32.mrb[0].mxu0
        %v958 = vadd.f32 %v518, %v957
        %v959 = vpop.f32.mrb[0].mxu0
        %v960 = vpop.f32.mrb[0].mxu0
        %v961 = vadd.f32 %v518, %v960
        %v962 = vpop.f32.mrb[0].mxu0
        %963 = vmatprep.mubr.bf16.mxu0 0
        %964 = vmatmul.mubr.bf16.gmra.mrb[0].mxu0 %v468
        %v965 = vpop.f32.mrb[0].mxu0
        %v966 = vadd.f32 %v518, %v965
        %v967 = vpop.f32.mrb[0].mxu0
        %v968 = vpop.f32.mrb[0].mxu0
        %v969 = vadd.f32 %v518, %v968
        %v970 = vpop.f32.mrb[0].mxu0
        %971 = vmatprep.mubr.bf16.mxu0 0
        %972 = vmatmul.mubr.bf16.gmra.mrb[0].mxu0 %v469
        %v973 = vpop.f32.mrb[0].mxu0
        %v974 = vadd.f32 %v518, %v973
        %v975 = vpop.f32.mrb[0].mxu0
        %v976 = vpop.f32.mrb[0].mxu0
        %v977 = vadd.f32 %v518, %v976
        %v978 = vpop.f32.mrb[0].mxu0
        %979 = vmatprep.mubr.bf16.mxu0 0
        %980 = vmatmul.mubr.bf16.gmra.mrb[0].mxu0 %v470
        %v981 = vpop.f32.mrb[0].mxu0
        %v982 = vadd.f32 %v518, %v981
        %v983 = vpop.f32.mrb[0].mxu0
        %v984 = vpop.f32.mrb[0].mxu0
        %v985 = vadd.f32 %v518, %v984
        %v986 = vpop.f32.mrb[0].mxu0
        %987 = vmatprep.mubr.bf16.mxu0 0
        %988 = vmatmul.mubr.bf16.gmra.mrb[0].mxu0 %v471
        %v989 = vpop.f32.mrb[0].mxu0
        %v990 = vadd.f32 %v518, %v989
        %v991 = vpop.f32.mrb[0].mxu0
        %v992 = vpop.f32.mrb[0].mxu0
        %v993 = vadd.f32 %v518, %v992
        %v994 = vpop.f32.mrb[0].mxu0
        %995 = vmatprep.mubr.bf16.mxu0 0
        %996 = vmatmul.mubr.bf16.gmra.mrb[0].mxu0 %v472
        %v997 = vpop.f32.mrb[0].mxu0
        %v998 = vadd.f32 %v518, %v997
        %v999 = vpop.f32.mrb[0].mxu0
        %v1000 = vpop.f32.mrb[0].mxu0
        %v1001 = vadd.f32 %v518, %v1000
        %v1002 = vpop.f32.mrb[0].mxu0
        %1003 = vdwg.mxu0
        %v1004 = vpack.c.bf16 %v689, %v685
        %v1005 = vpack.c.bf16 %v699, %v695
        %v1006 = vpack.c.bf16 %v709, %v705
        %v1007 = vpack.c.bf16 %v719, %v715
        %v1008 = vpack.c.bf16 %v729, %v725
        %v1009 = vpack.c.bf16 %v739, %v735
        %v1010 = vpack.c.bf16 %v749, %v745
        %v1011 = vpack.c.bf16 %v759, %v755
        %v1012 = vpack.c.bf16 %v769, %v765
        %v1013 = vpack.c.bf16 %v779, %v775
        %v1014 = vpack.c.bf16 %v789, %v785
        %v1015 = vpack.c.bf16 %v799, %v795
        %v1016 = vpack.c.bf16 %v809, %v805
        %v1017 = vpack.c.bf16 %v819, %v815
        %v1018 = vpack.c.bf16 %v829, %v825
        %v1019 = vpack.c.bf16 %v839, %v835
        %v1020 = vpack.c.bf16 %v691, %v687
        %v1021 = vpack.c.bf16 %v701, %v697
        %v1022 = vpack.c.bf16 %v711, %v707
        %v1023 = vpack.c.bf16 %v721, %v717
        %v1024 = vpack.c.bf16 %v731, %v727
        %v1025 = vpack.c.bf16 %v741, %v737
        %v1026 = vpack.c.bf16 %v751, %v747
        %v1027 = vpack.c.bf16 %v761, %v757
        %v1028 = vpack.c.bf16 %v881, %v878
        %v1029 = vpack.c.bf16 %v889, %v886
        %v1030 = vpack.c.bf16 %v897, %v894
        %v1031 = vpack.c.bf16 %v905, %v902
        %v1032 = vpack.c.bf16 %v913, %v910
        %v1033 = vpack.c.bf16 %v921, %v918
        %v1034 = vpack.c.bf16 %v929, %v926
        %v1035 = vpack.c.bf16 %v937, %v934
        %1036 = vmatprep.subr.bf16.mxu0 0
        %1037 = vmatpush1.bf16.xpose.msra.mxu0 %v1020
        %1038 = vmatprep.subr.bf16.mxu0 0
        %1039 = vmatpush1.bf16.xpose.msra.mxu0 %v1021
        %1040 = vmatprep.subr.bf16.mxu0 0
        %1041 = vmatpush1.bf16.xpose.msra.mxu0 %v1022
        %1042 = vmatprep.subr.bf16.mxu0 0
        %1043 = vmatpush1.bf16.xpose.msra.mxu0 %v1023
        %1044 = vmatprep.subr.bf16.mxu0 0
        %1045 = vmatpush1.bf16.xpose.msra.mxu0 %v1024
        %1046 = vmatprep.subr.bf16.mxu0 0
        %1047 = vmatpush1.bf16.xpose.msra.mxu0 %v1025
        %1048 = vmatprep.subr.bf16.mxu0 0
        %1049 = vmatpush1.bf16.xpose.msra.mxu0 %v1026
        %1050 = vmatprep.subr.bf16.mxu0 0
        %1051 = vmatpush1.bf16.xpose.msra.mxu0 %v1027
        %1052 = vmatprep.subr.bf16.mxu0 0
        %1053 = vmatpush1.bf16.xpose.msra.mxu0 0
        %1054 = vmatprep.subr.bf16.mxu0 0
        %1055 = vmatpush1.bf16.xpose.msra.mxu0 0
        %1056 = vmatprep.subr.bf16.mxu0 0
        %1057 = vmatpush1.bf16.xpose.msra.mxu0 0
        %1058 = vmatprep.subr.bf16.mxu0 0
        %1059 = vmatpush1.bf16.xpose.msra.mxu0 0
        %1060 = vmatprep.subr.bf16.mxu0 0
        %1061 = vmatpush1.bf16.xpose.msra.mxu0 0
        %1062 = vmatprep.subr.bf16.mxu0 0
        %1063 = vmatpush1.bf16.xpose.msra.mxu0 0
        %1064 = vmatprep.subr.bf16.mxu0 0
        %1065 = vmatpush1.bf16.xpose.msra.mxu0 0
        %1066 = vmatprep.subr.bf16.mxu0 0
        %1067 = vmatpush1.bf16.xpose.msra.mxu0 0
        %1068 = vmatprep.mubr.bf16.mxu0 0
        %1069 = vmatmul.mubr.bf16.gmra.mrb[0].mxu0 %v1004
        %v1070 = vpop.f32.mrb[0].mxu0
        %v1071 = vadd.f32 0.0, %v1070
        %v1072 = vpop.f32.mrb[0].mxu0
        %v1073 = vpop.f32.mrb[0].mxu0
        %v1074 = vadd.f32 0.0, %v1073
        %v1075 = vpop.f32.mrb[0].mxu0
        %1076 = vmatprep.mubr.bf16.mxu0 0
        %1077 = vmatmul.mubr.bf16.gmra.mrb[0].mxu0 %v1005
        %v1078 = vpop.f32.mrb[0].mxu0
        %v1079 = vadd.f32 0.0, %v1078
        %v1080 = vpop.f32.mrb[0].mxu0
        %v1081 = vpop.f32.mrb[0].mxu0
        %v1082 = vadd.f32 0.0, %v1081
        %v1083 = vpop.f32.mrb[0].mxu0
        %1084 = vmatprep.mubr.bf16.mxu0 0
        %1085 = vmatmul.mubr.bf16.gmra.mrb[0].mxu0 %v1006
        %v1086 = vpop.f32.mrb[0].mxu0
        %v1087 = vadd.f32 0.0, %v1086
        %v1088 = vpop.f32.mrb[0].mxu0
        %v1089 = vpop.f32.mrb[0].mxu0
        %v1090 = vadd.f32 0.0, %v1089
        %v1091 = vpop.f32.mrb[0].mxu0
        %1092 = vmatprep.mubr.bf16.mxu0 0
        %1093 = vmatmul.mubr.bf16.gmra.mrb[0].mxu0 %v1007
        %v1094 = vpop.f32.mrb[0].mxu0
        %v1095 = vadd.f32 0.0, %v1094
        %v1096 = vpop.f32.mrb[0].mxu0
        %v1097 = vpop.f32.mrb[0].mxu0
        %v1098 = vadd.f32 0.0, %v1097
        %v1099 = vpop.f32.mrb[0].mxu0
        %1100 = vmatprep.mubr.bf16.mxu0 0
        %1101 = vmatmul.mubr.bf16.gmra.mrb[0].mxu0 %v1008
        %v1102 = vpop.f32.mrb[0].mxu0
        %v1103 = vadd.f32 0.0, %v1102
        %v1104 = vpop.f32.mrb[0].mxu0
        %v1105 = vpop.f32.mrb[0].mxu0
        %v1106 = vadd.f32 0.0, %v1105
        %v1107 = vpop.f32.mrb[0].mxu0
        %1108 = vmatprep.mubr.bf16.mxu0 0
        %1109 = vmatmul.mubr.bf16.gmra.mrb[0].mxu0 %v1009
        %v1110 = vpop.f32.mrb[0].mxu0
        %v1111 = vadd.f32 0.0, %v1110
        %v1112 = vpop.f32.mrb[0].mxu0
        %v1113 = vpop.f32.mrb[0].mxu0
        %v1114 = vadd.f32 0.0, %v1113
        %v1115 = vpop.f32.mrb[0].mxu0
        %1116 = vmatprep.mubr.bf16.mxu0 0
        %1117 = vmatmul.mubr.bf16.gmra.mrb[0].mxu0 %v1010
        %v1118 = vpop.f32.mrb[0].mxu0
        %v1119 = vadd.f32 0.0, %v1118
        %v1120 = vpop.f32.mrb[0].mxu0
        %v1121 = vpop.f32.mrb[0].mxu0
        %v1122 = vadd.f32 0.0, %v1121
        %v1123 = vpop.f32.mrb[0].mxu0
        %1124 = vmatprep.mubr.bf16.mxu0 0
        %1125 = vmatmul.mubr.bf16.gmra.mrb[0].mxu0 %v1011
        %v1126 = vpop.f32.mrb[0].mxu0
        %v1127 = vadd.f32 0.0, %v1126
        %v1128 = vpop.f32.mrb[0].mxu0
        %v1129 = vpop.f32.mrb[0].mxu0
        %v1130 = vadd.f32 0.0, %v1129
        %v1131 = vpop.f32.mrb[0].mxu0
        %1132 = vmatprep.mubr.bf16.mxu0 0
        %1133 = vmatmul.mubr.bf16.gmra.mrb[0].mxu0 %v1012
        %v1134 = vpop.f32.mrb[0].mxu0
        %v1135 = vadd.f32 0.0, %v1134
        %v1136 = vpop.f32.mrb[0].mxu0
        %v1137 = vpop.f32.mrb[0].mxu0
        %v1138 = vadd.f32 0.0, %v1137
        %v1139 = vpop.f32.mrb[0].mxu0
        %1140 = vmatprep.mubr.bf16.mxu0 0
        %1141 = vmatmul.mubr.bf16.gmra.mrb[0].mxu0 %v1013
        %v1142 = vpop.f32.mrb[0].mxu0
        %v1143 = vadd.f32 0.0, %v1142
        %v1144 = vpop.f32.mrb[0].mxu0
        %v1145 = vpop.f32.mrb[0].mxu0
        %v1146 = vadd.f32 0.0, %v1145
        %v1147 = vpop.f32.mrb[0].mxu0
        %1148 = vmatprep.mubr.bf16.mxu0 0
        %1149 = vmatmul.mubr.bf16.gmra.mrb[0].mxu0 %v1014
        %v1150 = vpop.f32.mrb[0].mxu0
        %v1151 = vadd.f32 0.0, %v1150
        %v1152 = vpop.f32.mrb[0].mxu0
        %v1153 = vpop.f32.mrb[0].mxu0
        %v1154 = vadd.f32 0.0, %v1153
        %v1155 = vpop.f32.mrb[0].mxu0
        %1156 = vmatprep.mubr.bf16.mxu0 0
        %1157 = vmatmul.mubr.bf16.gmra.mrb[0].mxu0 %v1015
        %v1158 = vpop.f32.mrb[0].mxu0
        %v1159 = vadd.f32 0.0, %v1158
        %v1160 = vpop.f32.mrb[0].mxu0
        %v1161 = vpop.f32.mrb[0].mxu0
        %v1162 = vadd.f32 0.0, %v1161
        %v1163 = vpop.f32.mrb[0].mxu0
        %1164 = vmatprep.mubr.bf16.mxu0 0
        %1165 = vmatmul.mubr.bf16.gmra.mrb[0].mxu0 %v1016
        %v1166 = vpop.f32.mrb[0].mxu0
        %v1167 = vadd.f32 0.0, %v1166
        %v1168 = vpop.f32.mrb[0].mxu0
        %v1169 = vpop.f32.mrb[0].mxu0
        %v1170 = vadd.f32 0.0, %v1169
        %v1171 = vpop.f32.mrb[0].mxu0
        %1172 = vmatprep.mubr.bf16.mxu0 0
        %1173 = vmatmul.mubr.bf16.gmra.mrb[0].mxu0 %v1017
        %v1174 = vpop.f32.mrb[0].mxu0
        %v1175 = vadd.f32 0.0, %v1174
        %v1176 = vpop.f32.mrb[0].mxu0
        %v1177 = vpop.f32.mrb[0].mxu0
        %v1178 = vadd.f32 0.0, %v1177
        %v1179 = vpop.f32.mrb[0].mxu0
        %1180 = vmatprep.mubr.bf16.mxu0 0
        %1181 = vmatmul.mubr.bf16.gmra.mrb[0].mxu0 %v1018
        %v1182 = vpop.f32.mrb[0].mxu0
        %v1183 = vadd.f32 0.0, %v1182
        %v1184 = vpop.f32.mrb[0].mxu0
        %v1185 = vpop.f32.mrb[0].mxu0
        %v1186 = vadd.f32 0.0, %v1185
        %v1187 = vpop.f32.mrb[0].mxu0
        %1188 = vmatprep.mubr.bf16.mxu0 0
        %1189 = vmatmul.mubr.bf16.gmra.mrb[0].mxu0 %v1019
        %v1190 = vpop.f32.mrb[0].mxu0
        %v1191 = vadd.f32 0.0, %v1190
        %v1192 = vpop.f32.mrb[0].mxu0
        %v1193 = vpop.f32.mrb[0].mxu0
        %v1194 = vadd.f32 0.0, %v1193
        %v1195 = vpop.f32.mrb[0].mxu0
        %1196 = vdwg.mxu0
        %1197 = vmax.xlane.f32.xlu0 %v1071
        %v1198 = vpop.xlane.xlu0 %1197
        %1199 = vmax.xlane.f32.xlu0 %v1074
        %v1200 = vpop.xlane.xlu0 %1199
        %1201 = vmax.xlane.f32.xlu0 %v1079
        %v1202 = vpop.xlane.xlu0 %1201
        %1203 = vmax.xlane.f32.xlu0 %v1082
        %v1204 = vpop.xlane.xlu0 %1203
        %1205 = vmax.xlane.f32.xlu0 %v1087
        %v1206 = vpop.xlane.xlu0 %1205
        %1207 = vmax.xlane.f32.xlu0 %v1090
        %v1208 = vpop.xlane.xlu0 %1207
        %1209 = vmax.xlane.f32.xlu0 %v1095
        %v1210 = vpop.xlane.xlu0 %1209
        %1211 = vmax.xlane.f32.xlu0 %v1098
        %v1212 = vpop.xlane.xlu0 %1211
        %1213 = vmax.xlane.f32.xlu0 %v1103
        %v1214 = vpop.xlane.xlu0 %1213
        %1215 = vmax.xlane.f32.xlu0 %v1106
        %v1216 = vpop.xlane.xlu0 %1215
        %1217 = vmax.xlane.f32.xlu0 %v1111
        %v1218 = vpop.xlane.xlu0 %1217
        %1219 = vmax.xlane.f32.xlu0 %v1114
        %v1220 = vpop.xlane.xlu0 %1219
        %1221 = vmax.xlane.f32.xlu0 %v1119
        %v1222 = vpop.xlane.xlu0 %1221
        %1223 = vmax.xlane.f32.xlu0 %v1122
        %v1224 = vpop.xlane.xlu0 %1223
        %1225 = vmax.xlane.f32.xlu0 %v1127
        %v1226 = vpop.xlane.xlu0 %1225
        %1227 = vmax.xlane.f32.xlu0 %v1130
        %v1228 = vpop.xlane.xlu0 %1227
        %1229 = vmax.xlane.f32.xlu0 %v1135
        %v1230 = vpop.xlane.xlu0 %1229
        %1231 = vmax.xlane.f32.xlu0 %v1138
        %v1232 = vpop.xlane.xlu0 %1231
        %1233 = vmax.xlane.f32.xlu0 %v1143
        %v1234 = vpop.xlane.xlu0 %1233
        %1235 = vmax.xlane.f32.xlu0 %v1146
        %v1236 = vpop.xlane.xlu0 %1235
        %1237 = vmax.xlane.f32.xlu0 %v1151
        %v1238 = vpop.xlane.xlu0 %1237
        %1239 = vmax.xlane.f32.xlu0 %v1154
        %v1240 = vpop.xlane.xlu0 %1239
        %1241 = vmax.xlane.f32.xlu0 %v1159
        %v1242 = vpop.xlane.xlu0 %1241
        %1243 = vmax.xlane.f32.xlu0 %v1162
        %v1244 = vpop.xlane.xlu0 %1243
        %1245 = vmax.xlane.f32.xlu0 %v1167
        %v1246 = vpop.xlane.xlu0 %1245
        %1247 = vmax.xlane.f32.xlu0 %v1170
        %v1248 = vpop.xlane.xlu0 %1247
        %1249 = vmax.xlane.f32.xlu0 %v1175
        %v1250 = vpop.xlane.xlu0 %1249
        %1251 = vmax.xlane.f32.xlu0 %v1178
        %v1252 = vpop.xlane.xlu0 %1251
        %1253 = vmax.xlane.f32.xlu0 %v1183
        %v1254 = vpop.xlane.xlu0 %1253
        %1255 = vmax.xlane.f32.xlu0 %v1186
        %v1256 = vpop.xlane.xlu0 %1255
        %1257 = vmax.xlane.f32.xlu0 %v1191
        %v1258 = vpop.xlane.xlu0 %1257
        %1259 = vmax.xlane.f32.xlu0 %v1194
        %v1260 = vpop.xlane.xlu0 %1259
        %v1261 = vsub.f32 -inf, %v1198
        %v1262 = vsub.f32 -inf, %v1200
        %v1263 = vsub.f32 -inf, %v1202
        %v1264 = vsub.f32 -inf, %v1204
        %v1265 = vsub.f32 -inf, %v1206
        %v1266 = vsub.f32 -inf, %v1208
        %v1267 = vsub.f32 -inf, %v1210
        %v1268 = vsub.f32 -inf, %v1212
        %v1269 = vsub.f32 -inf, %v1214
        %v1270 = vsub.f32 -inf, %v1216
        %v1271 = vsub.f32 -inf, %v1218
        %v1272 = vsub.f32 -inf, %v1220
        %v1273 = vsub.f32 -inf, %v1222
        %v1274 = vsub.f32 -inf, %v1224
        %v1275 = vsub.f32 -inf, %v1226
        %v1276 = vsub.f32 -inf, %v1228
        %v1277 = vsub.f32 -inf, %v1230
        %v1278 = vsub.f32 -inf, %v1232
        %v1279 = vsub.f32 -inf, %v1234
        %v1280 = vsub.f32 -inf, %v1236
        %v1281 = vsub.f32 -inf, %v1238
        %v1282 = vsub.f32 -inf, %v1240
        %v1283 = vsub.f32 -inf, %v1242
        %v1284 = vsub.f32 -inf, %v1244
        %v1285 = vsub.f32 -inf, %v1246
        %v1286 = vsub.f32 -inf, %v1248
        %v1287 = vsub.f32 -inf, %v1250
        %v1288 = vsub.f32 -inf, %v1252
        %v1289 = vsub.f32 -inf, %v1254
        %v1290 = vsub.f32 -inf, %v1256
        %v1291 = vsub.f32 -inf, %v1258
        %v1292 = vsub.f32 -inf, %v1260
        %v1293 = vmul.f32 %v1261, 1.442695
        %v1294 = vpow.pop %v1293
        %v1295 = vmul.f32 %v1262, 1.442695
        %v1296 = vpow.pop %v1295
        %v1297 = vmul.f32 %v1263, 1.442695
        %v1298 = vpow.pop %v1297
        %v1299 = vmul.f32 %v1264, 1.442695
        %v1300 = vpow.pop %v1299
        %v1301 = vmul.f32 %v1265, 1.442695
        %v1302 = vpow.pop %v1301
        %v1303 = vmul.f32 %v1266, 1.442695
        %v1304 = vpow.pop %v1303
        %v1305 = vmul.f32 %v1267, 1.442695
        %v1306 = vpow.pop %v1305
        %v1307 = vmul.f32 %v1268, 1.442695
        %v1308 = vpow.pop %v1307
        %v1309 = vmul.f32 %v1269, 1.442695
        %v1310 = vpow.pop %v1309
        %v1311 = vmul.f32 %v1270, 1.442695
        %v1312 = vpow.pop %v1311
        %v1313 = vmul.f32 %v1271, 1.442695
        %v1314 = vpow.pop %v1313
        %v1315 = vmul.f32 %v1272, 1.442695
        %v1316 = vpow.pop %v1315
        %v1317 = vmul.f32 %v1273, 1.442695
        %v1318 = vpow.pop %v1317
        %v1319 = vmul.f32 %v1274, 1.442695
        %v1320 = vpow.pop %v1319
        %v1321 = vmul.f32 %v1275, 1.442695
        %v1322 = vpow.pop %v1321
        %v1323 = vmul.f32 %v1276, 1.442695
        %v1324 = vpow.pop %v1323
        %v1325 = vmul.f32 %v1277, 1.442695
        %v1326 = vpow.pop %v1325
        %v1327 = vmul.f32 %v1278, 1.442695
        %v1328 = vpow.pop %v1327
        %v1329 = vmul.f32 %v1279, 1.442695
        %v1330 = vpow.pop %v1329
        %v1331 = vmul.f32 %v1280, 1.442695
        %v1332 = vpow.pop %v1331
        %v1333 = vmul.f32 %v1281, 1.442695
        %v1334 = vpow.pop %v1333
        %v1335 = vmul.f32 %v1282, 1.442695
        %v1336 = vpow.pop %v1335
        %v1337 = vmul.f32 %v1283, 1.442695
        %v1338 = vpow.pop %v1337
        %v1339 = vmul.f32 %v1284, 1.442695
        %v1340 = vpow.pop %v1339
        %v1341 = vmul.f32 %v1285, 1.442695
        %v1342 = vpow.pop %v1341
        %v1343 = vmul.f32 %v1286, 1.442695
        %v1344 = vpow.pop %v1343
        %v1345 = vmul.f32 %v1287, 1.442695
        %v1346 = vpow.pop %v1345
        %v1347 = vmul.f32 %v1288, 1.442695
        %v1348 = vpow.pop %v1347
        %v1349 = vmul.f32 %v1289, 1.442695
        %v1350 = vpow.pop %v1349
        %v1351 = vmul.f32 %v1290, 1.442695
        %v1352 = vpow.pop %v1351
        %v1353 = vmul.f32 %v1291, 1.442695
        %v1354 = vpow.pop %v1353
        %v1355 = vmul.f32 %v1292, 1.442695
        %v1356 = vpow.pop %v1355
        %v1357 = vsub.f32 %v1071, %v1198
        %v1358 = vsub.f32 %v1074, %v1200
        %v1359 = vsub.f32 %v1079, %v1202
        %v1360 = vsub.f32 %v1082, %v1204
        %v1361 = vsub.f32 %v1087, %v1206
        %v1362 = vsub.f32 %v1090, %v1208
        %v1363 = vsub.f32 %v1095, %v1210
        %v1364 = vsub.f32 %v1098, %v1212
        %v1365 = vsub.f32 %v1103, %v1214
        %v1366 = vsub.f32 %v1106, %v1216
        %v1367 = vsub.f32 %v1111, %v1218
        %v1368 = vsub.f32 %v1114, %v1220
        %v1369 = vsub.f32 %v1119, %v1222
        %v1370 = vsub.f32 %v1122, %v1224
        %v1371 = vsub.f32 %v1127, %v1226
        %v1372 = vsub.f32 %v1130, %v1228
        %v1373 = vsub.f32 %v1135, %v1230
        %v1374 = vsub.f32 %v1138, %v1232
        %v1375 = vsub.f32 %v1143, %v1234
        %v1376 = vsub.f32 %v1146, %v1236
        %v1377 = vsub.f32 %v1151, %v1238
        %v1378 = vsub.f32 %v1154, %v1240
        %v1379 = vsub.f32 %v1159, %v1242
        %v1380 = vsub.f32 %v1162, %v1244
        %v1381 = vsub.f32 %v1167, %v1246
        %v1382 = vsub.f32 %v1170, %v1248
        %v1383 = vsub.f32 %v1175, %v1250
        %v1384 = vsub.f32 %v1178, %v1252
        %v1385 = vsub.f32 %v1183, %v1254
        %v1386 = vsub.f32 %v1186, %v1256
        %v1387 = vsub.f32 %v1191, %v1258
        %v1388 = vsub.f32 %v1194, %v1260
        %v1389 = vmul.f32 %v1357, 1.442695
        %v1390 = vpow.pop %v1389
        %v1391 = vmul.f32 %v1358, 1.442695
        %v1392 = vpow.pop %v1391
        %v1393 = vmul.f32 %v1359, 1.442695
        %v1394 = vpow.pop %v1393
        %v1395 = vmul.f32 %v1360, 1.442695
        %v1396 = vpow.pop %v1395
        %v1397 = vmul.f32 %v1361, 1.442695
        %v1398 = vpow.pop %v1397
        %v1399 = vmul.f32 %v1362, 1.442695
        %v1400 = vpow.pop %v1399
        %v1401 = vmul.f32 %v1363, 1.442695
        %v1402 = vpow.pop %v1401
        %v1403 = vmul.f32 %v1364, 1.442695
        %v1404 = vpow.pop %v1403
        %v1405 = vmul.f32 %v1365, 1.442695
        %v1406 = vpow.pop %v1405
        %v1407 = vmul.f32 %v1366, 1.442695
        %v1408 = vpow.pop %v1407
        %v1409 = vmul.f32 %v1367, 1.442695
        %v1410 = vpow.pop %v1409
        %v1411 = vmul.f32 %v1368, 1.442695
        %v1412 = vpow.pop %v1411
        %v1413 = vmul.f32 %v1369, 1.442695
        %v1414 = vpow.pop %v1413
        %v1415 = vmul.f32 %v1370, 1.442695
        %v1416 = vpow.pop %v1415
        %v1417 = vmul.f32 %v1371, 1.442695
        %v1418 = vpow.pop %v1417
        %v1419 = vmul.f32 %v1372, 1.442695
        %v1420 = vpow.pop %v1419
        %v1421 = vmul.f32 %v1373, 1.442695
        %v1422 = vpow.pop %v1421
        %v1423 = vmul.f32 %v1374, 1.442695
        %v1424 = vpow.pop %v1423
        %v1425 = vmul.f32 %v1375, 1.442695
        %v1426 = vpow.pop %v1425
        %v1427 = vmul.f32 %v1376, 1.442695
        %v1428 = vpow.pop %v1427
        %v1429 = vmul.f32 %v1377, 1.442695
        %v1430 = vpow.pop %v1429
        %v1431 = vmul.f32 %v1378, 1.442695
        %v1432 = vpow.pop %v1431
        %v1433 = vmul.f32 %v1379, 1.442695
        %v1434 = vpow.pop %v1433
        %v1435 = vmul.f32 %v1380, 1.442695
        %v1436 = vpow.pop %v1435
        %v1437 = vmul.f32 %v1381, 1.442695
        %v1438 = vpow.pop %v1437
        %v1439 = vmul.f32 %v1382, 1.442695
        %v1440 = vpow.pop %v1439
        %v1441 = vmul.f32 %v1383, 1.442695
        %v1442 = vpow.pop %v1441
        %v1443 = vmul.f32 %v1384, 1.442695
        %v1444 = vpow.pop %v1443
        %v1445 = vmul.f32 %v1385, 1.442695
        %v1446 = vpow.pop %v1445
        %v1447 = vmul.f32 %v1386, 1.442695
        %v1448 = vpow.pop %v1447
        %v1449 = vmul.f32 %v1387, 1.442695
        %v1450 = vpow.pop %v1449
        %v1451 = vmul.f32 %v1388, 1.442695
        %v1452 = vpow.pop %v1451
        %v1453 = vmul.f32 %v1294, 0.0
        %v1454 = vmul.f32 %v1296, 0.0
        %v1455 = vmul.f32 %v1298, 0.0
        %v1456 = vmul.f32 %v1300, 0.0
        %v1457 = vmul.f32 %v1302, 0.0
        %v1458 = vmul.f32 %v1304, 0.0
        %v1459 = vmul.f32 %v1306, 0.0
        %v1460 = vmul.f32 %v1308, 0.0
        %v1461 = vmul.f32 %v1310, 0.0
        %v1462 = vmul.f32 %v1312, 0.0
        %v1463 = vmul.f32 %v1314, 0.0
        %v1464 = vmul.f32 %v1316, 0.0
        %v1465 = vmul.f32 %v1318, 0.0
        %v1466 = vmul.f32 %v1320, 0.0
        %v1467 = vmul.f32 %v1322, 0.0
        %v1468 = vmul.f32 %v1324, 0.0
        %v1469 = vmul.f32 %v1326, 0.0
        %v1470 = vmul.f32 %v1328, 0.0
        %v1471 = vmul.f32 %v1330, 0.0
        %v1472 = vmul.f32 %v1332, 0.0
        %v1473 = vmul.f32 %v1334, 0.0
        %v1474 = vmul.f32 %v1336, 0.0
        %v1475 = vmul.f32 %v1338, 0.0
        %v1476 = vmul.f32 %v1340, 0.0
        %v1477 = vmul.f32 %v1342, 0.0
        %v1478 = vmul.f32 %v1344, 0.0
        %v1479 = vmul.f32 %v1346, 0.0
        %v1480 = vmul.f32 %v1348, 0.0
        %v1481 = vmul.f32 %v1350, 0.0
        %v1482 = vmul.f32 %v1352, 0.0
        %v1483 = vmul.f32 %v1354, 0.0
        %v1484 = vmul.f32 %v1356, 0.0
        %1485 = vadd.xlane.f32.xlu0 %v1390
        %v1486 = vpop.xlane.xlu0 %1485
        %1487 = vadd.xlane.f32.xlu0 %v1392
        %v1488 = vpop.xlane.xlu0 %1487
        %1489 = vadd.xlane.f32.xlu0 %v1394
        %v1490 = vpop.xlane.xlu0 %1489
        %1491 = vadd.xlane.f32.xlu0 %v1396
        %v1492 = vpop.xlane.xlu0 %1491
        %1493 = vadd.xlane.f32.xlu0 %v1398
        %v1494 = vpop.xlane.xlu0 %1493
        %1495 = vadd.xlane.f32.xlu0 %v1400
        %v1496 = vpop.xlane.xlu0 %1495
        %1497 = vadd.xlane.f32.xlu0 %v1402
        %v1498 = vpop.xlane.xlu0 %1497
        %1499 = vadd.xlane.f32.xlu0 %v1404
        %v1500 = vpop.xlane.xlu0 %1499
        %1501 = vadd.xlane.f32.xlu0 %v1406
        %v1502 = vpop.xlane.xlu0 %1501
        %1503 = vadd.xlane.f32.xlu0 %v1408
        %v1504 = vpop.xlane.xlu0 %1503
        %1505 = vadd.xlane.f32.xlu0 %v1410
        %v1506 = vpop.xlane.xlu0 %1505
        %1507 = vadd.xlane.f32.xlu0 %v1412
        %v1508 = vpop.xlane.xlu0 %1507
        %1509 = vadd.xlane.f32.xlu0 %v1414
        %v1510 = vpop.xlane.xlu0 %1509
        %1511 = vadd.xlane.f32.xlu0 %v1416
        %v1512 = vpop.xlane.xlu0 %1511
        %1513 = vadd.xlane.f32.xlu0 %v1418
        %v1514 = vpop.xlane.xlu0 %1513
        %1515 = vadd.xlane.f32.xlu0 %v1420
        %v1516 = vpop.xlane.xlu0 %1515
        %1517 = vadd.xlane.f32.xlu0 %v1422
        %v1518 = vpop.xlane.xlu0 %1517
        %1519 = vadd.xlane.f32.xlu0 %v1424
        %v1520 = vpop.xlane.xlu0 %1519
        %1521 = vadd.xlane.f32.xlu0 %v1426
        %v1522 = vpop.xlane.xlu0 %1521
        %1523 = vadd.xlane.f32.xlu0 %v1428
        %v1524 = vpop.xlane.xlu0 %1523
        %1525 = vadd.xlane.f32.xlu0 %v1430
        %v1526 = vpop.xlane.xlu0 %1525
        %1527 = vadd.xlane.f32.xlu0 %v1432
        %v1528 = vpop.xlane.xlu0 %1527
        %1529 = vadd.xlane.f32.xlu0 %v1434
        %v1530 = vpop.xlane.xlu0 %1529
        %1531 = vadd.xlane.f32.xlu0 %v1436
        %v1532 = vpop.xlane.xlu0 %1531
        %1533 = vadd.xlane.f32.xlu0 %v1438
        %v1534 = vpop.xlane.xlu0 %1533
        %1535 = vadd.xlane.f32.xlu0 %v1440
        %v1536 = vpop.xlane.xlu0 %1535
        %1537 = vadd.xlane.f32.xlu0 %v1442
        %v1538 = vpop.xlane.xlu0 %1537
        %1539 = vadd.xlane.f32.xlu0 %v1444
        %v1540 = vpop.xlane.xlu0 %1539
        %1541 = vadd.xlane.f32.xlu0 %v1446
        %v1542 = vpop.xlane.xlu0 %1541
        %1543 = vadd.xlane.f32.xlu0 %v1448
        %v1544 = vpop.xlane.xlu0 %1543
        %1545 = vadd.xlane.f32.xlu0 %v1450
        %v1546 = vpop.xlane.xlu0 %1545
        %1547 = vadd.xlane.f32.xlu0 %v1452
        %v1548 = vpop.xlane.xlu0 %1547
        %v1549 = vadd.f32 %v1453, %v1486
        %v1550 = vadd.f32 %v1454, %v1488
        %v1551 = vadd.f32 %v1455, %v1490
        %v1552 = vadd.f32 %v1456, %v1492
        %v1553 = vadd.f32 %v1457, %v1494
        %v1554 = vadd.f32 %v1458, %v1496
        %v1555 = vadd.f32 %v1459, %v1498
        %v1556 = vadd.f32 %v1460, %v1500
        %v1557 = vadd.f32 %v1461, %v1502
        %v1558 = vadd.f32 %v1462, %v1504
        %v1559 = vadd.f32 %v1463, %v1506
        %v1560 = vadd.f32 %v1464, %v1508
        %v1561 = vadd.f32 %v1465, %v1510
        %v1562 = vadd.f32 %v1466, %v1512
        %v1563 = vadd.f32 %v1467, %v1514
        %v1564 = vadd.f32 %v1468, %v1516
        %v1565 = vadd.f32 %v1469, %v1518
        %v1566 = vadd.f32 %v1470, %v1520
        %v1567 = vadd.f32 %v1471, %v1522
        %v1568 = vadd.f32 %v1472, %v1524
        %v1569 = vadd.f32 %v1473, %v1526
        %v1570 = vadd.f32 %v1474, %v1528
        %v1571 = vadd.f32 %v1475, %v1530
        %v1572 = vadd.f32 %v1476, %v1532
        %v1573 = vadd.f32 %v1477, %v1534
        %v1574 = vadd.f32 %v1478, %v1536
        %v1575 = vadd.f32 %v1479, %v1538
        %v1576 = vadd.f32 %v1480, %v1540
        %v1577 = vadd.f32 %v1481, %v1542
        %v1578 = vadd.f32 %v1482, %v1544
        %v1579 = vadd.f32 %v1483, %v1546
        %v1580 = vadd.f32 %v1484, %v1548
        %v1581 = vpack.c.bf16 %v1392, %v1390
        %v1582 = vpack.c.bf16 %v1396, %v1394
        %v1583 = vpack.c.bf16 %v1400, %v1398
        %v1584 = vpack.c.bf16 %v1404, %v1402
        %v1585 = vpack.c.bf16 %v1408, %v1406
        %v1586 = vpack.c.bf16 %v1412, %v1410
        %v1587 = vpack.c.bf16 %v1416, %v1414
        %v1588 = vpack.c.bf16 %v1420, %v1418
        %v1589 = vpack.c.bf16 %v1424, %v1422
        %v1590 = vpack.c.bf16 %v1428, %v1426
        %v1591 = vpack.c.bf16 %v1432, %v1430
        %v1592 = vpack.c.bf16 %v1436, %v1434
        %v1593 = vpack.c.bf16 %v1440, %v1438
        %v1594 = vpack.c.bf16 %v1444, %v1442
        %v1595 = vpack.c.bf16 %v1448, %v1446
        %v1596 = vpack.c.bf16 %v1452, %v1450
        %1597 = vmatprep.subr.bf16.mxu0 0
        %1598 = vmatpush1.bf16.msra.mxu0 %v1028
        %1599 = vmatprep.subr.bf16.mxu0 0
        %1600 = vmatpush1.bf16.msra.mxu0 %v1029
        %1601 = vmatprep.subr.bf16.mxu0 0
        %1602 = vmatpush1.bf16.msra.mxu0 %v1030
        %1603 = vmatprep.subr.bf16.mxu0 0
        %1604 = vmatpush1.bf16.msra.mxu0 %v1031
        %1605 = vmatprep.subr.bf16.mxu0 0
        %1606 = vmatpush1.bf16.msra.mxu0 %v1032
        %1607 = vmatprep.subr.bf16.mxu0 0
        %1608 = vmatpush1.bf16.msra.mxu0 %v1033
        %1609 = vmatprep.subr.bf16.mxu0 0
        %1610 = vmatpush1.bf16.msra.mxu0 %v1034
        %1611 = vmatprep.subr.bf16.mxu0 0
        %1612 = vmatpush1.bf16.msra.mxu0 %v1035
        %1613 = vmatprep.subr.bf16.mxu0 0
        %1614 = vmatpush1.bf16.msra.mxu0 0
        %1615 = vmatprep.subr.bf16.mxu0 0
        %1616 = vmatpush1.bf16.msra.mxu0 0
        %1617 = vmatprep.subr.bf16.mxu0 0
        %1618 = vmatpush1.bf16.msra.mxu0 0
        %1619 = vmatprep.subr.bf16.mxu0 0
        %1620 = vmatpush1.bf16.msra.mxu0 0
        %1621 = vmatprep.subr.bf16.mxu0 0
        %1622 = vmatpush1.bf16.msra.mxu0 0
        %1623 = vmatprep.subr.bf16.mxu0 0
        %1624 = vmatpush1.bf16.msra.mxu0 0
        %1625 = vmatprep.subr.bf16.mxu0 0
        %1626 = vmatpush1.bf16.msra.mxu0 0
        %1627 = vmatprep.subr.bf16.mxu0 0
        %1628 = vmatpush1.bf16.msra.mxu0 0
        %1629 = vmatprep.mubr.bf16.mxu0 0
        %1630 = vmatmul.mubr.bf16.gmra.mrb[0].mxu0 %v1581
        %v1631 = vpop.f32.mrb[0].mxu0
        %v1632 = vadd.f32 0.0, %v1631
        %v1633 = vpop.f32.mrb[0].mxu0
        %v1634 = vpop.f32.mrb[0].mxu0
        %v1635 = vadd.f32 0.0, %v1634
        %v1636 = vpop.f32.mrb[0].mxu0
        %1637 = vmatprep.mubr.bf16.mxu0 0
        %1638 = vmatmul.mubr.bf16.gmra.mrb[0].mxu0 %v1582
        %v1639 = vpop.f32.mrb[0].mxu0
        %v1640 = vadd.f32 0.0, %v1639
        %v1641 = vpop.f32.mrb[0].mxu0
        %v1642 = vpop.f32.mrb[0].mxu0
        %v1643 = vadd.f32 0.0, %v1642
        %v1644 = vpop.f32.mrb[0].mxu0
        %1645 = vmatprep.mubr.bf16.mxu0 0
        %1646 = vmatmul.mubr.bf16.gmra.mrb[0].mxu0 %v1583
        %v1647 = vpop.f32.mrb[0].mxu0
        %v1648 = vadd.f32 0.0, %v1647
        %v1649 = vpop.f32.mrb[0].mxu0
        %v1650 = vpop.f32.mrb[0].mxu0
        %v1651 = vadd.f32 0.0, %v1650
        %v1652 = vpop.f32.mrb[0].mxu0
        %1653 = vmatprep.mubr.bf16.mxu0 0
        %1654 = vmatmul.mubr.bf16.gmra.mrb[0].mxu0 %v1584
        %v1655 = vpop.f32.mrb[0].mxu0
        %v1656 = vadd.f32 0.0, %v1655
        %v1657 = vpop.f32.mrb[0].mxu0
        %v1658 = vpop.f32.mrb[0].mxu0
        %v1659 = vadd.f32 0.0, %v1658
        %v1660 = vpop.f32.mrb[0].mxu0
        %1661 = vmatprep.mubr.bf16.mxu0 0
        %1662 = vmatmul.mubr.bf16.gmra.mrb[0].mxu0 %v1585
        %v1663 = vpop.f32.mrb[0].mxu0
        %v1664 = vadd.f32 0.0, %v1663
        %v1665 = vpop.f32.mrb[0].mxu0
        %v1666 = vpop.f32.mrb[0].mxu0
        %v1667 = vadd.f32 0.0, %v1666
        %v1668 = vpop.f32.mrb[0].mxu0
        %1669 = vmatprep.mubr.bf16.mxu0 0
        %1670 = vmatmul.mubr.bf16.gmra.mrb[0].mxu0 %v1586
        %v1671 = vpop.f32.mrb[0].mxu0
        %v1672 = vadd.f32 0.0, %v1671
        %v1673 = vpop.f32.mrb[0].mxu0
        %v1674 = vpop.f32.mrb[0].mxu0
        %v1675 = vadd.f32 0.0, %v1674
        %v1676 = vpop.f32.mrb[0].mxu0
        %1677 = vmatprep.mubr.bf16.mxu0 0
        %1678 = vmatmul.mubr.bf16.gmra.mrb[0].mxu0 %v1587
        %v1679 = vpop.f32.mrb[0].mxu0
        %v1680 = vadd.f32 0.0, %v1679
        %v1681 = vpop.f32.mrb[0].mxu0
        %v1682 = vpop.f32.mrb[0].mxu0
        %v1683 = vadd.f32 0.0, %v1682
        %v1684 = vpop.f32.mrb[0].mxu0
        %1685 = vmatprep.mubr.bf16.mxu0 0
        %1686 = vmatmul.mubr.bf16.gmra.mrb[0].mxu0 %v1588
        %v1687 = vpop.f32.mrb[0].mxu0
        %v1688 = vadd.f32 0.0, %v1687
        %v1689 = vpop.f32.mrb[0].mxu0
        %v1690 = vpop.f32.mrb[0].mxu0
        %v1691 = vadd.f32 0.0, %v1690
        %v1692 = vpop.f32.mrb[0].mxu0
        %1693 = vmatprep.mubr.bf16.mxu0 0
        %1694 = vmatmul.mubr.bf16.gmra.mrb[0].mxu0 %v1589
        %v1695 = vpop.f32.mrb[0].mxu0
        %v1696 = vadd.f32 0.0, %v1695
        %v1697 = vpop.f32.mrb[0].mxu0
        %v1698 = vpop.f32.mrb[0].mxu0
        %v1699 = vadd.f32 0.0, %v1698
        %v1700 = vpop.f32.mrb[0].mxu0
        %1701 = vmatprep.mubr.bf16.mxu0 0
        %1702 = vmatmul.mubr.bf16.gmra.mrb[0].mxu0 %v1590
        %v1703 = vpop.f32.mrb[0].mxu0
        %v1704 = vadd.f32 0.0, %v1703
        %v1705 = vpop.f32.mrb[0].mxu0
        %v1706 = vpop.f32.mrb[0].mxu0
        %v1707 = vadd.f32 0.0, %v1706
        %v1708 = vpop.f32.mrb[0].mxu0
        %1709 = vmatprep.mubr.bf16.mxu0 0
        %1710 = vmatmul.mubr.bf16.gmra.mrb[0].mxu0 %v1591
        %v1711 = vpop.f32.mrb[0].mxu0
        %v1712 = vadd.f32 0.0, %v1711
        %v1713 = vpop.f32.mrb[0].mxu0
        %v1714 = vpop.f32.mrb[0].mxu0
        %v1715 = vadd.f32 0.0, %v1714
        %v1716 = vpop.f32.mrb[0].mxu0
        %1717 = vmatprep.mubr.bf16.mxu0 0
        %1718 = vmatmul.mubr.bf16.gmra.mrb[0].mxu0 %v1592
        %v1719 = vpop.f32.mrb[0].mxu0
        %v1720 = vadd.f32 0.0, %v1719
        %v1721 = vpop.f32.mrb[0].mxu0
        %v1722 = vpop.f32.mrb[0].mxu0
        %v1723 = vadd.f32 0.0, %v1722
        %v1724 = vpop.f32.mrb[0].mxu0
        %1725 = vmatprep.mubr.bf16.mxu0 0
        %1726 = vmatmul.mubr.bf16.gmra.mrb[0].mxu0 %v1593
        %v1727 = vpop.f32.mrb[0].mxu0
        %v1728 = vadd.f32 0.0, %v1727
        %v1729 = vpop.f32.mrb[0].mxu0
        %v1730 = vpop.f32.mrb[0].mxu0
        %v1731 = vadd.f32 0.0, %v1730
        %v1732 = vpop.f32.mrb[0].mxu0
        %1733 = vmatprep.mubr.bf16.mxu0 0
        %1734 = vmatmul.mubr.bf16.gmra.mrb[0].mxu0 %v1594
        %v1735 = vpop.f32.mrb[0].mxu0
        %v1736 = vadd.f32 0.0, %v1735
        %v1737 = vpop.f32.mrb[0].mxu0
        %v1738 = vpop.f32.mrb[0].mxu0
        %v1739 = vadd.f32 0.0, %v1738
        %v1740 = vpop.f32.mrb[0].mxu0
        %1741 = vmatprep.mubr.bf16.mxu0 0
        %1742 = vmatmul.mubr.bf16.gmra.mrb[0].mxu0 %v1595
        %v1743 = vpop.f32.mrb[0].mxu0
        %v1744 = vadd.f32 0.0, %v1743
        %v1745 = vpop.f32.mrb[0].mxu0
        %v1746 = vpop.f32.mrb[0].mxu0
        %v1747 = vadd.f32 0.0, %v1746
        %v1748 = vpop.f32.mrb[0].mxu0
        %1749 = vmatprep.mubr.bf16.mxu0 0
        %1750 = vmatmul.mubr.bf16.gmra.mrb[0].mxu0 %v1596
        %v1751 = vpop.f32.mrb[0].mxu0
        %v1752 = vadd.f32 0.0, %v1751
        %v1753 = vpop.f32.mrb[0].mxu0
        %v1754 = vpop.f32.mrb[0].mxu0
        %v1755 = vadd.f32 0.0, %v1754
        %v1756 = vpop.f32.mrb[0].mxu0
        %1757 = vdwg.mxu0
        %v1758 = vadd.f32 %v1453, %v1632
        %v1759 = vadd.f32 %v1454, %v1635
        %v1760 = vadd.f32 %v1455, %v1640
        %v1761 = vadd.f32 %v1456, %v1643
        %v1762 = vadd.f32 %v1457, %v1648
        %v1763 = vadd.f32 %v1458, %v1651
        %v1764 = vadd.f32 %v1459, %v1656
        %v1765 = vadd.f32 %v1460, %v1659
        %v1766 = vadd.f32 %v1461, %v1664
        %v1767 = vadd.f32 %v1462, %v1667
        %v1768 = vadd.f32 %v1463, %v1672
        %v1769 = vadd.f32 %v1464, %v1675
        %v1770 = vadd.f32 %v1465, %v1680
        %v1771 = vadd.f32 %v1466, %v1683
        %v1772 = vadd.f32 %v1467, %v1688
        %v1773 = vadd.f32 %v1468, %v1691
        %v1774 = vadd.f32 %v1469, %v1696
        %v1775 = vadd.f32 %v1470, %v1699
        %v1776 = vadd.f32 %v1471, %v1704
        %v1777 = vadd.f32 %v1472, %v1707
        %v1778 = vadd.f32 %v1473, %v1712
        %v1779 = vadd.f32 %v1474, %v1715
        %v1780 = vadd.f32 %v1475, %v1720
        %v1781 = vadd.f32 %v1476, %v1723
        %v1782 = vadd.f32 %v1477, %v1728
        %v1783 = vadd.f32 %v1478, %v1731
        %v1784 = vadd.f32 %v1479, %v1736
        %v1785 = vadd.f32 %v1480, %v1739
        %v1786 = vadd.f32 %v1481, %v1744
        %v1787 = vadd.f32 %v1482, %v1747
        %v1788 = vadd.f32 %v1483, %v1752
        %v1789 = vadd.f32 %v1484, %v1755
        %v1790 = vpack.c.bf16 %v771, %v767
        %v1791 = vpack.c.bf16 %v781, %v777
        %v1792 = vpack.c.bf16 %v791, %v787
        %v1793 = vpack.c.bf16 %v801, %v797
        %v1794 = vpack.c.bf16 %v811, %v807
        %v1795 = vpack.c.bf16 %v821, %v817
        %v1796 = vpack.c.bf16 %v831, %v827
        %v1797 = vpack.c.bf16 %v841, %v837
        %v1798 = vpack.c.bf16 %v945, %v942
        %v1799 = vpack.c.bf16 %v953, %v950
        %v1800 = vpack.c.bf16 %v961, %v958
        %v1801 = vpack.c.bf16 %v969, %v966
        %v1802 = vpack.c.bf16 %v977, %v974
        %v1803 = vpack.c.bf16 %v985, %v982
        %v1804 = vpack.c.bf16 %v993, %v990
        %v1805 = vpack.c.bf16 %v1001, %v998
        %1806 = vmatprep.subr.bf16.mxu0 0
        %1807 = vmatpush1.bf16.xpose.msra.mxu0 %v1790
        %1808 = vmatprep.subr.bf16.mxu0 0
        %1809 = vmatpush1.bf16.xpose.msra.mxu0 %v1791
        %1810 = vmatprep.subr.bf16.mxu0 0
        %1811 = vmatpush1.bf16.xpose.msra.mxu0 %v1792
        %1812 = vmatprep.subr.bf16.mxu0 0
        %1813 = vmatpush1.bf16.xpose.msra.mxu0 %v1793
        %1814 = vmatprep.subr.bf16.mxu0 0
        %1815 = vmatpush1.bf16.xpose.msra.mxu0 %v1794
        %1816 = vmatprep.subr.bf16.mxu0 0
        %1817 = vmatpush1.bf16.xpose.msra.mxu0 %v1795
        %1818 = vmatprep.subr.bf16.mxu0 0
        %1819 = vmatpush1.bf16.xpose.msra.mxu0 %v1796
        %1820 = vmatprep.subr.bf16.mxu0 0
        %1821 = vmatpush1.bf16.xpose.msra.mxu0 %v1797
        %1822 = vmatprep.subr.bf16.mxu0 0
        %1823 = vmatpush1.bf16.xpose.msra.mxu0 0
        %1824 = vmatprep.subr.bf16.mxu0 0
        %1825 = vmatpush1.bf16.xpose.msra.mxu0 0
        %1826 = vmatprep.subr.bf16.mxu0 0
        %1827 = vmatpush1.bf16.xpose.msra.mxu0 0
        %1828 = vmatprep.subr.bf16.mxu0 0
        %1829 = vmatpush1.bf16.xpose.msra.mxu0 0
        %1830 = vmatprep.subr.bf16.mxu0 0
        %1831 = vmatpush1.bf16.xpose.msra.mxu0 0
        %1832 = vmatprep.subr.bf16.mxu0 0
        %1833 = vmatpush1.bf16.xpose.msra.mxu0 0
        %1834 = vmatprep.subr.bf16.mxu0 0
        %1835 = vmatpush1.bf16.xpose.msra.mxu0 0
        %1836 = vmatprep.subr.bf16.mxu0 0
        %1837 = vmatpush1.bf16.xpose.msra.mxu0 0
        %1838 = vmatprep.mubr.bf16.mxu0 0
        %1839 = vmatmul.mubr.bf16.gmra.mrb[0].mxu0 %v1004
        %v1840 = vpop.f32.mrb[0].mxu0
        %v1841 = vadd.f32 0.0, %v1840
        %v1842 = vpop.f32.mrb[0].mxu0
        %v1843 = vpop.f32.mrb[0].mxu0
        %v1844 = vadd.f32 0.0, %v1843
        %v1845 = vpop.f32.mrb[0].mxu0
        %1846 = vmatprep.mubr.bf16.mxu0 0
        %1847 = vmatmul.mubr.bf16.gmra.mrb[0].mxu0 %v1005
        %v1848 = vpop.f32.mrb[0].mxu0
        %v1849 = vadd.f32 0.0, %v1848
        %v1850 = vpop.f32.mrb[0].mxu0
        %v1851 = vpop.f32.mrb[0].mxu0
        %v1852 = vadd.f32 0.0, %v1851
        %v1853 = vpop.f32.mrb[0].mxu0
        %1854 = vmatprep.mubr.bf16.mxu0 0
        %1855 = vmatmul.mubr.bf16.gmra.mrb[0].mxu0 %v1006
        %v1856 = vpop.f32.mrb[0].mxu0
        %v1857 = vadd.f32 0.0, %v1856
        %v1858 = vpop.f32.mrb[0].mxu0
        %v1859 = vpop.f32.mrb[0].mxu0
        %v1860 = vadd.f32 0.0, %v1859
        %v1861 = vpop.f32.mrb[0].mxu0
        %1862 = vmatprep.mubr.bf16.mxu0 0
        %1863 = vmatmul.mubr.bf16.gmra.mrb[0].mxu0 %v1007
        %v1864 = vpop.f32.mrb[0].mxu0
        %v1865 = vadd.f32 0.0, %v1864
        %v1866 = vpop.f32.mrb[0].mxu0
        %v1867 = vpop.f32.mrb[0].mxu0
        %v1868 = vadd.f32 0.0, %v1867
        %v1869 = vpop.f32.mrb[0].mxu0
        %1870 = vmatprep.mubr.bf16.mxu0 0
        %1871 = vmatmul.mubr.bf16.gmra.mrb[0].mxu0 %v1008
        %v1872 = vpop.f32.mrb[0].mxu0
        %v1873 = vadd.f32 0.0, %v1872
        %v1874 = vpop.f32.mrb[0].mxu0
        %v1875 = vpop.f32.mrb[0].mxu0
        %v1876 = vadd.f32 0.0, %v1875
        %v1877 = vpop.f32.mrb[0].mxu0
        %1878 = vmatprep.mubr.bf16.mxu0 0
        %1879 = vmatmul.mubr.bf16.gmra.mrb[0].mxu0 %v1009
        %v1880 = vpop.f32.mrb[0].mxu0
        %v1881 = vadd.f32 0.0, %v1880
        %v1882 = vpop.f32.mrb[0].mxu0
        %v1883 = vpop.f32.mrb[0].mxu0
        %v1884 = vadd.f32 0.0, %v1883
        %v1885 = vpop.f32.mrb[0].mxu0
        %1886 = vmatprep.mubr.bf16.mxu0 0
        %1887 = vmatmul.mubr.bf16.gmra.mrb[0].mxu0 %v1010
        %v1888 = vpop.f32.mrb[0].mxu0
        %v1889 = vadd.f32 0.0, %v1888
        %v1890 = vpop.f32.mrb[0].mxu0
        %v1891 = vpop.f32.mrb[0].mxu0
        %v1892 = vadd.f32 0.0, %v1891
        %v1893 = vpop.f32.mrb[0].mxu0
        %1894 = vmatprep.mubr.bf16.mxu0 0
        %1895 = vmatmul.mubr.bf16.gmra.mrb[0].mxu0 %v1011
        %v1896 = vpop.f32.mrb[0].mxu0
        %v1897 = vadd.f32 0.0, %v1896
        %v1898 = vpop.f32.mrb[0].mxu0
        %v1899 = vpop.f32.mrb[0].mxu0
        %v1900 = vadd.f32 0.0, %v1899
        %v1901 = vpop.f32.mrb[0].mxu0
        %1902 = vmatprep.mubr.bf16.mxu0 0
        %1903 = vmatmul.mubr.bf16.gmra.mrb[0].mxu0 %v1012
        %v1904 = vpop.f32.mrb[0].mxu0
        %v1905 = vadd.f32 0.0, %v1904
        %v1906 = vpop.f32.mrb[0].mxu0
        %v1907 = vpop.f32.mrb[0].mxu0
        %v1908 = vadd.f32 0.0, %v1907
        %v1909 = vpop.f32.mrb[0].mxu0
        %1910 = vmatprep.mubr.bf16.mxu0 0
        %1911 = vmatmul.mubr.bf16.gmra.mrb[0].mxu0 %v1013
        %v1912 = vpop.f32.mrb[0].mxu0
        %v1913 = vadd.f32 0.0, %v1912
        %v1914 = vpop.f32.mrb[0].mxu0
        %v1915 = vpop.f32.mrb[0].mxu0
        %v1916 = vadd.f32 0.0, %v1915
        %v1917 = vpop.f32.mrb[0].mxu0
        %1918 = vmatprep.mubr.bf16.mxu0 0
        %1919 = vmatmul.mubr.bf16.gmra.mrb[0].mxu0 %v1014
        %v1920 = vpop.f32.mrb[0].mxu0
        %v1921 = vadd.f32 0.0, %v1920
        %v1922 = vpop.f32.mrb[0].mxu0
        %v1923 = vpop.f32.mrb[0].mxu0
        %v1924 = vadd.f32 0.0, %v1923
        %v1925 = vpop.f32.mrb[0].mxu0
        %1926 = vmatprep.mubr.bf16.mxu0 0
        %1927 = vmatmul.mubr.bf16.gmra.mrb[0].mxu0 %v1015
        %v1928 = vpop.f32.mrb[0].mxu0
        %v1929 = vadd.f32 0.0, %v1928
        %v1930 = vpop.f32.mrb[0].mxu0
        %v1931 = vpop.f32.mrb[0].mxu0
        %v1932 = vadd.f32 0.0, %v1931
        %v1933 = vpop.f32.mrb[0].mxu0
        %1934 = vmatprep.mubr.bf16.mxu0 0
        %1935 = vmatmul.mubr.bf16.gmra.mrb[0].mxu0 %v1016
        %v1936 = vpop.f32.mrb[0].mxu0
        %v1937 = vadd.f32 0.0, %v1936
        %v1938 = vpop.f32.mrb[0].mxu0
        %v1939 = vpop.f32.mrb[0].mxu0
        %v1940 = vadd.f32 0.0, %v1939
        %v1941 = vpop.f32.mrb[0].mxu0
        %1942 = vmatprep.mubr.bf16.mxu0 0
        %1943 = vmatmul.mubr.bf16.gmra.mrb[0].mxu0 %v1017
        %v1944 = vpop.f32.mrb[0].mxu0
        %v1945 = vadd.f32 0.0, %v1944
        %v1946 = vpop.f32.mrb[0].mxu0
        %v1947 = vpop.f32.mrb[0].mxu0
        %v1948 = vadd.f32 0.0, %v1947
        %v1949 = vpop.f32.mrb[0].mxu0
        %1950 = vmatprep.mubr.bf16.mxu0 0
        %1951 = vmatmul.mubr.bf16.gmra.mrb[0].mxu0 %v1018
        %v1952 = vpop.f32.mrb[0].mxu0
        %v1953 = vadd.f32 0.0, %v1952
        %v1954 = vpop.f32.mrb[0].mxu0
        %v1955 = vpop.f32.mrb[0].mxu0
        %v1956 = vadd.f32 0.0, %v1955
        %v1957 = vpop.f32.mrb[0].mxu0
        %1958 = vmatprep.mubr.bf16.mxu0 0
        %1959 = vmatmul.mubr.bf16.gmra.mrb[0].mxu0 %v1019
        %v1960 = vpop.f32.mrb[0].mxu0
        %v1961 = vadd.f32 0.0, %v1960
        %v1962 = vpop.f32.mrb[0].mxu0
        %v1963 = vpop.f32.mrb[0].mxu0
        %v1964 = vadd.f32 0.0, %v1963
        %v1965 = vpop.f32.mrb[0].mxu0
        %1966 = vdwg.mxu0
        %1967 = vmax.xlane.f32.xlu0 %v1841
        %v1968 = vpop.xlane.xlu0 %1967
        %1969 = vmax.xlane.f32.xlu0 %v1844
        %v1970 = vpop.xlane.xlu0 %1969
        %1971 = vmax.xlane.f32.xlu0 %v1849
        %v1972 = vpop.xlane.xlu0 %1971
        %1973 = vmax.xlane.f32.xlu0 %v1852
        %v1974 = vpop.xlane.xlu0 %1973
        %1975 = vmax.xlane.f32.xlu0 %v1857
        %v1976 = vpop.xlane.xlu0 %1975
        %1977 = vmax.xlane.f32.xlu0 %v1860
        %v1978 = vpop.xlane.xlu0 %1977
        %1979 = vmax.xlane.f32.xlu0 %v1865
        %v1980 = vpop.xlane.xlu0 %1979
        %1981 = vmax.xlane.f32.xlu0 %v1868
        %v1982 = vpop.xlane.xlu0 %1981
        %1983 = vmax.xlane.f32.xlu0 %v1873
        %v1984 = vpop.xlane.xlu0 %1983
        %1985 = vmax.xlane.f32.xlu0 %v1876
        %v1986 = vpop.xlane.xlu0 %1985
        %1987 = vmax.xlane.f32.xlu0 %v1881
        %v1988 = vpop.xlane.xlu0 %1987
        %1989 = vmax.xlane.f32.xlu0 %v1884
        %v1990 = vpop.xlane.xlu0 %1989
        %1991 = vmax.xlane.f32.xlu0 %v1889
        %v1992 = vpop.xlane.xlu0 %1991
        %1993 = vmax.xlane.f32.xlu0 %v1892
        %v1994 = vpop.xlane.xlu0 %1993
        %1995 = vmax.xlane.f32.xlu0 %v1897
        %v1996 = vpop.xlane.xlu0 %1995
        %1997 = vmax.xlane.f32.xlu0 %v1900
        %v1998 = vpop.xlane.xlu0 %1997
        %1999 = vmax.xlane.f32.xlu0 %v1905
        %v2000 = vpop.xlane.xlu0 %1999
        %2001 = vmax.xlane.f32.xlu0 %v1908
        %v2002 = vpop.xlane.xlu0 %2001
        %2003 = vmax.xlane.f32.xlu0 %v1913
        %v2004 = vpop.xlane.xlu0 %2003
        %2005 = vmax.xlane.f32.xlu0 %v1916
        %v2006 = vpop.xlane.xlu0 %2005
        %2007 = vmax.xlane.f32.xlu0 %v1921
        %v2008 = vpop.xlane.xlu0 %2007
        %2009 = vmax.xlane.f32.xlu0 %v1924
        %v2010 = vpop.xlane.xlu0 %2009
        %2011 = vmax.xlane.f32.xlu0 %v1929
        %v2012 = vpop.xlane.xlu0 %2011
        %2013 = vmax.xlane.f32.xlu0 %v1932
        %v2014 = vpop.xlane.xlu0 %2013
        %2015 = vmax.xlane.f32.xlu0 %v1937
        %v2016 = vpop.xlane.xlu0 %2015
        %2017 = vmax.xlane.f32.xlu0 %v1940
        %v2018 = vpop.xlane.xlu0 %2017
        %2019 = vmax.xlane.f32.xlu0 %v1945
        %v2020 = vpop.xlane.xlu0 %2019
        %2021 = vmax.xlane.f32.xlu0 %v1948
        %v2022 = vpop.xlane.xlu0 %2021
        %2023 = vmax.xlane.f32.xlu0 %v1953
        %v2024 = vpop.xlane.xlu0 %2023
        %2025 = vmax.xlane.f32.xlu0 %v1956
        %v2026 = vpop.xlane.xlu0 %2025
        %2027 = vmax.xlane.f32.xlu0 %v1961
        %v2028 = vpop.xlane.xlu0 %2027
        %2029 = vmax.xlane.f32.xlu0 %v1964
        %v2030 = vpop.xlane.xlu0 %2029
        %v2031 = vmax.f32 %v1198, %v1968
        %v2032 = vmax.f32 %v1200, %v1970
        %v2033 = vmax.f32 %v1202, %v1972
        %v2034 = vmax.f32 %v1204, %v1974
        %v2035 = vmax.f32 %v1206, %v1976
        %v2036 = vmax.f32 %v1208, %v1978
        %v2037 = vmax.f32 %v1210, %v1980
        %v2038 = vmax.f32 %v1212, %v1982
        %v2039 = vmax.f32 %v1214, %v1984
        %v2040 = vmax.f32 %v1216, %v1986
        %v2041 = vmax.f32 %v1218, %v1988
        %v2042 = vmax.f32 %v1220, %v1990
        %v2043 = vmax.f32 %v1222, %v1992
        %v2044 = vmax.f32 %v1224, %v1994
        %v2045 = vmax.f32 %v1226, %v1996
        %v2046 = vmax.f32 %v1228, %v1998
        %v2047 = vmax.f32 %v1230, %v2000
        %v2048 = vmax.f32 %v1232, %v2002
        %v2049 = vmax.f32 %v1234, %v2004
        %v2050 = vmax.f32 %v1236, %v2006
        %v2051 = vmax.f32 %v1238, %v2008
        %v2052 = vmax.f32 %v1240, %v2010
        %v2053 = vmax.f32 %v1242, %v2012
        %v2054 = vmax.f32 %v1244, %v2014
        %v2055 = vmax.f32 %v1246, %v2016
        %v2056 = vmax.f32 %v1248, %v2018
        %v2057 = vmax.f32 %v1250, %v2020
        %v2058 = vmax.f32 %v1252, %v2022
        %v2059 = vmax.f32 %v1254, %v2024
        %v2060 = vmax.f32 %v1256, %v2026
        %v2061 = vmax.f32 %v1258, %v2028
        %v2062 = vmax.f32 %v1260, %v2030
        %v2063 = vsub.f32 %v1198, %v2031
        %v2064 = vsub.f32 %v1200, %v2032
        %v2065 = vsub.f32 %v1202, %v2033
        %v2066 = vsub.f32 %v1204, %v2034
        %v2067 = vsub.f32 %v1206, %v2035
        %v2068 = vsub.f32 %v1208, %v2036
        %v2069 = vsub.f32 %v1210, %v2037
        %v2070 = vsub.f32 %v1212, %v2038
        %v2071 = vsub.f32 %v1214, %v2039
        %v2072 = vsub.f32 %v1216, %v2040
        %v2073 = vsub.f32 %v1218, %v2041
        %v2074 = vsub.f32 %v1220, %v2042
        %v2075 = vsub.f32 %v1222, %v2043
        %v2076 = vsub.f32 %v1224, %v2044
        %v2077 = vsub.f32 %v1226, %v2045
        %v2078 = vsub.f32 %v1228, %v2046
        %v2079 = vsub.f32 %v1230, %v2047
        %v2080 = vsub.f32 %v1232, %v2048
        %v2081 = vsub.f32 %v1234, %v2049
        %v2082 = vsub.f32 %v1236, %v2050
        %v2083 = vsub.f32 %v1238, %v2051
        %v2084 = vsub.f32 %v1240, %v2052
        %v2085 = vsub.f32 %v1242, %v2053
        %v2086 = vsub.f32 %v1244, %v2054
        %v2087 = vsub.f32 %v1246, %v2055
        %v2088 = vsub.f32 %v1248, %v2056
        %v2089 = vsub.f32 %v1250, %v2057
        %v2090 = vsub.f32 %v1252, %v2058
        %v2091 = vsub.f32 %v1254, %v2059
        %v2092 = vsub.f32 %v1256, %v2060
        %v2093 = vsub.f32 %v1258, %v2061
        %v2094 = vsub.f32 %v1260, %v2062
        %v2095 = vmul.f32 %v2063, 1.442695
        %v2096 = vpow.pop %v2095
        %v2097 = vmul.f32 %v2064, 1.442695
        %v2098 = vpow.pop %v2097
        %v2099 = vmul.f32 %v2065, 1.442695
        %v2100 = vpow.pop %v2099
        %v2101 = vmul.f32 %v2066, 1.442695
        %v2102 = vpow.pop %v2101
        %v2103 = vmul.f32 %v2067, 1.442695
        %v2104 = vpow.pop %v2103
        %v2105 = vmul.f32 %v2068, 1.442695
        %v2106 = vpow.pop %v2105
        %v2107 = vmul.f32 %v2069, 1.442695
        %v2108 = vpow.pop %v2107
        %v2109 = vmul.f32 %v2070, 1.442695
        %v2110 = vpow.pop %v2109
        %v2111 = vmul.f32 %v2071, 1.442695
        %v2112 = vpow.pop %v2111
        %v2113 = vmul.f32 %v2072, 1.442695
        %v2114 = vpow.pop %v2113
        %v2115 = vmul.f32 %v2073, 1.442695
        %v2116 = vpow.pop %v2115
        %v2117 = vmul.f32 %v2074, 1.442695
        %v2118 = vpow.pop %v2117
        %v2119 = vmul.f32 %v2075, 1.442695
        %v2120 = vpow.pop %v2119
        %v2121 = vmul.f32 %v2076, 1.442695
        %v2122 = vpow.pop %v2121
        %v2123 = vmul.f32 %v2077, 1.442695
        %v2124 = vpow.pop %v2123
        %v2125 = vmul.f32 %v2078, 1.442695
        %v2126 = vpow.pop %v2125
        %v2127 = vmul.f32 %v2079, 1.442695
        %v2128 = vpow.pop %v2127
        %v2129 = vmul.f32 %v2080, 1.442695
        %v2130 = vpow.pop %v2129
        %v2131 = vmul.f32 %v2081, 1.442695
        %v2132 = vpow.pop %v2131
        %v2133 = vmul.f32 %v2082, 1.442695
        %v2134 = vpow.pop %v2133
        %v2135 = vmul.f32 %v2083, 1.442695
        %v2136 = vpow.pop %v2135
        %v2137 = vmul.f32 %v2084, 1.442695
        %v2138 = vpow.pop %v2137
        %v2139 = vmul.f32 %v2085, 1.442695
        %v2140 = vpow.pop %v2139
        %v2141 = vmul.f32 %v2086, 1.442695
        %v2142 = vpow.pop %v2141
        %v2143 = vmul.f32 %v2087, 1.442695
        %v2144 = vpow.pop %v2143
        %v2145 = vmul.f32 %v2088, 1.442695
        %v2146 = vpow.pop %v2145
        %v2147 = vmul.f32 %v2089, 1.442695
        %v2148 = vpow.pop %v2147
        %v2149 = vmul.f32 %v2090, 1.442695
        %v2150 = vpow.pop %v2149
        %v2151 = vmul.f32 %v2091, 1.442695
        %v2152 = vpow.pop %v2151
        %v2153 = vmul.f32 %v2092, 1.442695
        %v2154 = vpow.pop %v2153
        %v2155 = vmul.f32 %v2093, 1.442695
        %v2156 = vpow.pop %v2155
        %v2157 = vmul.f32 %v2094, 1.442695
        %v2158 = vpow.pop %v2157
        %v2159 = vsub.f32 %v1841, %v2031
        %v2160 = vsub.f32 %v1844, %v2032
        %v2161 = vsub.f32 %v1849, %v2033
        %v2162 = vsub.f32 %v1852, %v2034
        %v2163 = vsub.f32 %v1857, %v2035
        %v2164 = vsub.f32 %v1860, %v2036
        %v2165 = vsub.f32 %v1865, %v2037
        %v2166 = vsub.f32 %v1868, %v2038
        %v2167 = vsub.f32 %v1873, %v2039
        %v2168 = vsub.f32 %v1876, %v2040
        %v2169 = vsub.f32 %v1881, %v2041
        %v2170 = vsub.f32 %v1884, %v2042
        %v2171 = vsub.f32 %v1889, %v2043
        %v2172 = vsub.f32 %v1892, %v2044
        %v2173 = vsub.f32 %v1897, %v2045
        %v2174 = vsub.f32 %v1900, %v2046
        %v2175 = vsub.f32 %v1905, %v2047
        %v2176 = vsub.f32 %v1908, %v2048
        %v2177 = vsub.f32 %v1913, %v2049
        %v2178 = vsub.f32 %v1916, %v2050
        %v2179 = vsub.f32 %v1921, %v2051
        %v2180 = vsub.f32 %v1924, %v2052
        %v2181 = vsub.f32 %v1929, %v2053
        %v2182 = vsub.f32 %v1932, %v2054
        %v2183 = vsub.f32 %v1937, %v2055
        %v2184 = vsub.f32 %v1940, %v2056
        %v2185 = vsub.f32 %v1945, %v2057
        %v2186 = vsub.f32 %v1948, %v2058
        %v2187 = vsub.f32 %v1953, %v2059
        %v2188 = vsub.f32 %v1956, %v2060
        %v2189 = vsub.f32 %v1961, %v2061
        %v2190 = vsub.f32 %v1964, %v2062
        %v2191 = vmul.f32 %v2159, 1.442695
        %v2192 = vpow.pop %v2191
        %v2193 = vmul.f32 %v2160, 1.442695
        %v2194 = vpow.pop %v2193
        %v2195 = vmul.f32 %v2161, 1.442695
        %v2196 = vpow.pop %v2195
        %v2197 = vmul.f32 %v2162, 1.442695
        %v2198 = vpow.pop %v2197
        %v2199 = vmul.f32 %v2163, 1.442695
        %v2200 = vpow.pop %v2199
        %v2201 = vmul.f32 %v2164, 1.442695
        %v2202 = vpow.pop %v2201
        %v2203 = vmul.f32 %v2165, 1.442695
        %v2204 = vpow.pop %v2203
        %v2205 = vmul.f32 %v2166, 1.442695
        %v2206 = vpow.pop %v2205
        %v2207 = vmul.f32 %v2167, 1.442695
        %v2208 = vpow.pop %v2207
        %v2209 = vmul.f32 %v2168, 1.442695
        %v2210 = vpow.pop %v2209
        %v2211 = vmul.f32 %v2169, 1.442695
        %v2212 = vpow.pop %v2211
        %v2213 = vmul.f32 %v2170, 1.442695
        %v2214 = vpow.pop %v2213
        %v2215 = vmul.f32 %v2171, 1.442695
        %v2216 = vpow.pop %v2215
        %v2217 = vmul.f32 %v2172, 1.442695
        %v2218 = vpow.pop %v2217
        %v2219 = vmul.f32 %v2173, 1.442695
        %v2220 = vpow.pop %v2219
        %v2221 = vmul.f32 %v2174, 1.442695
        %v2222 = vpow.pop %v2221
        %v2223 = vmul.f32 %v2175, 1.442695
        %v2224 = vpow.pop %v2223
        %v2225 = vmul.f32 %v2176, 1.442695
        %v2226 = vpow.pop %v2225
        %v2227 = vmul.f32 %v2177, 1.442695
        %v2228 = vpow.pop %v2227
        %v2229 = vmul.f32 %v2178, 1.442695
        %v2230 = vpow.pop %v2229
        %v2231 = vmul.f32 %v2179, 1.442695
        %v2232 = vpow.pop %v2231
        %v2233 = vmul.f32 %v2180, 1.442695
        %v2234 = vpow.pop %v2233
        %v2235 = vmul.f32 %v2181, 1.442695
        %v2236 = vpow.pop %v2235
        %v2237 = vmul.f32 %v2182, 1.442695
        %v2238 = vpow.pop %v2237
        %v2239 = vmul.f32 %v2183, 1.442695
        %v2240 = vpow.pop %v2239
        %v2241 = vmul.f32 %v2184, 1.442695
        %v2242 = vpow.pop %v2241
        %v2243 = vmul.f32 %v2185, 1.442695
        %v2244 = vpow.pop %v2243
        %v2245 = vmul.f32 %v2186, 1.442695
        %v2246 = vpow.pop %v2245
        %v2247 = vmul.f32 %v2187, 1.442695
        %v2248 = vpow.pop %v2247
        %v2249 = vmul.f32 %v2188, 1.442695
        %v2250 = vpow.pop %v2249
        %v2251 = vmul.f32 %v2189, 1.442695
        %v2252 = vpow.pop %v2251
        %v2253 = vmul.f32 %v2190, 1.442695
        %v2254 = vpow.pop %v2253
        %v2255 = vmul.f32 %v2096, %v1549
        %v2256 = vmul.f32 %v2098, %v1550
        %v2257 = vmul.f32 %v2100, %v1551
        %v2258 = vmul.f32 %v2102, %v1552
        %v2259 = vmul.f32 %v2104, %v1553
        %v2260 = vmul.f32 %v2106, %v1554
        %v2261 = vmul.f32 %v2108, %v1555
        %v2262 = vmul.f32 %v2110, %v1556
        %v2263 = vmul.f32 %v2112, %v1557
        %v2264 = vmul.f32 %v2114, %v1558
        %v2265 = vmul.f32 %v2116, %v1559
        %v2266 = vmul.f32 %v2118, %v1560
        %v2267 = vmul.f32 %v2120, %v1561
        %v2268 = vmul.f32 %v2122, %v1562
        %v2269 = vmul.f32 %v2124, %v1563
        %v2270 = vmul.f32 %v2126, %v1564
        %v2271 = vmul.f32 %v2128, %v1565
        %v2272 = vmul.f32 %v2130, %v1566
        %v2273 = vmul.f32 %v2132, %v1567
        %v2274 = vmul.f32 %v2134, %v1568
        %v2275 = vmul.f32 %v2136, %v1569
        %v2276 = vmul.f32 %v2138, %v1570
        %v2277 = vmul.f32 %v2140, %v1571
        %v2278 = vmul.f32 %v2142, %v1572
        %v2279 = vmul.f32 %v2144, %v1573
        %v2280 = vmul.f32 %v2146, %v1574
        %v2281 = vmul.f32 %v2148, %v1575
        %v2282 = vmul.f32 %v2150, %v1576
        %v2283 = vmul.f32 %v2152, %v1577
        %v2284 = vmul.f32 %v2154, %v1578
        %v2285 = vmul.f32 %v2156, %v1579
        %v2286 = vmul.f32 %v2158, %v1580
        %2287 = vadd.xlane.f32.xlu0 %v2192
        %v2288 = vpop.xlane.xlu0 %2287
        %2289 = vadd.xlane.f32.xlu0 %v2194
        %v2290 = vpop.xlane.xlu0 %2289
        %2291 = vadd.xlane.f32.xlu0 %v2196
        %v2292 = vpop.xlane.xlu0 %2291
        %2293 = vadd.xlane.f32.xlu0 %v2198
        %v2294 = vpop.xlane.xlu0 %2293
        %2295 = vadd.xlane.f32.xlu0 %v2200
        %v2296 = vpop.xlane.xlu0 %2295
        %2297 = vadd.xlane.f32.xlu0 %v2202
        %v2298 = vpop.xlane.xlu0 %2297
        %2299 = vadd.xlane.f32.xlu0 %v2204
        %v2300 = vpop.xlane.xlu0 %2299
        %2301 = vadd.xlane.f32.xlu0 %v2206
        %v2302 = vpop.xlane.xlu0 %2301
        %2303 = vadd.xlane.f32.xlu0 %v2208
        %v2304 = vpop.xlane.xlu0 %2303
        %2305 = vadd.xlane.f32.xlu0 %v2210
        %v2306 = vpop.xlane.xlu0 %2305
        %2307 = vadd.xlane.f32.xlu0 %v2212
        %v2308 = vpop.xlane.xlu0 %2307
        %2309 = vadd.xlane.f32.xlu0 %v2214
        %v2310 = vpop.xlane.xlu0 %2309
        %2311 = vadd.xlane.f32.xlu0 %v2216
        %v2312 = vpop.xlane.xlu0 %2311
        %2313 = vadd.xlane.f32.xlu0 %v2218
        %v2314 = vpop.xlane.xlu0 %2313
        %2315 = vadd.xlane.f32.xlu0 %v2220
        %v2316 = vpop.xlane.xlu0 %2315
        %2317 = vadd.xlane.f32.xlu0 %v2222
        %v2318 = vpop.xlane.xlu0 %2317
        %2319 = vadd.xlane.f32.xlu0 %v2224
        %v2320 = vpop.xlane.xlu0 %2319
        %2321 = vadd.xlane.f32.xlu0 %v2226
        %v2322 = vpop.xlane.xlu0 %2321
        %2323 = vadd.xlane.f32.xlu0 %v2228
        %v2324 = vpop.xlane.xlu0 %2323
        %2325 = vadd.xlane.f32.xlu0 %v2230
        %v2326 = vpop.xlane.xlu0 %2325
        %2327 = vadd.xlane.f32.xlu0 %v2232
        %v2328 = vpop.xlane.xlu0 %2327
        %2329 = vadd.xlane.f32.xlu0 %v2234
        %v2330 = vpop.xlane.xlu0 %2329
        %2331 = vadd.xlane.f32.xlu0 %v2236
        %v2332 = vpop.xlane.xlu0 %2331
        %2333 = vadd.xlane.f32.xlu0 %v2238
        %v2334 = vpop.xlane.xlu0 %2333
        %2335 = vadd.xlane.f32.xlu0 %v2240
        %v2336 = vpop.xlane.xlu0 %2335
        %2337 = vadd.xlane.f32.xlu0 %v2242
        %v2338 = vpop.xlane.xlu0 %2337
        %2339 = vadd.xlane.f32.xlu0 %v2244
        %v2340 = vpop.xlane.xlu0 %2339
        %2341 = vadd.xlane.f32.xlu0 %v2246
        %v2342 = vpop.xlane.xlu0 %2341
        %2343 = vadd.xlane.f32.xlu0 %v2248
        %v2344 = vpop.xlane.xlu0 %2343
        %2345 = vadd.xlane.f32.xlu0 %v2250
        %v2346 = vpop.xlane.xlu0 %2345
        %2347 = vadd.xlane.f32.xlu0 %v2252
        %v2348 = vpop.xlane.xlu0 %2347
        %2349 = vadd.xlane.f32.xlu0 %v2254
        %v2350 = vpop.xlane.xlu0 %2349
        %v2351 = vadd.f32 %v2255, %v2288
        %v2352 = vadd.f32 %v2256, %v2290
        %v2353 = vadd.f32 %v2257, %v2292
        %v2354 = vadd.f32 %v2258, %v2294
        %v2355 = vadd.f32 %v2259, %v2296
        %v2356 = vadd.f32 %v2260, %v2298
        %v2357 = vadd.f32 %v2261, %v2300
        %v2358 = vadd.f32 %v2262, %v2302
        %v2359 = vadd.f32 %v2263, %v2304
        %v2360 = vadd.f32 %v2264, %v2306
        %v2361 = vadd.f32 %v2265, %v2308
        %v2362 = vadd.f32 %v2266, %v2310
        %v2363 = vadd.f32 %v2267, %v2312
        %v2364 = vadd.f32 %v2268, %v2314
        %v2365 = vadd.f32 %v2269, %v2316
        %v2366 = vadd.f32 %v2270, %v2318
        %v2367 = vadd.f32 %v2271, %v2320
        %v2368 = vadd.f32 %v2272, %v2322
        %v2369 = vadd.f32 %v2273, %v2324
        %v2370 = vadd.f32 %v2274, %v2326
        %v2371 = vadd.f32 %v2275, %v2328
        %v2372 = vadd.f32 %v2276, %v2330
        %v2373 = vadd.f32 %v2277, %v2332
        %v2374 = vadd.f32 %v2278, %v2334
        %v2375 = vadd.f32 %v2279, %v2336
        %v2376 = vadd.f32 %v2280, %v2338
        %v2377 = vadd.f32 %v2281, %v2340
        %v2378 = vadd.f32 %v2282, %v2342
        %v2379 = vadd.f32 %v2283, %v2344
        %v2380 = vadd.f32 %v2284, %v2346
        %v2381 = vadd.f32 %v2285, %v2348
        %v2382 = vadd.f32 %v2286, %v2350
        %v2383 = vmul.f32 %v2096, %v1758
        %v2384 = vmul.f32 %v2098, %v1759
        %v2385 = vmul.f32 %v2100, %v1760
        %v2386 = vmul.f32 %v2102, %v1761
        %v2387 = vmul.f32 %v2104, %v1762
        %v2388 = vmul.f32 %v2106, %v1763
        %v2389 = vmul.f32 %v2108, %v1764
        %v2390 = vmul.f32 %v2110, %v1765
        %v2391 = vmul.f32 %v2112, %v1766
        %v2392 = vmul.f32 %v2114, %v1767
        %v2393 = vmul.f32 %v2116, %v1768
        %v2394 = vmul.f32 %v2118, %v1769
        %v2395 = vmul.f32 %v2120, %v1770
        %v2396 = vmul.f32 %v2122, %v1771
        %v2397 = vmul.f32 %v2124, %v1772
        %v2398 = vmul.f32 %v2126, %v1773
        %v2399 = vmul.f32 %v2128, %v1774
        %v2400 = vmul.f32 %v2130, %v1775
        %v2401 = vmul.f32 %v2132, %v1776
        %v2402 = vmul.f32 %v2134, %v1777
        %v2403 = vmul.f32 %v2136, %v1778
        %v2404 = vmul.f32 %v2138, %v1779
        %v2405 = vmul.f32 %v2140, %v1780
        %v2406 = vmul.f32 %v2142, %v1781
        %v2407 = vmul.f32 %v2144, %v1782
        %v2408 = vmul.f32 %v2146, %v1783
        %v2409 = vmul.f32 %v2148, %v1784
        %v2410 = vmul.f32 %v2150, %v1785
        %v2411 = vmul.f32 %v2152, %v1786
        %v2412 = vmul.f32 %v2154, %v1787
        %v2413 = vmul.f32 %v2156, %v1788
        %v2414 = vmul.f32 %v2158, %v1789
        %v2415 = vpack.c.bf16 %v2194, %v2192
        %v2416 = vpack.c.bf16 %v2198, %v2196
        %v2417 = vpack.c.bf16 %v2202, %v2200
        %v2418 = vpack.c.bf16 %v2206, %v2204
        %v2419 = vpack.c.bf16 %v2210, %v2208
        %v2420 = vpack.c.bf16 %v2214, %v2212
        %v2421 = vpack.c.bf16 %v2218, %v2216
        %v2422 = vpack.c.bf16 %v2222, %v2220
        %v2423 = vpack.c.bf16 %v2226, %v2224
        %v2424 = vpack.c.bf16 %v2230, %v2228
        %v2425 = vpack.c.bf16 %v2234, %v2232
        %v2426 = vpack.c.bf16 %v2238, %v2236
        %v2427 = vpack.c.bf16 %v2242, %v2240
        %v2428 = vpack.c.bf16 %v2246, %v2244
        %v2429 = vpack.c.bf16 %v2250, %v2248
        %v2430 = vpack.c.bf16 %v2254, %v2252
        %2431 = vmatprep.subr.bf16.mxu0 0
        %2432 = vmatpush1.bf16.msra.mxu0 %v1798
        %2433 = vmatprep.subr.bf16.mxu0 0
        %2434 = vmatpush1.bf16.msra.mxu0 %v1799
        %2435 = vmatprep.subr.bf16.mxu0 0
        %2436 = vmatpush1.bf16.msra.mxu0 %v1800
        %2437 = vmatprep.subr.bf16.mxu0 0
        %2438 = vmatpush1.bf16.msra.mxu0 %v1801
        %2439 = vmatprep.subr.bf16.mxu0 0
        %2440 = vmatpush1.bf16.msra.mxu0 %v1802
        %2441 = vmatprep.subr.bf16.mxu0 0
        %2442 = vmatpush1.bf16.msra.mxu0 %v1803
        %2443 = vmatprep.subr.bf16.mxu0 0
        %2444 = vmatpush1.bf16.msra.mxu0 %v1804
        %2445 = vmatprep.subr.bf16.mxu0 0
        %2446 = vmatpush1.bf16.msra.mxu0 %v1805
        %2447 = vmatprep.subr.bf16.mxu0 0
        %2448 = vmatpush1.bf16.msra.mxu0 0
        %2449 = vmatprep.subr.bf16.mxu0 0
        %2450 = vmatpush1.bf16.msra.mxu0 0
        %2451 = vmatprep.subr.bf16.mxu0 0
        %2452 = vmatpush1.bf16.msra.mxu0 0
        %2453 = vmatprep.subr.bf16.mxu0 0
        %2454 = vmatpush1.bf16.msra.mxu0 0
        %2455 = vmatprep.subr.bf16.mxu0 0
        %2456 = vmatpush1.bf16.msra.mxu0 0
        %2457 = vmatprep.subr.bf16.mxu0 0
        %2458 = vmatpush1.bf16.msra.mxu0 0
        %2459 = vmatprep.subr.bf16.mxu0 0
        %2460 = vmatpush1.bf16.msra.mxu0 0
        %2461 = vmatprep.subr.bf16.mxu0 0
        %2462 = vmatpush1.bf16.msra.mxu0 0
        %2463 = vmatprep.mubr.bf16.mxu0 0
        %2464 = vmatmul.mubr.bf16.gmra.mrb[0].mxu0 %v2415
        %v2465 = vpop.f32.mrb[0].mxu0
        %v2466 = vadd.f32 0.0, %v2465
        %v2467 = vpop.f32.mrb[0].mxu0
        %v2468 = vpop.f32.mrb[0].mxu0
        %v2469 = vadd.f32 0.0, %v2468
        %v2470 = vpop.f32.mrb[0].mxu0
        %2471 = vmatprep.mubr.bf16.mxu0 0
        %2472 = vmatmul.mubr.bf16.gmra.mrb[0].mxu0 %v2416
        %v2473 = vpop.f32.mrb[0].mxu0
        %v2474 = vadd.f32 0.0, %v2473
        %v2475 = vpop.f32.mrb[0].mxu0
        %v2476 = vpop.f32.mrb[0].mxu0
        %v2477 = vadd.f32 0.0, %v2476
        %v2478 = vpop.f32.mrb[0].mxu0
        %2479 = vmatprep.mubr.bf16.mxu0 0
        %2480 = vmatmul.mubr.bf16.gmra.mrb[0].mxu0 %v2417
        %v2481 = vpop.f32.mrb[0].mxu0
        %v2482 = vadd.f32 0.0, %v2481
        %v2483 = vpop.f32.mrb[0].mxu0
        %v2484 = vpop.f32.mrb[0].mxu0
        %v2485 = vadd.f32 0.0, %v2484
        %v2486 = vpop.f32.mrb[0].mxu0
        %2487 = vmatprep.mubr.bf16.mxu0 0
        %2488 = vmatmul.mubr.bf16.gmra.mrb[0].mxu0 %v2418
        %v2489 = vpop.f32.mrb[0].mxu0
        %v2490 = vadd.f32 0.0, %v2489
        %v2491 = vpop.f32.mrb[0].mxu0
        %v2492 = vpop.f32.mrb[0].mxu0
        %v2493 = vadd.f32 0.0, %v2492
        %v2494 = vpop.f32.mrb[0].mxu0
        %2495 = vmatprep.mubr.bf16.mxu0 0
        %2496 = vmatmul.mubr.bf16.gmra.mrb[0].mxu0 %v2419
        %v2497 = vpop.f32.mrb[0].mxu0
        %v2498 = vadd.f32 0.0, %v2497
        %v2499 = vpop.f32.mrb[0].mxu0
        %v2500 = vpop.f32.mrb[0].mxu0
        %v2501 = vadd.f32 0.0, %v2500
        %v2502 = vpop.f32.mrb[0].mxu0
        %2503 = vmatprep.mubr.bf16.mxu0 0
        %2504 = vmatmul.mubr.bf16.gmra.mrb[0].mxu0 %v2420
        %v2505 = vpop.f32.mrb[0].mxu0
        %v2506 = vadd.f32 0.0, %v2505
        %v2507 = vpop.f32.mrb[0].mxu0
        %v2508 = vpop.f32.mrb[0].mxu0
        %v2509 = vadd.f32 0.0, %v2508
        %v2510 = vpop.f32.mrb[0].mxu0
        %2511 = vmatprep.mubr.bf16.mxu0 0
        %2512 = vmatmul.mubr.bf16.gmra.mrb[0].mxu0 %v2421
        %v2513 = vpop.f32.mrb[0].mxu0
        %v2514 = vadd.f32 0.0, %v2513
        %v2515 = vpop.f32.mrb[0].mxu0
        %v2516 = vpop.f32.mrb[0].mxu0
        %v2517 = vadd.f32 0.0, %v2516
        %v2518 = vpop.f32.mrb[0].mxu0
        %2519 = vmatprep.mubr.bf16.mxu0 0
        %2520 = vmatmul.mubr.bf16.gmra.mrb[0].mxu0 %v2422
        %v2521 = vpop.f32.mrb[0].mxu0
        %v2522 = vadd.f32 0.0, %v2521
        %v2523 = vpop.f32.mrb[0].mxu0
        %v2524 = vpop.f32.mrb[0].mxu0
        %v2525 = vadd.f32 0.0, %v2524
        %v2526 = vpop.f32.mrb[0].mxu0
        %2527 = vmatprep.mubr.bf16.mxu0 0
        %2528 = vmatmul.mubr.bf16.gmra.mrb[0].mxu0 %v2423
        %v2529 = vpop.f32.mrb[0].mxu0
        %v2530 = vadd.f32 0.0, %v2529
        %v2531 = vpop.f32.mrb[0].mxu0
        %v2532 = vpop.f32.mrb[0].mxu0
        %v2533 = vadd.f32 0.0, %v2532
        %v2534 = vpop.f32.mrb[0].mxu0
        %2535 = vmatprep.mubr.bf16.mxu0 0
        %2536 = vmatmul.mubr.bf16.gmra.mrb[0].mxu0 %v2424
        %v2537 = vpop.f32.mrb[0].mxu0
        %v2538 = vadd.f32 0.0, %v2537
        %v2539 = vpop.f32.mrb[0].mxu0
        %v2540 = vpop.f32.mrb[0].mxu0
        %v2541 = vadd.f32 0.0, %v2540
        %v2542 = vpop.f32.mrb[0].mxu0
        %2543 = vmatprep.mubr.bf16.mxu0 0
        %2544 = vmatmul.mubr.bf16.gmra.mrb[0].mxu0 %v2425
        %v2545 = vpop.f32.mrb[0].mxu0
        %v2546 = vadd.f32 0.0, %v2545
        %v2547 = vpop.f32.mrb[0].mxu0
        %v2548 = vpop.f32.mrb[0].mxu0
        %v2549 = vadd.f32 0.0, %v2548
        %v2550 = vpop.f32.mrb[0].mxu0
        %2551 = vmatprep.mubr.bf16.mxu0 0
        %2552 = vmatmul.mubr.bf16.gmra.mrb[0].mxu0 %v2426
        %v2553 = vpop.f32.mrb[0].mxu0
        %v2554 = vadd.f32 0.0, %v2553
        %v2555 = vpop.f32.mrb[0].mxu0
        %v2556 = vpop.f32.mrb[0].mxu0
        %v2557 = vadd.f32 0.0, %v2556
        %v2558 = vpop.f32.mrb[0].mxu0
        %2559 = vmatprep.mubr.bf16.mxu0 0
        %2560 = vmatmul.mubr.bf16.gmra.mrb[0].mxu0 %v2427
        %v2561 = vpop.f32.mrb[0].mxu0
        %v2562 = vadd.f32 0.0, %v2561
        %v2563 = vpop.f32.mrb[0].mxu0
        %v2564 = vpop.f32.mrb[0].mxu0
        %v2565 = vadd.f32 0.0, %v2564
        %v2566 = vpop.f32.mrb[0].mxu0
        %2567 = vmatprep.mubr.bf16.mxu0 0
        %2568 = vmatmul.mubr.bf16.gmra.mrb[0].mxu0 %v2428
        %v2569 = vpop.f32.mrb[0].mxu0
        %v2570 = vadd.f32 0.0, %v2569
        %v2571 = vpop.f32.mrb[0].mxu0
        %v2572 = vpop.f32.mrb[0].mxu0
        %v2573 = vadd.f32 0.0, %v2572
        %v2574 = vpop.f32.mrb[0].mxu0
        %2575 = vmatprep.mubr.bf16.mxu0 0
        %2576 = vmatmul.mubr.bf16.gmra.mrb[0].mxu0 %v2429
        %v2577 = vpop.f32.mrb[0].mxu0
        %v2578 = vadd.f32 0.0, %v2577
        %v2579 = vpop.f32.mrb[0].mxu0
        %v2580 = vpop.f32.mrb[0].mxu0
        %v2581 = vadd.f32 0.0, %v2580
        %v2582 = vpop.f32.mrb[0].mxu0
        %2583 = vmatprep.mubr.bf16.mxu0 0
        %2584 = vmatmul.mubr.bf16.gmra.mrb[0].mxu0 %v2430
        %v2585 = vpop.f32.mrb[0].mxu0
        %v2586 = vadd.f32 0.0, %v2585
        %v2587 = vpop.f32.mrb[0].mxu0
        %v2588 = vpop.f32.mrb[0].mxu0
        %v2589 = vadd.f32 0.0, %v2588
        %v2590 = vpop.f32.mrb[0].mxu0
        %2591 = vdwg.mxu0
        %v2592 = vadd.f32 %v2383, %v2466
        %v2593 = vadd.f32 %v2384, %v2469
        %v2594 = vadd.f32 %v2385, %v2474
        %v2595 = vadd.f32 %v2386, %v2477
        %v2596 = vadd.f32 %v2387, %v2482
        %v2597 = vadd.f32 %v2388, %v2485
        %v2598 = vadd.f32 %v2389, %v2490
        %v2599 = vadd.f32 %v2390, %v2493
        %v2600 = vadd.f32 %v2391, %v2498
        %v2601 = vadd.f32 %v2392, %v2501
        %v2602 = vadd.f32 %v2393, %v2506
        %v2603 = vadd.f32 %v2394, %v2509
        %v2604 = vadd.f32 %v2395, %v2514
        %v2605 = vadd.f32 %v2396, %v2517
        %v2606 = vadd.f32 %v2397, %v2522
        %v2607 = vadd.f32 %v2398, %v2525
        %v2608 = vadd.f32 %v2399, %v2530
        %v2609 = vadd.f32 %v2400, %v2533
        %v2610 = vadd.f32 %v2401, %v2538
        %v2611 = vadd.f32 %v2402, %v2541
        %v2612 = vadd.f32 %v2403, %v2546
        %v2613 = vadd.f32 %v2404, %v2549
        %v2614 = vadd.f32 %v2405, %v2554
        %v2615 = vadd.f32 %v2406, %v2557
        %v2616 = vadd.f32 %v2407, %v2562
        %v2617 = vadd.f32 %v2408, %v2565
        %v2618 = vadd.f32 %v2409, %v2570
        %v2619 = vadd.f32 %v2410, %v2573
        %v2620 = vadd.f32 %v2411, %v2578
        %v2621 = vadd.f32 %v2412, %v2581
        %v2622 = vadd.f32 %v2413, %v2586
        %v2623 = vadd.f32 %v2414, %v2589
        %v2624 = vrcp.pop %v2351
        %v2625 = vrcp.pop %v2352
        %v2626 = vrcp.pop %v2353
        %v2627 = vrcp.pop %v2354
        %v2628 = vrcp.pop %v2355
        %v2629 = vrcp.pop %v2356
        %v2630 = vrcp.pop %v2357
        %v2631 = vrcp.pop %v2358
        %v2632 = vrcp.pop %v2359
        %v2633 = vrcp.pop %v2360
        %v2634 = vrcp.pop %v2361
        %v2635 = vrcp.pop %v2362
        %v2636 = vrcp.pop %v2363
        %v2637 = vrcp.pop %v2364
        %v2638 = vrcp.pop %v2365
        %v2639 = vrcp.pop %v2366
        %v2640 = vrcp.pop %v2367
        %v2641 = vrcp.pop %v2368
        %v2642 = vrcp.pop %v2369
        %v2643 = vrcp.pop %v2370
        %v2644 = vrcp.pop %v2371
        %v2645 = vrcp.pop %v2372
        %v2646 = vrcp.pop %v2373
        %v2647 = vrcp.pop %v2374
        %v2648 = vrcp.pop %v2375
        %v2649 = vrcp.pop %v2376
        %v2650 = vrcp.pop %v2377
        %v2651 = vrcp.pop %v2378
        %v2652 = vrcp.pop %v2379
        %v2653 = vrcp.pop %v2380
        %v2654 = vrcp.pop %v2381
        %v2655 = vrcp.pop %v2382
        %v2656 = vmul.f32 %v2592, %v2624
        %v2657 = vmul.f32 %v2593, %v2625
        %v2658 = vmul.f32 %v2594, %v2626
        %v2659 = vmul.f32 %v2595, %v2627
        %v2660 = vmul.f32 %v2596, %v2628
        %v2661 = vmul.f32 %v2597, %v2629
        %v2662 = vmul.f32 %v2598, %v2630
        %v2663 = vmul.f32 %v2599, %v2631
        %v2664 = vmul.f32 %v2600, %v2632
        %v2665 = vmul.f32 %v2601, %v2633
        %v2666 = vmul.f32 %v2602, %v2634
        %v2667 = vmul.f32 %v2603, %v2635
        %v2668 = vmul.f32 %v2604, %v2636
        %v2669 = vmul.f32 %v2605, %v2637
        %v2670 = vmul.f32 %v2606, %v2638
        %v2671 = vmul.f32 %v2607, %v2639
        %v2672 = vmul.f32 %v2608, %v2640
        %v2673 = vmul.f32 %v2609, %v2641
        %v2674 = vmul.f32 %v2610, %v2642
        %v2675 = vmul.f32 %v2611, %v2643
        %v2676 = vmul.f32 %v2612, %v2644
        %v2677 = vmul.f32 %v2613, %v2645
        %v2678 = vmul.f32 %v2614, %v2646
        %v2679 = vmul.f32 %v2615, %v2647
        %v2680 = vmul.f32 %v2616, %v2648
        %v2681 = vmul.f32 %v2617, %v2649
        %v2682 = vmul.f32 %v2618, %v2650
        %v2683 = vmul.f32 %v2619, %v2651
        %v2684 = vmul.f32 %v2620, %v2652
        %v2685 = vmul.f32 %v2621, %v2653
        %v2686 = vmul.f32 %v2622, %v2654
        %v2687 = vmul.f32 %v2623, %v2655
        %s2688 = sld [smem:[#allocation2]]
        %v2689 = vstv %s2688
        %v2690 = vmul.f32 %v2689, %v2656
        %v2691 = vmul.f32 %v2689, %v2657
        %v2692 = vmul.f32 %v2689, %v2658
        %v2693 = vmul.f32 %v2689, %v2659
        %v2694 = vmul.f32 %v2689, %v2660
        %v2695 = vmul.f32 %v2689, %v2661
        %v2696 = vmul.f32 %v2689, %v2662
        %v2697 = vmul.f32 %v2689, %v2663
        %v2698 = vmul.f32 %v2689, %v2664
        %v2699 = vmul.f32 %v2689, %v2665
        %v2700 = vmul.f32 %v2689, %v2666
        %v2701 = vmul.f32 %v2689, %v2667
        %v2702 = vmul.f32 %v2689, %v2668
        %v2703 = vmul.f32 %v2689, %v2669
        %v2704 = vmul.f32 %v2689, %v2670
        %v2705 = vmul.f32 %v2689, %v2671
        %v2706 = vmul.f32 %v2689, %v2672
        %v2707 = vmul.f32 %v2689, %v2673
        %v2708 = vmul.f32 %v2689, %v2674
        %v2709 = vmul.f32 %v2689, %v2675
        %v2710 = vmul.f32 %v2689, %v2676
        %v2711 = vmul.f32 %v2689, %v2677
        %v2712 = vmul.f32 %v2689, %v2678
        %v2713 = vmul.f32 %v2689, %v2679
        %v2714 = vmul.f32 %v2689, %v2680
        %v2715 = vmul.f32 %v2689, %v2681
        %v2716 = vmul.f32 %v2689, %v2682
        %v2717 = vmul.f32 %v2689, %v2683
        %v2718 = vmul.f32 %v2689, %v2684
        %v2719 = vmul.f32 %v2689, %v2685
        %v2720 = vmul.f32 %v2689, %v2686
        %v2721 = vmul.f32 %v2689, %v2687
        %v2722 = vadd.f32 %v2690, %v425
        %v2723 = vadd.f32 %v2691, %v426
        %v2724 = vadd.f32 %v2692, %v427
        %v2725 = vadd.f32 %v2693, %v428
        %v2726 = vadd.f32 %v2694, %v429
        %v2727 = vadd.f32 %v2695, %v430
        %v2728 = vadd.f32 %v2696, %v431
        %v2729 = vadd.f32 %v2697, %v432
        %v2730 = vadd.f32 %v2698, %v433
        %v2731 = vadd.f32 %v2699, %v434
        %v2732 = vadd.f32 %v2700, %v435
        %v2733 = vadd.f32 %v2701, %v436
        %v2734 = vadd.f32 %v2702, %v437
        %v2735 = vadd.f32 %v2703, %v438
        %v2736 = vadd.f32 %v2704, %v439
        %v2737 = vadd.f32 %v2705, %v440
        %v2738 = vadd.f32 %v2706, %v441
        %v2739 = vadd.f32 %v2707, %v442
        %v2740 = vadd.f32 %v2708, %v443
        %v2741 = vadd.f32 %v2709, %v444
        %v2742 = vadd.f32 %v2710, %v445
        %v2743 = vadd.f32 %v2711, %v446
        %v2744 = vadd.f32 %v2712, %v447
        %v2745 = vadd.f32 %v2713, %v448
        %v2746 = vadd.f32 %v2714, %v449
        %v2747 = vadd.f32 %v2715, %v450
        %v2748 = vadd.f32 %v2716, %v451
        %v2749 = vadd.f32 %v2717, %v452
        %v2750 = vadd.f32 %v2718, %v453
        %v2751 = vadd.f32 %v2719, %v454
        %v2752 = vadd.f32 %v2720, %v455
        %v2753 = vadd.f32 %v2721, %v456
        %v2754 = vld [vmem:[%s423] sm:$0xff]
        %v2755 = vld [vmem:[%s423 + $0x8] sm:$0xff]
        %v2756 = vld [vmem:[%s423 + $0x10] sm:$0xff]
        %v2757 = vld [vmem:[%s423 + $0x18] sm:$0xff]
        %v2758 = vld [vmem:[%s423 + $0x20] sm:$0xff]
        %v2759 = vld [vmem:[%s423 + $0x28] sm:$0xff]
        %v2760 = vld [vmem:[%s423 + $0x30] sm:$0xff]
        %v2761 = vld [vmem:[%s423 + $0x38] sm:$0xff]
        %v2762 = vld [vmem:[%s423 + $0x40] sm:$0xff]
        %v2763 = vld [vmem:[%s423 + $0x48] sm:$0xff]
        %v2764 = vld [vmem:[%s423 + $0x50] sm:$0xff]
        %v2765 = vld [vmem:[%s423 + $0x58] sm:$0xff]
        %v2766 = vld [vmem:[%s423 + $0x60] sm:$0xff]
        %v2767 = vld [vmem:[%s423 + $0x68] sm:$0xff]
        %v2768 = vld [vmem:[%s423 + $0x70] sm:$0xff]
        %v2769 = vld [vmem:[%s423 + $0x78] sm:$0xff]
        %v2770 = vld [vmem:[%s423 + $0x80] sm:$0xff]
        %v2771 = vld [vmem:[%s423 + $0x88] sm:$0xff]
        %v2772 = vld [vmem:[%s423 + $0x90] sm:$0xff]
        %v2773 = vld [vmem:[%s423 + $0x98] sm:$0xff]
        %v2774 = vld [vmem:[%s423 + $0xa0] sm:$0xff]
        %v2775 = vld [vmem:[%s423 + $0xa8] sm:$0xff]
        %v2776 = vld [vmem:[%s423 + $0xb0] sm:$0xff]
        %v2777 = vld [vmem:[%s423 + $0xb8] sm:$0xff]
        %v2778 = vld [vmem:[%s423 + $0xc0] sm:$0xff]
        %v2779 = vld [vmem:[%s423 + $0xc8] sm:$0xff]
        %v2780 = vld [vmem:[%s423 + $0xd0] sm:$0xff]
        %v2781 = vld [vmem:[%s423 + $0xd8] sm:$0xff]
        %v2782 = vld [vmem:[%s423 + $0xe0] sm:$0xff]
        %v2783 = vld [vmem:[%s423 + $0xe8] sm:$0xff]
        %v2784 = vld [vmem:[%s423 + $0xf0] sm:$0xff]
        %v2785 = vld [vmem:[%s423 + $0xf8] sm:$0xff]
        %2787 = vset.pattern.permute.xlu0 0
        %2788 = vperm.xlu0 %2787, %v2754
        %v2789 = vpop.permute.xlu0 %2788
        %2792 = vset.pattern.permute.xlu0 0
        %2793 = vperm.xlu0 %2792, %v2755
        %v2794 = vpop.permute.xlu0 %2793
        %2797 = vset.pattern.permute.xlu0 0
        %2798 = vperm.xlu0 %2797, %v2756
        %v2799 = vpop.permute.xlu0 %2798
        %2802 = vset.pattern.permute.xlu0 0
        %2803 = vperm.xlu0 %2802, %v2757
        %v2804 = vpop.permute.xlu0 %2803
        %2807 = vset.pattern.permute.xlu0 0
        %2808 = vperm.xlu0 %2807, %v2758
        %v2809 = vpop.permute.xlu0 %2808
        %2812 = vset.pattern.permute.xlu0 0
        %2813 = vperm.xlu0 %2812, %v2759
        %v2814 = vpop.permute.xlu0 %2813
        %2817 = vset.pattern.permute.xlu0 0
        %2818 = vperm.xlu0 %2817, %v2760
        %v2819 = vpop.permute.xlu0 %2818
        %2822 = vset.pattern.permute.xlu0 0
        %2823 = vperm.xlu0 %2822, %v2761
        %v2824 = vpop.permute.xlu0 %2823
        %2827 = vset.pattern.permute.xlu0 0
        %2828 = vperm.xlu0 %2827, %v2762
        %v2829 = vpop.permute.xlu0 %2828
        %2832 = vset.pattern.permute.xlu0 0
        %2833 = vperm.xlu0 %2832, %v2763
        %v2834 = vpop.permute.xlu0 %2833
        %2837 = vset.pattern.permute.xlu0 0
        %2838 = vperm.xlu0 %2837, %v2764
        %v2839 = vpop.permute.xlu0 %2838
        %2842 = vset.pattern.permute.xlu0 0
        %2843 = vperm.xlu0 %2842, %v2765
        %v2844 = vpop.permute.xlu0 %2843
        %2847 = vset.pattern.permute.xlu0 0
        %2848 = vperm.xlu0 %2847, %v2766
        %v2849 = vpop.permute.xlu0 %2848
        %2852 = vset.pattern.permute.xlu0 0
        %2853 = vperm.xlu0 %2852, %v2767
        %v2854 = vpop.permute.xlu0 %2853
        %2857 = vset.pattern.permute.xlu0 0
        %2858 = vperm.xlu0 %2857, %v2768
        %v2859 = vpop.permute.xlu0 %2858
        %2862 = vset.pattern.permute.xlu0 0
        %2863 = vperm.xlu0 %2862, %v2769
        %v2864 = vpop.permute.xlu0 %2863
        %2867 = vset.pattern.permute.xlu0 0
        %2868 = vperm.xlu0 %2867, %v2770
        %v2869 = vpop.permute.xlu0 %2868
        %2872 = vset.pattern.permute.xlu0 0
        %2873 = vperm.xlu0 %2872, %v2771
        %v2874 = vpop.permute.xlu0 %2873
        %2877 = vset.pattern.permute.xlu0 0
        %2878 = vperm.xlu0 %2877, %v2772
        %v2879 = vpop.permute.xlu0 %2878
        %2882 = vset.pattern.permute.xlu0 0
        %2883 = vperm.xlu0 %2882, %v2773
        %v2884 = vpop.permute.xlu0 %2883
        %2887 = vset.pattern.permute.xlu0 0
        %2888 = vperm.xlu0 %2887, %v2774
        %v2889 = vpop.permute.xlu0 %2888
        %2892 = vset.pattern.permute.xlu0 0
        %2893 = vperm.xlu0 %2892, %v2775
        %v2894 = vpop.permute.xlu0 %2893
        %2897 = vset.pattern.permute.xlu0 0
        %2898 = vperm.xlu0 %2897, %v2776
        %v2899 = vpop.permute.xlu0 %2898
        %2902 = vset.pattern.permute.xlu0 0
        %2903 = vperm.xlu0 %2902, %v2777
        %v2904 = vpop.permute.xlu0 %2903
        %2907 = vset.pattern.permute.xlu0 0
        %2908 = vperm.xlu0 %2907, %v2778
        %v2909 = vpop.permute.xlu0 %2908
        %2912 = vset.pattern.permute.xlu0 0
        %2913 = vperm.xlu0 %2912, %v2779
        %v2914 = vpop.permute.xlu0 %2913
        %2917 = vset.pattern.permute.xlu0 0
        %2918 = vperm.xlu0 %2917, %v2780
        %v2919 = vpop.permute.xlu0 %2918
        %2922 = vset.pattern.permute.xlu0 0
        %2923 = vperm.xlu0 %2922, %v2781
        %v2924 = vpop.permute.xlu0 %2923
        %2927 = vset.pattern.permute.xlu0 0
        %2928 = vperm.xlu0 %2927, %v2782
        %v2929 = vpop.permute.xlu0 %2928
        %2932 = vset.pattern.permute.xlu0 0
        %2933 = vperm.xlu0 %2932, %v2783
        %v2934 = vpop.permute.xlu0 %2933
        %2937 = vset.pattern.permute.xlu0 0
        %2938 = vperm.xlu0 %2937, %v2784
        %v2939 = vpop.permute.xlu0 %2938
        %2942 = vset.pattern.permute.xlu0 0
        %2943 = vperm.xlu0 %2942, %v2785
        %v2944 = vpop.permute.xlu0 %2943
        %v2946 = vmul.f32 %v2789, %v2722
        %v2947 = vmul.f32 %v2794, %v2723
        %v2948 = vmul.f32 %v2799, %v2724
        %v2949 = vmul.f32 %v2804, %v2725
        %v2950 = vmul.f32 %v2809, %v2726
        %v2951 = vmul.f32 %v2814, %v2727
        %v2952 = vmul.f32 %v2819, %v2728
        %v2953 = vmul.f32 %v2824, %v2729
        %v2954 = vmul.f32 %v2829, %v2730
        %v2955 = vmul.f32 %v2834, %v2731
        %v2956 = vmul.f32 %v2839, %v2732
        %v2957 = vmul.f32 %v2844, %v2733
        %v2958 = vmul.f32 %v2849, %v2734
        %v2959 = vmul.f32 %v2854, %v2735
        %v2960 = vmul.f32 %v2859, %v2736
        %v2961 = vmul.f32 %v2864, %v2737
        %v2962 = vmul.f32 %v2869, %v2738
        %v2963 = vmul.f32 %v2874, %v2739
        %v2964 = vmul.f32 %v2879, %v2740
        %v2965 = vmul.f32 %v2884, %v2741
        %v2966 = vmul.f32 %v2889, %v2742
        %v2967 = vmul.f32 %v2894, %v2743
        %v2968 = vmul.f32 %v2899, %v2744
        %v2969 = vmul.f32 %v2904, %v2745
        %v2970 = vmul.f32 %v2909, %v2746
        %v2971 = vmul.f32 %v2914, %v2747
        %v2972 = vmul.f32 %v2919, %v2748
        %v2973 = vmul.f32 %v2924, %v2749
        %v2974 = vmul.f32 %v2929, %v2750
        %v2975 = vmul.f32 %v2934, %v2751
        %v2976 = vmul.f32 %v2939, %v2752
        %v2977 = vmul.f32 %v2944, %v2753
        %v2978 = vsub.f32 %v2722, %v2946
        %v2979 = vsub.f32 %v2723, %v2947
        %v2980 = vsub.f32 %v2724, %v2948
        %v2981 = vsub.f32 %v2725, %v2949
        %v2982 = vsub.f32 %v2726, %v2950
        %v2983 = vsub.f32 %v2727, %v2951
        %v2984 = vsub.f32 %v2728, %v2952
        %v2985 = vsub.f32 %v2729, %v2953
        %v2986 = vsub.f32 %v2730, %v2954
        %v2987 = vsub.f32 %v2731, %v2955
        %v2988 = vsub.f32 %v2732, %v2956
        %v2989 = vsub.f32 %v2733, %v2957
        %v2990 = vsub.f32 %v2734, %v2958
        %v2991 = vsub.f32 %v2735, %v2959
        %v2992 = vsub.f32 %v2736, %v2960
        %v2993 = vsub.f32 %v2737, %v2961
        %v2994 = vsub.f32 %v2738, %v2962
        %v2995 = vsub.f32 %v2739, %v2963
        %v2996 = vsub.f32 %v2740, %v2964
        %v2997 = vsub.f32 %v2741, %v2965
        %v2998 = vsub.f32 %v2742, %v2966
        %v2999 = vsub.f32 %v2743, %v2967
        %v3000 = vsub.f32 %v2744, %v2968
        %v3001 = vsub.f32 %v2745, %v2969
        %v3002 = vsub.f32 %v2746, %v2970
        %v3003 = vsub.f32 %v2747, %v2971
        %v3004 = vsub.f32 %v2748, %v2972
        %v3005 = vsub.f32 %v2749, %v2973
        %v3006 = vsub.f32 %v2750, %v2974
        %v3007 = vsub.f32 %v2751, %v2975
        %v3008 = vsub.f32 %v2752, %v2976
        %v3009 = vsub.f32 %v2753, %v2977
        %v3010 = vpack.c.bf16 %v2947, %v2946
        %v3011 = vpack.c.bf16 %v2949, %v2948
        %v3012 = vpack.c.bf16 %v2951, %v2950
        %v3013 = vpack.c.bf16 %v2953, %v2952
        %v3014 = vpack.c.bf16 %v2955, %v2954
        %v3015 = vpack.c.bf16 %v2957, %v2956
        %v3016 = vpack.c.bf16 %v2959, %v2958
        %v3017 = vpack.c.bf16 %v2961, %v2960
        %v3018 = vpack.c.bf16 %v2963, %v2962
        %v3019 = vpack.c.bf16 %v2965, %v2964
        %v3020 = vpack.c.bf16 %v2967, %v2966
        %v3021 = vpack.c.bf16 %v2969, %v2968
        %v3022 = vpack.c.bf16 %v2971, %v2970
        %v3023 = vpack.c.bf16 %v2973, %v2972
        %v3024 = vpack.c.bf16 %v2975, %v2974
        %v3025 = vpack.c.bf16 %v2977, %v2976
        %v3026 = vld [vmem:[#allocation7] sm:$0xf]
        %v3027 = vld [vmem:[#allocation7 + $0x4] sm:$0xf]
        %v3028 = vld [vmem:[#allocation7 + $0x8] sm:$0xf]
        %v3029 = vld [vmem:[#allocation7 + $0xc] sm:$0xf]
        %v3030 = vld [vmem:[#allocation7 + $0x10] sm:$0xf]
        %v3031 = vld [vmem:[#allocation7 + $0x14] sm:$0xf]
        %v3032 = vld [vmem:[#allocation7 + $0x18] sm:$0xf]
        %v3033 = vld [vmem:[#allocation7 + $0x1c] sm:$0xf]
        %v3034 = vld [vmem:[#allocation7 + $0x20] sm:$0xf]
        %v3035 = vld [vmem:[#allocation7 + $0x24] sm:$0xf]
        %v3036 = vld [vmem:[#allocation7 + $0x28] sm:$0xf]
        %v3037 = vld [vmem:[#allocation7 + $0x2c] sm:$0xf]
        %v3038 = vld [vmem:[#allocation7 + $0x30] sm:$0xf]
        %v3039 = vld [vmem:[#allocation7 + $0x34] sm:$0xf]
        %v3040 = vld [vmem:[#allocation7 + $0x38] sm:$0xf]
        %v3041 = vld [vmem:[#allocation7 + $0x3c] sm:$0xf]
        %v3042 = vld [vmem:[%s5] sm:$0x1]
        %v3044 = vlaneseq
        %v3045 = vshrl.u32 %v3044, 7
        %v3046 = vsub.s32 0, %v3045
        %v3047 = vrot.slane %v3042, %v3046
        %v3065 = vunpack.c.l.b16 %v3026
        %v3066 = vunpack.c.l.b16 %v3027
        %v3067 = vunpack.c.l.b16 %v3028
        %v3068 = vunpack.c.l.b16 %v3029
        %v3069 = vunpack.c.l.b16 %v3030
        %v3070 = vunpack.c.l.b16 %v3031
        %v3071 = vunpack.c.l.b16 %v3032
        %v3072 = vunpack.c.l.b16 %v3033
        %v3073 = vunpack.c.l.b16 %v3034
        %v3074 = vunpack.c.l.b16 %v3035
        %v3075 = vunpack.c.l.b16 %v3036
        %v3076 = vunpack.c.l.b16 %v3037
        %v3077 = vunpack.c.l.b16 %v3038
        %v3078 = vunpack.c.l.b16 %v3039
        %v3079 = vunpack.c.l.b16 %v3040
        %v3080 = vunpack.c.l.b16 %v3041
        %v3081 = vpack.c.b16 %v3066, %v3065
        %v3082 = vpack.c.b16 %v3068, %v3067
        %v3083 = vpack.c.b16 %v3070, %v3069
        %v3084 = vpack.c.b16 %v3072, %v3071
        %v3085 = vpack.c.b16 %v3074, %v3073
        %v3086 = vpack.c.b16 %v3076, %v3075
        %v3087 = vpack.c.b16 %v3078, %v3077
        %v3088 = vpack.c.b16 %v3080, %v3079
        %3097 = vmatprep.subr.bf16.mxu0 0
        %3098 = vmatpush1.bf16.msra.mxu0 %v3081
        %3099 = vmatprep.subr.bf16.mxu0 0
        %3100 = vmatpush1.bf16.msra.mxu0 %v3082
        %3101 = vmatprep.subr.bf16.mxu0 0
        %3102 = vmatpush1.bf16.msra.mxu0 %v3083
        %3103 = vmatprep.subr.bf16.mxu0 0
        %3104 = vmatpush1.bf16.msra.mxu0 %v3084
        %3105 = vmatprep.subr.bf16.mxu0 0
        %3106 = vmatpush1.bf16.msra.mxu0 %v3085
        %3107 = vmatprep.subr.bf16.mxu0 0
        %3108 = vmatpush1.bf16.msra.mxu0 %v3086
        %3109 = vmatprep.subr.bf16.mxu0 0
        %3110 = vmatpush1.bf16.msra.mxu0 %v3087
        %3111 = vmatprep.subr.bf16.mxu0 0
        %3112 = vmatpush1.bf16.msra.mxu0 %v3088
        %3113 = vmatprep.subr.bf16.mxu0 0
        %3114 = vmatpush1.bf16.msra.mxu0 0
        %3115 = vmatprep.subr.bf16.mxu0 0
        %3116 = vmatpush1.bf16.msra.mxu0 0
        %3117 = vmatprep.subr.bf16.mxu0 0
        %3118 = vmatpush1.bf16.msra.mxu0 0
        %3119 = vmatprep.subr.bf16.mxu0 0
        %3120 = vmatpush1.bf16.msra.mxu0 0
        %3121 = vmatprep.subr.bf16.mxu0 0
        %3122 = vmatpush1.bf16.msra.mxu0 0
        %3123 = vmatprep.subr.bf16.mxu0 0
        %3124 = vmatpush1.bf16.msra.mxu0 0
        %3125 = vmatprep.subr.bf16.mxu0 0
        %3126 = vmatpush1.bf16.msra.mxu0 0
        %3127 = vmatprep.subr.bf16.mxu0 0
        %3128 = vmatpush1.bf16.msra.mxu0 0
        %3129 = vmatprep.mubr.bf16.mxu0 0
        %3130 = vmatmul.mubr.bf16.gmra.mrb[0].mxu0 %v3010
        %v3131 = vpop.f32.mrb[0].mxu0
        %v3132 = vadd.f32 %v3047, %v3131
        %v3133 = vpop.f32.mrb[0].mxu0
        %v3134 = vpop.f32.mrb[0].mxu0
        %v3135 = vadd.f32 %v3047, %v3134
        %v3136 = vpop.f32.mrb[0].mxu0
        %3137 = vmatprep.mubr.bf16.mxu0 0
        %3138 = vmatmul.mubr.bf16.gmra.mrb[0].mxu0 %v3011
        %v3139 = vpop.f32.mrb[0].mxu0
        %v3140 = vadd.f32 %v3047, %v3139
        %v3141 = vpop.f32.mrb[0].mxu0
        %v3142 = vpop.f32.mrb[0].mxu0
        %v3143 = vadd.f32 %v3047, %v3142
        %v3144 = vpop.f32.mrb[0].mxu0
        %3145 = vmatprep.mubr.bf16.mxu0 0
        %3146 = vmatmul.mubr.bf16.gmra.mrb[0].mxu0 %v3012
        %v3147 = vpop.f32.mrb[0].mxu0
        %v3148 = vadd.f32 %v3047, %v3147
        %v3149 = vpop.f32.mrb[0].mxu0
        %v3150 = vpop.f32.mrb[0].mxu0
        %v3151 = vadd.f32 %v3047, %v3150
        %v3152 = vpop.f32.mrb[0].mxu0
        %3153 = vmatprep.mubr.bf16.mxu0 0
        %3154 = vmatmul.mubr.bf16.gmra.mrb[0].mxu0 %v3013
        %v3155 = vpop.f32.mrb[0].mxu0
        %v3156 = vadd.f32 %v3047, %v3155
        %v3157 = vpop.f32.mrb[0].mxu0
        %v3158 = vpop.f32.mrb[0].mxu0
        %v3159 = vadd.f32 %v3047, %v3158
        %v3160 = vpop.f32.mrb[0].mxu0
        %3161 = vmatprep.mubr.bf16.mxu0 0
        %3162 = vmatmul.mubr.bf16.gmra.mrb[0].mxu0 %v3014
        %v3163 = vpop.f32.mrb[0].mxu0
        %v3164 = vadd.f32 %v3047, %v3163
        %v3165 = vpop.f32.mrb[0].mxu0
        %v3166 = vpop.f32.mrb[0].mxu0
        %v3167 = vadd.f32 %v3047, %v3166
        %v3168 = vpop.f32.mrb[0].mxu0
        %3169 = vmatprep.mubr.bf16.mxu0 0
        %3170 = vmatmul.mubr.bf16.gmra.mrb[0].mxu0 %v3015
        %v3171 = vpop.f32.mrb[0].mxu0
        %v3172 = vadd.f32 %v3047, %v3171
        %v3173 = vpop.f32.mrb[0].mxu0
        %v3174 = vpop.f32.mrb[0].mxu0
        %v3175 = vadd.f32 %v3047, %v3174
        %v3176 = vpop.f32.mrb[0].mxu0
        %3177 = vmatprep.mubr.bf16.mxu0 0
        %3178 = vmatmul.mubr.bf16.gmra.mrb[0].mxu0 %v3016
        %v3179 = vpop.f32.mrb[0].mxu0
        %v3180 = vadd.f32 %v3047, %v3179
        %v3181 = vpop.f32.mrb[0].mxu0
        %v3182 = vpop.f32.mrb[0].mxu0
        %v3183 = vadd.f32 %v3047, %v3182
        %v3184 = vpop.f32.mrb[0].mxu0
        %3185 = vmatprep.mubr.bf16.mxu0 0
        %3186 = vmatmul.mubr.bf16.gmra.mrb[0].mxu0 %v3017
        %v3187 = vpop.f32.mrb[0].mxu0
        %v3188 = vadd.f32 %v3047, %v3187
        %v3189 = vpop.f32.mrb[0].mxu0
        %v3190 = vpop.f32.mrb[0].mxu0
        %v3191 = vadd.f32 %v3047, %v3190
        %v3192 = vpop.f32.mrb[0].mxu0
        %3193 = vmatprep.mubr.bf16.mxu0 0
        %3194 = vmatmul.mubr.bf16.gmra.mrb[0].mxu0 %v3018
        %v3195 = vpop.f32.mrb[0].mxu0
        %v3196 = vadd.f32 %v3047, %v3195
        %v3197 = vpop.f32.mrb[0].mxu0
        %v3198 = vpop.f32.mrb[0].mxu0
        %v3199 = vadd.f32 %v3047, %v3198
        %v3200 = vpop.f32.mrb[0].mxu0
        %3201 = vmatprep.mubr.bf16.mxu0 0
        %3202 = vmatmul.mubr.bf16.gmra.mrb[0].mxu0 %v3019
        %v3203 = vpop.f32.mrb[0].mxu0
        %v3204 = vadd.f32 %v3047, %v3203
        %v3205 = vpop.f32.mrb[0].mxu0
        %v3206 = vpop.f32.mrb[0].mxu0
        %v3207 = vadd.f32 %v3047, %v3206
        %v3208 = vpop.f32.mrb[0].mxu0
        %3209 = vmatprep.mubr.bf16.mxu0 0
        %3210 = vmatmul.mubr.bf16.gmra.mrb[0].mxu0 %v3020
        %v3211 = vpop.f32.mrb[0].mxu0
        %v3212 = vadd.f32 %v3047, %v3211
        %v3213 = vpop.f32.mrb[0].mxu0
        %v3214 = vpop.f32.mrb[0].mxu0
        %v3215 = vadd.f32 %v3047, %v3214
        %v3216 = vpop.f32.mrb[0].mxu0
        %3217 = vmatprep.mubr.bf16.mxu0 0
        %3218 = vmatmul.mubr.bf16.gmra.mrb[0].mxu0 %v3021
        %v3219 = vpop.f32.mrb[0].mxu0
        %v3220 = vadd.f32 %v3047, %v3219
        %v3221 = vpop.f32.mrb[0].mxu0
        %v3222 = vpop.f32.mrb[0].mxu0
        %v3223 = vadd.f32 %v3047, %v3222
        %v3224 = vpop.f32.mrb[0].mxu0
        %3225 = vmatprep.mubr.bf16.mxu0 0
        %3226 = vmatmul.mubr.bf16.gmra.mrb[0].mxu0 %v3022
        %v3227 = vpop.f32.mrb[0].mxu0
        %v3228 = vadd.f32 %v3047, %v3227
        %v3229 = vpop.f32.mrb[0].mxu0
        %v3230 = vpop.f32.mrb[0].mxu0
        %v3231 = vadd.f32 %v3047, %v3230
        %v3232 = vpop.f32.mrb[0].mxu0
        %3233 = vmatprep.mubr.bf16.mxu0 0
        %3234 = vmatmul.mubr.bf16.gmra.mrb[0].mxu0 %v3023
        %v3235 = vpop.f32.mrb[0].mxu0
        %v3236 = vadd.f32 %v3047, %v3235
        %v3237 = vpop.f32.mrb[0].mxu0
        %v3238 = vpop.f32.mrb[0].mxu0
        %v3239 = vadd.f32 %v3047, %v3238
        %v3240 = vpop.f32.mrb[0].mxu0
        %3241 = vmatprep.mubr.bf16.mxu0 0
        %3242 = vmatmul.mubr.bf16.gmra.mrb[0].mxu0 %v3024
        %v3243 = vpop.f32.mrb[0].mxu0
        %v3244 = vadd.f32 %v3047, %v3243
        %v3245 = vpop.f32.mrb[0].mxu0
        %v3246 = vpop.f32.mrb[0].mxu0
        %v3247 = vadd.f32 %v3047, %v3246
        %v3248 = vpop.f32.mrb[0].mxu0
        %3249 = vmatprep.mubr.bf16.mxu0 0
        %3250 = vmatmul.mubr.bf16.gmra.mrb[0].mxu0 %v3025
        %v3251 = vpop.f32.mrb[0].mxu0
        %v3252 = vadd.f32 %v3047, %v3251
        %v3253 = vpop.f32.mrb[0].mxu0
        %v3254 = vpop.f32.mrb[0].mxu0
        %v3255 = vadd.f32 %v3047, %v3254
        %v3256 = vpop.f32.mrb[0].mxu0
        %3257 = vdwg.mxu0
        %v3258 = vpack.c.bf16 %v2979, %v2978
        %v3259 = vpack.c.bf16 %v2981, %v2980
        %v3260 = vpack.c.bf16 %v2983, %v2982
        %v3261 = vpack.c.bf16 %v2985, %v2984
        %v3262 = vpack.c.bf16 %v2987, %v2986
        %v3263 = vpack.c.bf16 %v2989, %v2988
        %v3264 = vpack.c.bf16 %v2991, %v2990
        %v3265 = vpack.c.bf16 %v2993, %v2992
        %v3266 = vpack.c.bf16 %v2995, %v2994
        %v3267 = vpack.c.bf16 %v2997, %v2996
        %v3268 = vpack.c.bf16 %v2999, %v2998
        %v3269 = vpack.c.bf16 %v3001, %v3000
        %v3270 = vpack.c.bf16 %v3003, %v3002
        %v3271 = vpack.c.bf16 %v3005, %v3004
        %v3272 = vpack.c.bf16 %v3007, %v3006
        %v3273 = vpack.c.bf16 %v3009, %v3008
        %v3274 = vld [vmem:[#allocation9] sm:$0xff]
        %v3275 = vld [vmem:[#allocation9 + $0x8] sm:$0xff]
        %v3276 = vld [vmem:[#allocation9 + $0x10] sm:$0xff]
        %v3277 = vld [vmem:[#allocation9 + $0x18] sm:$0xff]
        %v3278 = vld [vmem:[#allocation9 + $0x20] sm:$0xff]
        %v3279 = vld [vmem:[#allocation9 + $0x28] sm:$0xff]
        %v3280 = vld [vmem:[#allocation9 + $0x30] sm:$0xff]
        %v3281 = vld [vmem:[#allocation9 + $0x38] sm:$0xff]
        %v3282 = vld [vmem:[#allocation9 + $0x40] sm:$0xff]
        %v3283 = vld [vmem:[#allocation9 + $0x48] sm:$0xff]
        %v3284 = vld [vmem:[#allocation9 + $0x50] sm:$0xff]
        %v3285 = vld [vmem:[#allocation9 + $0x58] sm:$0xff]
        %v3286 = vld [vmem:[#allocation9 + $0x60] sm:$0xff]
        %v3287 = vld [vmem:[#allocation9 + $0x68] sm:$0xff]
        %v3288 = vld [vmem:[#allocation9 + $0x70] sm:$0xff]
        %v3289 = vld [vmem:[#allocation9 + $0x78] sm:$0xff]
        %v3290 = vld [vmem:[%s7] sm:$0x3]
        %v3292 = vlaneseq
        %v3293 = vshrl.u32 %v3292, 7
        %v3294 = vsub.s32 0, %v3293
        %v3295 = vrot.slane %v3290, %v3294
        %v3296 = vlaneseq
        %v3297 = vshrl.u32 %v3296, 7
        %v3298 = vsub.s32 1, %v3297
        %v3299 = vrot.slane %v3290, %v3298
        %v3318 = vunpack.c.l.b16 %v3274
        %v3319 = vunpack.c.h.b16 %v3274
        %v3320 = vunpack.c.l.b16 %v3275
        %v3321 = vunpack.c.h.b16 %v3275
        %v3322 = vunpack.c.l.b16 %v3276
        %v3323 = vunpack.c.h.b16 %v3276
        %v3324 = vunpack.c.l.b16 %v3277
        %v3325 = vunpack.c.h.b16 %v3277
        %v3326 = vunpack.c.l.b16 %v3278
        %v3327 = vunpack.c.h.b16 %v3278
        %v3328 = vunpack.c.l.b16 %v3279
        %v3329 = vunpack.c.h.b16 %v3279
        %v3330 = vunpack.c.l.b16 %v3280
        %v3331 = vunpack.c.h.b16 %v3280
        %v3332 = vunpack.c.l.b16 %v3281
        %v3333 = vunpack.c.h.b16 %v3281
        %v3334 = vunpack.c.l.b16 %v3282
        %v3335 = vunpack.c.h.b16 %v3282
        %v3336 = vunpack.c.l.b16 %v3283
        %v3337 = vunpack.c.h.b16 %v3283
        %v3338 = vunpack.c.l.b16 %v3284
        %v3339 = vunpack.c.h.b16 %v3284
        %v3340 = vunpack.c.l.b16 %v3285
        %v3341 = vunpack.c.h.b16 %v3285
        %v3342 = vunpack.c.l.b16 %v3286
        %v3343 = vunpack.c.h.b16 %v3286
        %v3344 = vunpack.c.l.b16 %v3287
        %v3345 = vunpack.c.h.b16 %v3287
        %v3346 = vunpack.c.l.b16 %v3288
        %v3347 = vunpack.c.h.b16 %v3288
        %v3348 = vunpack.c.l.b16 %v3289
        %v3349 = vunpack.c.h.b16 %v3289
        %v3350 = vpack.c.b16 %v3320, %v3318
        %v3351 = vpack.c.b16 %v3321, %v3319
        %v3352 = vpack.c.b16 %v3324, %v3322
        %v3353 = vpack.c.b16 %v3325, %v3323
        %v3354 = vpack.c.b16 %v3328, %v3326
        %v3355 = vpack.c.b16 %v3329, %v3327
        %v3356 = vpack.c.b16 %v3332, %v3330
        %v3357 = vpack.c.b16 %v3333, %v3331
        %v3358 = vpack.c.b16 %v3336, %v3334
        %v3359 = vpack.c.b16 %v3337, %v3335
        %v3360 = vpack.c.b16 %v3340, %v3338
        %v3361 = vpack.c.b16 %v3341, %v3339
        %v3362 = vpack.c.b16 %v3344, %v3342
        %v3363 = vpack.c.b16 %v3345, %v3343
        %v3364 = vpack.c.b16 %v3348, %v3346
        %v3365 = vpack.c.b16 %v3349, %v3347
        %3382 = vmatprep.subr.bf16.mxu0 %v3351
        %3383 = vmatpush1.bf16.msra.mxu0 %v3350
        %3384 = vmatprep.subr.bf16.mxu0 %v3353
        %3385 = vmatpush1.bf16.msra.mxu0 %v3352
        %3386 = vmatprep.subr.bf16.mxu0 %v3355
        %3387 = vmatpush1.bf16.msra.mxu0 %v3354
        %3388 = vmatprep.subr.bf16.mxu0 %v3357
        %3389 = vmatpush1.bf16.msra.mxu0 %v3356
        %3390 = vmatprep.subr.bf16.mxu0 %v3359
        %3391 = vmatpush1.bf16.msra.mxu0 %v3358
        %3392 = vmatprep.subr.bf16.mxu0 %v3361
        %3393 = vmatpush1.bf16.msra.mxu0 %v3360
        %3394 = vmatprep.subr.bf16.mxu0 %v3363
        %3395 = vmatpush1.bf16.msra.mxu0 %v3362
        %3396 = vmatprep.subr.bf16.mxu0 %v3365
        %3397 = vmatpush1.bf16.msra.mxu0 %v3364
        %3398 = vmatprep.subr.bf16.mxu0 0
        %3399 = vmatpush1.bf16.msra.mxu0 0
        %3400 = vmatprep.subr.bf16.mxu0 0
        %3401 = vmatpush1.bf16.msra.mxu0 0
        %3402 = vmatprep.subr.bf16.mxu0 0
        %3403 = vmatpush1.bf16.msra.mxu0 0
        %3404 = vmatprep.subr.bf16.mxu0 0
        %3405 = vmatpush1.bf16.msra.mxu0 0
        %3406 = vmatprep.subr.bf16.mxu0 0
        %3407 = vmatpush1.bf16.msra.mxu0 0
        %3408 = vmatprep.subr.bf16.mxu0 0
        %3409 = vmatpush1.bf16.msra.mxu0 0
        %3410 = vmatprep.subr.bf16.mxu0 0
        %3411 = vmatpush1.bf16.msra.mxu0 0
        %3412 = vmatprep.subr.bf16.mxu0 0
        %3413 = vmatpush1.bf16.msra.mxu0 0
        %3414 = vmatprep.mubr.bf16.mxu0 0
        %3415 = vmatmul.mubr.bf16.gmra.mrb[0].mxu0 %v3258
        %v3416 = vpop.f32.mrb[0].mxu0
        %v3417 = vadd.f32 %v3295, %v3416
        %v3418 = vpop.f32.mrb[0].mxu0
        %v3419 = vadd.f32 %v3299, %v3418
        %v3420 = vpop.f32.mrb[0].mxu0
        %v3421 = vadd.f32 %v3295, %v3420
        %v3422 = vpop.f32.mrb[0].mxu0
        %v3423 = vadd.f32 %v3299, %v3422
        %3424 = vmatprep.mubr.bf16.mxu0 0
        %3425 = vmatmul.mubr.bf16.gmra.mrb[0].mxu0 %v3259
        %v3426 = vpop.f32.mrb[0].mxu0
        %v3427 = vadd.f32 %v3295, %v3426
        %v3428 = vpop.f32.mrb[0].mxu0
        %v3429 = vadd.f32 %v3299, %v3428
        %v3430 = vpop.f32.mrb[0].mxu0
        %v3431 = vadd.f32 %v3295, %v3430
        %v3432 = vpop.f32.mrb[0].mxu0
        %v3433 = vadd.f32 %v3299, %v3432
        %3434 = vmatprep.mubr.bf16.mxu0 0
        %3435 = vmatmul.mubr.bf16.gmra.mrb[0].mxu0 %v3260
        %v3436 = vpop.f32.mrb[0].mxu0
        %v3437 = vadd.f32 %v3295, %v3436
        %v3438 = vpop.f32.mrb[0].mxu0
        %v3439 = vadd.f32 %v3299, %v3438
        %v3440 = vpop.f32.mrb[0].mxu0
        %v3441 = vadd.f32 %v3295, %v3440
        %v3442 = vpop.f32.mrb[0].mxu0
        %v3443 = vadd.f32 %v3299, %v3442
        %3444 = vmatprep.mubr.bf16.mxu0 0
        %3445 = vmatmul.mubr.bf16.gmra.mrb[0].mxu0 %v3261
        %v3446 = vpop.f32.mrb[0].mxu0
        %v3447 = vadd.f32 %v3295, %v3446
        %v3448 = vpop.f32.mrb[0].mxu0
        %v3449 = vadd.f32 %v3299, %v3448
        %v3450 = vpop.f32.mrb[0].mxu0
        %v3451 = vadd.f32 %v3295, %v3450
        %v3452 = vpop.f32.mrb[0].mxu0
        %v3453 = vadd.f32 %v3299, %v3452
        %3454 = vmatprep.mubr.bf16.mxu0 0
        %3455 = vmatmul.mubr.bf16.gmra.mrb[0].mxu0 %v3262
        %v3456 = vpop.f32.mrb[0].mxu0
        %v3457 = vadd.f32 %v3295, %v3456
        %v3458 = vpop.f32.mrb[0].mxu0
        %v3459 = vadd.f32 %v3299, %v3458
        %v3460 = vpop.f32.mrb[0].mxu0
        %v3461 = vadd.f32 %v3295, %v3460
        %v3462 = vpop.f32.mrb[0].mxu0
        %v3463 = vadd.f32 %v3299, %v3462
        %3464 = vmatprep.mubr.bf16.mxu0 0
        %3465 = vmatmul.mubr.bf16.gmra.mrb[0].mxu0 %v3263
        %v3466 = vpop.f32.mrb[0].mxu0
        %v3467 = vadd.f32 %v3295, %v3466
        %v3468 = vpop.f32.mrb[0].mxu0
        %v3469 = vadd.f32 %v3299, %v3468
        %v3470 = vpop.f32.mrb[0].mxu0
        %v3471 = vadd.f32 %v3295, %v3470
        %v3472 = vpop.f32.mrb[0].mxu0
        %v3473 = vadd.f32 %v3299, %v3472
        %3474 = vmatprep.mubr.bf16.mxu0 0
        %3475 = vmatmul.mubr.bf16.gmra.mrb[0].mxu0 %v3264
        %v3476 = vpop.f32.mrb[0].mxu0
        %v3477 = vadd.f32 %v3295, %v3476
        %v3478 = vpop.f32.mrb[0].mxu0
        %v3479 = vadd.f32 %v3299, %v3478
        %v3480 = vpop.f32.mrb[0].mxu0
        %v3481 = vadd.f32 %v3295, %v3480
        %v3482 = vpop.f32.mrb[0].mxu0
        %v3483 = vadd.f32 %v3299, %v3482
        %3484 = vmatprep.mubr.bf16.mxu0 0
        %3485 = vmatmul.mubr.bf16.gmra.mrb[0].mxu0 %v3265
        %v3486 = vpop.f32.mrb[0].mxu0
        %v3487 = vadd.f32 %v3295, %v3486
        %v3488 = vpop.f32.mrb[0].mxu0
        %v3489 = vadd.f32 %v3299, %v3488
        %v3490 = vpop.f32.mrb[0].mxu0
        %v3491 = vadd.f32 %v3295, %v3490
        %v3492 = vpop.f32.mrb[0].mxu0
        %v3493 = vadd.f32 %v3299, %v3492
        %3494 = vmatprep.mubr.bf16.mxu0 0
        %3495 = vmatmul.mubr.bf16.gmra.mrb[0].mxu0 %v3266
        %v3496 = vpop.f32.mrb[0].mxu0
        %v3497 = vadd.f32 %v3295, %v3496
        %v3498 = vpop.f32.mrb[0].mxu0
        %v3499 = vadd.f32 %v3299, %v3498
        %v3500 = vpop.f32.mrb[0].mxu0
        %v3501 = vadd.f32 %v3295, %v3500
        %v3502 = vpop.f32.mrb[0].mxu0
        %v3503 = vadd.f32 %v3299, %v3502
        %3504 = vmatprep.mubr.bf16.mxu0 0
        %3505 = vmatmul.mubr.bf16.gmra.mrb[0].mxu0 %v3267
        %v3506 = vpop.f32.mrb[0].mxu0
        %v3507 = vadd.f32 %v3295, %v3506
        %v3508 = vpop.f32.mrb[0].mxu0
        %v3509 = vadd.f32 %v3299, %v3508
        %v3510 = vpop.f32.mrb[0].mxu0
        %v3511 = vadd.f32 %v3295, %v3510
        %v3512 = vpop.f32.mrb[0].mxu0
        %v3513 = vadd.f32 %v3299, %v3512
        %3514 = vmatprep.mubr.bf16.mxu0 0
        %3515 = vmatmul.mubr.bf16.gmra.mrb[0].mxu0 %v3268
        %v3516 = vpop.f32.mrb[0].mxu0
        %v3517 = vadd.f32 %v3295, %v3516
        %v3518 = vpop.f32.mrb[0].mxu0
        %v3519 = vadd.f32 %v3299, %v3518
        %v3520 = vpop.f32.mrb[0].mxu0
        %v3521 = vadd.f32 %v3295, %v3520
        %v3522 = vpop.f32.mrb[0].mxu0
        %v3523 = vadd.f32 %v3299, %v3522
        %3524 = vmatprep.mubr.bf16.mxu0 0
        %3525 = vmatmul.mubr.bf16.gmra.mrb[0].mxu0 %v3269
        %v3526 = vpop.f32.mrb[0].mxu0
        %v3527 = vadd.f32 %v3295, %v3526
        %v3528 = vpop.f32.mrb[0].mxu0
        %v3529 = vadd.f32 %v3299, %v3528
        %v3530 = vpop.f32.mrb[0].mxu0
        %v3531 = vadd.f32 %v3295, %v3530
        %v3532 = vpop.f32.mrb[0].mxu0
        %v3533 = vadd.f32 %v3299, %v3532
        %3534 = vmatprep.mubr.bf16.mxu0 0
        %3535 = vmatmul.mubr.bf16.gmra.mrb[0].mxu0 %v3270
        %v3536 = vpop.f32.mrb[0].mxu0
        %v3537 = vadd.f32 %v3295, %v3536
        %v3538 = vpop.f32.mrb[0].mxu0
        %v3539 = vadd.f32 %v3299, %v3538
        %v3540 = vpop.f32.mrb[0].mxu0
        %v3541 = vadd.f32 %v3295, %v3540
        %v3542 = vpop.f32.mrb[0].mxu0
        %v3543 = vadd.f32 %v3299, %v3542
        %3544 = vmatprep.mubr.bf16.mxu0 0
        %3545 = vmatmul.mubr.bf16.gmra.mrb[0].mxu0 %v3271
        %v3546 = vpop.f32.mrb[0].mxu0
        %v3547 = vadd.f32 %v3295, %v3546
        %v3548 = vpop.f32.mrb[0].mxu0
        %v3549 = vadd.f32 %v3299, %v3548
        %v3550 = vpop.f32.mrb[0].mxu0
        %v3551 = vadd.f32 %v3295, %v3550
        %v3552 = vpop.f32.mrb[0].mxu0
        %v3553 = vadd.f32 %v3299, %v3552
        %3554 = vmatprep.mubr.bf16.mxu0 0
        %3555 = vmatmul.mubr.bf16.gmra.mrb[0].mxu0 %v3272
        %v3556 = vpop.f32.mrb[0].mxu0
        %v3557 = vadd.f32 %v3295, %v3556
        %v3558 = vpop.f32.mrb[0].mxu0
        %v3559 = vadd.f32 %v3299, %v3558
        %v3560 = vpop.f32.mrb[0].mxu0
        %v3561 = vadd.f32 %v3295, %v3560
        %v3562 = vpop.f32.mrb[0].mxu0
        %v3563 = vadd.f32 %v3299, %v3562
        %3564 = vmatprep.mubr.bf16.mxu0 0
        %3565 = vmatmul.mubr.bf16.gmra.mrb[0].mxu0 %v3273
        %v3566 = vpop.f32.mrb[0].mxu0
        %v3567 = vadd.f32 %v3295, %v3566
        %v3568 = vpop.f32.mrb[0].mxu0
        %v3569 = vadd.f32 %v3299, %v3568
        %v3570 = vpop.f32.mrb[0].mxu0
        %v3571 = vadd.f32 %v3295, %v3570
        %v3572 = vpop.f32.mrb[0].mxu0
        %v3573 = vadd.f32 %v3299, %v3572
        %3574 = vdwg.mxu0
        %v3575 = vpack.c.bf16 %v3135, %v3132
        %v3576 = vpack.c.bf16 %v3143, %v3140
        %v3577 = vpack.c.bf16 %v3151, %v3148
        %v3578 = vpack.c.bf16 %v3159, %v3156
        %v3579 = vpack.c.bf16 %v3167, %v3164
        %v3580 = vpack.c.bf16 %v3175, %v3172
        %v3581 = vpack.c.bf16 %v3183, %v3180
        %v3582 = vpack.c.bf16 %v3191, %v3188
        %v3583 = vpack.c.bf16 %v3199, %v3196
        %v3584 = vpack.c.bf16 %v3207, %v3204
        %v3585 = vpack.c.bf16 %v3215, %v3212
        %v3586 = vpack.c.bf16 %v3223, %v3220
        %v3587 = vpack.c.bf16 %v3231, %v3228
        %v3588 = vpack.c.bf16 %v3239, %v3236
        %v3589 = vpack.c.bf16 %v3247, %v3244
        %v3590 = vpack.c.bf16 %v3255, %v3252
        %v3591 = vpack.c.bf16 %v3421, %v3417
        %v3592 = vpack.c.bf16 %v3431, %v3427
        %v3593 = vpack.c.bf16 %v3441, %v3437
        %v3594 = vpack.c.bf16 %v3451, %v3447
        %v3595 = vpack.c.bf16 %v3461, %v3457
        %v3596 = vpack.c.bf16 %v3471, %v3467
        %v3597 = vpack.c.bf16 %v3481, %v3477
        %v3598 = vpack.c.bf16 %v3491, %v3487
        %v3599 = vpack.c.bf16 %v3423, %v3419
        %v3600 = vpack.c.bf16 %v3433, %v3429
        %v3601 = vpack.c.bf16 %v3443, %v3439
        %v3602 = vpack.c.bf16 %v3453, %v3449
        %v3603 = vpack.c.bf16 %v3463, %v3459
        %v3604 = vpack.c.bf16 %v3473, %v3469
        %v3605 = vpack.c.bf16 %v3483, %v3479
        %v3606 = vpack.c.bf16 %v3493, %v3489
        %3607 = vmatprep.subr.bf16.mxu0 0
        %3608 = vmatpush1.bf16.xpose.msra.mxu0 %v3591
        %3609 = vmatprep.subr.bf16.mxu0 0
        %3610 = vmatpush1.bf16.xpose.msra.mxu0 %v3592
        %3611 = vmatprep.subr.bf16.mxu0 0
        %3612 = vmatpush1.bf16.xpose.msra.mxu0 %v3593
        %3613 = vmatprep.subr.bf16.mxu0 0
        %3614 = vmatpush1.bf16.xpose.msra.mxu0 %v3594
        %3615 = vmatprep.subr.bf16.mxu0 0
        %3616 = vmatpush1.bf16.xpose.msra.mxu0 %v3595
        %3617 = vmatprep.subr.bf16.mxu0 0
        %3618 = vmatpush1.bf16.xpose.msra.mxu0 %v3596
        %3619 = vmatprep.subr.bf16.mxu0 0
        %3620 = vmatpush1.bf16.xpose.msra.mxu0 %v3597
        %3621 = vmatprep.subr.bf16.mxu0 0
        %3622 = vmatpush1.bf16.xpose.msra.mxu0 %v3598
        %3623 = vmatprep.subr.bf16.mxu0 0
        %3624 = vmatpush1.bf16.xpose.msra.mxu0 0
        %3625 = vmatprep.subr.bf16.mxu0 0
        %3626 = vmatpush1.bf16.xpose.msra.mxu0 0
        %3627 = vmatprep.subr.bf16.mxu0 0
        %3628 = vmatpush1.bf16.xpose.msra.mxu0 0
        %3629 = vmatprep.subr.bf16.mxu0 0
        %3630 = vmatpush1.bf16.xpose.msra.mxu0 0
        %3631 = vmatprep.subr.bf16.mxu0 0
        %3632 = vmatpush1.bf16.xpose.msra.mxu0 0
        %3633 = vmatprep.subr.bf16.mxu0 0
        %3634 = vmatpush1.bf16.xpose.msra.mxu0 0
        %3635 = vmatprep.subr.bf16.mxu0 0
        %3636 = vmatpush1.bf16.xpose.msra.mxu0 0
        %3637 = vmatprep.subr.bf16.mxu0 0
        %3638 = vmatpush1.bf16.xpose.msra.mxu0 0
        %3639 = vmatprep.mubr.bf16.mxu0 0
        %3640 = vmatmul.mubr.bf16.gmra.mrb[0].mxu0 %v3575
        %v3641 = vpop.f32.mrb[0].mxu0
        %v3642 = vadd.f32 0.0, %v3641
        %v3643 = vpop.f32.mrb[0].mxu0
        %v3644 = vpop.f32.mrb[0].mxu0
        %v3645 = vadd.f32 0.0, %v3644
        %v3646 = vpop.f32.mrb[0].mxu0
        %3647 = vmatprep.mubr.bf16.mxu0 0
        %3648 = vmatmul.mubr.bf16.gmra.mrb[0].mxu0 %v3576
        %v3649 = vpop.f32.mrb[0].mxu0
        %v3650 = vadd.f32 0.0, %v3649
        %v3651 = vpop.f32.mrb[0].mxu0
        %v3652 = vpop.f32.mrb[0].mxu0
        %v3653 = vadd.f32 0.0, %v3652
        %v3654 = vpop.f32.mrb[0].mxu0
        %3655 = vmatprep.mubr.bf16.mxu0 0
        %3656 = vmatmul.mubr.bf16.gmra.mrb[0].mxu0 %v3577
        %v3657 = vpop.f32.mrb[0].mxu0
        %v3658 = vadd.f32 0.0, %v3657
        %v3659 = vpop.f32.mrb[0].mxu0
        %v3660 = vpop.f32.mrb[0].mxu0
        %v3661 = vadd.f32 0.0, %v3660
        %v3662 = vpop.f32.mrb[0].mxu0
        %3663 = vmatprep.mubr.bf16.mxu0 0
        %3664 = vmatmul.mubr.bf16.gmra.mrb[0].mxu0 %v3578
        %v3665 = vpop.f32.mrb[0].mxu0
        %v3666 = vadd.f32 0.0, %v3665
        %v3667 = vpop.f32.mrb[0].mxu0
        %v3668 = vpop.f32.mrb[0].mxu0
        %v3669 = vadd.f32 0.0, %v3668
        %v3670 = vpop.f32.mrb[0].mxu0
        %3671 = vmatprep.mubr.bf16.mxu0 0
        %3672 = vmatmul.mubr.bf16.gmra.mrb[0].mxu0 %v3579
        %v3673 = vpop.f32.mrb[0].mxu0
        %v3674 = vadd.f32 0.0, %v3673
        %v3675 = vpop.f32.mrb[0].mxu0
        %v3676 = vpop.f32.mrb[0].mxu0
        %v3677 = vadd.f32 0.0, %v3676
        %v3678 = vpop.f32.mrb[0].mxu0
        %3679 = vmatprep.mubr.bf16.mxu0 0
        %3680 = vmatmul.mubr.bf16.gmra.mrb[0].mxu0 %v3580
        %v3681 = vpop.f32.mrb[0].mxu0
        %v3682 = vadd.f32 0.0, %v3681
        %v3683 = vpop.f32.mrb[0].mxu0
        %v3684 = vpop.f32.mrb[0].mxu0
        %v3685 = vadd.f32 0.0, %v3684
        %v3686 = vpop.f32.mrb[0].mxu0
        %3687 = vmatprep.mubr.bf16.mxu0 0
        %3688 = vmatmul.mubr.bf16.gmra.mrb[0].mxu0 %v3581
        %v3689 = vpop.f32.mrb[0].mxu0
        %v3690 = vadd.f32 0.0, %v3689
        %v3691 = vpop.f32.mrb[0].mxu0
        %v3692 = vpop.f32.mrb[0].mxu0
        %v3693 = vadd.f32 0.0, %v3692
        %v3694 = vpop.f32.mrb[0].mxu0
        %3695 = vmatprep.mubr.bf16.mxu0 0
        %3696 = vmatmul.mubr.bf16.gmra.mrb[0].mxu0 %v3582
        %v3697 = vpop.f32.mrb[0].mxu0
        %v3698 = vadd.f32 0.0, %v3697
        %v3699 = vpop.f32.mrb[0].mxu0
        %v3700 = vpop.f32.mrb[0].mxu0
        %v3701 = vadd.f32 0.0, %v3700
        %v3702 = vpop.f32.mrb[0].mxu0
        %3703 = vmatprep.mubr.bf16.mxu0 0
        %3704 = vmatmul.mubr.bf16.gmra.mrb[0].mxu0 %v3583
        %v3705 = vpop.f32.mrb[0].mxu0
        %v3706 = vadd.f32 0.0, %v3705
        %v3707 = vpop.f32.mrb[0].mxu0
        %v3708 = vpop.f32.mrb[0].mxu0
        %v3709 = vadd.f32 0.0, %v3708
        %v3710 = vpop.f32.mrb[0].mxu0
        %3711 = vmatprep.mubr.bf16.mxu0 0
        %3712 = vmatmul.mubr.bf16.gmra.mrb[0].mxu0 %v3584
        %v3713 = vpop.f32.mrb[0].mxu0
        %v3714 = vadd.f32 0.0, %v3713
        %v3715 = vpop.f32.mrb[0].mxu0
        %v3716 = vpop.f32.mrb[0].mxu0
        %v3717 = vadd.f32 0.0, %v3716
        %v3718 = vpop.f32.mrb[0].mxu0
        %3719 = vmatprep.mubr.bf16.mxu0 0
        %3720 = vmatmul.mubr.bf16.gmra.mrb[0].mxu0 %v3585
        %v3721 = vpop.f32.mrb[0].mxu0
        %v3722 = vadd.f32 0.0, %v3721
        %v3723 = vpop.f32.mrb[0].mxu0
        %v3724 = vpop.f32.mrb[0].mxu0
        %v3725 = vadd.f32 0.0, %v3724
        %v3726 = vpop.f32.mrb[0].mxu0
        %3727 = vmatprep.mubr.bf16.mxu0 0
        %3728 = vmatmul.mubr.bf16.gmra.mrb[0].mxu0 %v3586
        %v3729 = vpop.f32.mrb[0].mxu0
        %v3730 = vadd.f32 0.0, %v3729
        %v3731 = vpop.f32.mrb[0].mxu0
        %v3732 = vpop.f32.mrb[0].mxu0
        %v3733 = vadd.f32 0.0, %v3732
        %v3734 = vpop.f32.mrb[0].mxu0
        %3735 = vmatprep.mubr.bf16.mxu0 0
        %3736 = vmatmul.mubr.bf16.gmra.mrb[0].mxu0 %v3587
        %v3737 = vpop.f32.mrb[0].mxu0
        %v3738 = vadd.f32 0.0, %v3737
        %v3739 = vpop.f32.mrb[0].mxu0
        %v3740 = vpop.f32.mrb[0].mxu0
        %v3741 = vadd.f32 0.0, %v3740
        %v3742 = vpop.f32.mrb[0].mxu0
        %3743 = vmatprep.mubr.bf16.mxu0 0
        %3744 = vmatmul.mubr.bf16.gmra.mrb[0].mxu0 %v3588
        %v3745 = vpop.f32.mrb[0].mxu0
        %v3746 = vadd.f32 0.0, %v3745
        %v3747 = vpop.f32.mrb[0].mxu0
        %v3748 = vpop.f32.mrb[0].mxu0
        %v3749 = vadd.f32 0.0, %v3748
        %v3750 = vpop.f32.mrb[0].mxu0
        %3751 = vmatprep.mubr.bf16.mxu0 0
        %3752 = vmatmul.mubr.bf16.gmra.mrb[0].mxu0 %v3589
        %v3753 = vpop.f32.mrb[0].mxu0
        %v3754 = vadd.f32 0.0, %v3753
        %v3755 = vpop.f32.mrb[0].mxu0
        %v3756 = vpop.f32.mrb[0].mxu0
        %v3757 = vadd.f32 0.0, %v3756
        %v3758 = vpop.f32.mrb[0].mxu0
        %3759 = vmatprep.mubr.bf16.mxu0 0
        %3760 = vmatmul.mubr.bf16.gmra.mrb[0].mxu0 %v3590
        %v3761 = vpop.f32.mrb[0].mxu0
        %v3762 = vadd.f32 0.0, %v3761
        %v3763 = vpop.f32.mrb[0].mxu0
        %v3764 = vpop.f32.mrb[0].mxu0
        %v3765 = vadd.f32 0.0, %v3764
        %v3766 = vpop.f32.mrb[0].mxu0
        %3767 = vdwg.mxu0
        %3768 = vmax.xlane.f32.xlu0 %v3642
        %v3769 = vpop.xlane.xlu0 %3768
        %3770 = vmax.xlane.f32.xlu0 %v3645
        %v3771 = vpop.xlane.xlu0 %3770
        %3772 = vmax.xlane.f32.xlu0 %v3650
        %v3773 = vpop.xlane.xlu0 %3772
        %3774 = vmax.xlane.f32.xlu0 %v3653
        %v3775 = vpop.xlane.xlu0 %3774
        %3776 = vmax.xlane.f32.xlu0 %v3658
        %v3777 = vpop.xlane.xlu0 %3776
        %3778 = vmax.xlane.f32.xlu0 %v3661
        %v3779 = vpop.xlane.xlu0 %3778
        %3780 = vmax.xlane.f32.xlu0 %v3666
        %v3781 = vpop.xlane.xlu0 %3780
        %3782 = vmax.xlane.f32.xlu0 %v3669
        %v3783 = vpop.xlane.xlu0 %3782
        %3784 = vmax.xlane.f32.xlu0 %v3674
        %v3785 = vpop.xlane.xlu0 %3784
        %3786 = vmax.xlane.f32.xlu0 %v3677
        %v3787 = vpop.xlane.xlu0 %3786
        %3788 = vmax.xlane.f32.xlu0 %v3682
        %v3789 = vpop.xlane.xlu0 %3788
        %3790 = vmax.xlane.f32.xlu0 %v3685
        %v3791 = vpop.xlane.xlu0 %3790
        %3792 = vmax.xlane.f32.xlu0 %v3690
        %v3793 = vpop.xlane.xlu0 %3792
        %3794 = vmax.xlane.f32.xlu0 %v3693
        %v3795 = vpop.xlane.xlu0 %3794
        %3796 = vmax.xlane.f32.xlu0 %v3698
        %v3797 = vpop.xlane.xlu0 %3796
        %3798 = vmax.xlane.f32.xlu0 %v3701
        %v3799 = vpop.xlane.xlu0 %3798
        %3800 = vmax.xlane.f32.xlu0 %v3706
        %v3801 = vpop.xlane.xlu0 %3800
        %3802 = vmax.xlane.f32.xlu0 %v3709
        %v3803 = vpop.xlane.xlu0 %3802
        %3804 = vmax.xlane.f32.xlu0 %v3714
        %v3805 = vpop.xlane.xlu0 %3804
        %3806 = vmax.xlane.f32.xlu0 %v3717
        %v3807 = vpop.xlane.xlu0 %3806
        %3808 = vmax.xlane.f32.xlu0 %v3722
        %v3809 = vpop.xlane.xlu0 %3808
        %3810 = vmax.xlane.f32.xlu0 %v3725
        %v3811 = vpop.xlane.xlu0 %3810
        %3812 = vmax.xlane.f32.xlu0 %v3730
        %v3813 = vpop.xlane.xlu0 %3812
        %3814 = vmax.xlane.f32.xlu0 %v3733
        %v3815 = vpop.xlane.xlu0 %3814
        %3816 = vmax.xlane.f32.xlu0 %v3738
        %v3817 = vpop.xlane.xlu0 %3816
        %3818 = vmax.xlane.f32.xlu0 %v3741
        %v3819 = vpop.xlane.xlu0 %3818
        %3820 = vmax.xlane.f32.xlu0 %v3746
        %v3821 = vpop.xlane.xlu0 %3820
        %3822 = vmax.xlane.f32.xlu0 %v3749
        %v3823 = vpop.xlane.xlu0 %3822
        %3824 = vmax.xlane.f32.xlu0 %v3754
        %v3825 = vpop.xlane.xlu0 %3824
        %3826 = vmax.xlane.f32.xlu0 %v3757
        %v3827 = vpop.xlane.xlu0 %3826
        %3828 = vmax.xlane.f32.xlu0 %v3762
        %v3829 = vpop.xlane.xlu0 %3828
        %3830 = vmax.xlane.f32.xlu0 %v3765
        %v3831 = vpop.xlane.xlu0 %3830
        %v3832 = vsub.f32 -inf, %v3769
        %v3833 = vsub.f32 -inf, %v3771
        %v3834 = vsub.f32 -inf, %v3773
        %v3835 = vsub.f32 -inf, %v3775
        %v3836 = vsub.f32 -inf, %v3777
        %v3837 = vsub.f32 -inf, %v3779
        %v3838 = vsub.f32 -inf, %v3781
        %v3839 = vsub.f32 -inf, %v3783
        %v3840 = vsub.f32 -inf, %v3785
        %v3841 = vsub.f32 -inf, %v3787
        %v3842 = vsub.f32 -inf, %v3789
        %v3843 = vsub.f32 -inf, %v3791
        %v3844 = vsub.f32 -inf, %v3793
        %v3845 = vsub.f32 -inf, %v3795
        %v3846 = vsub.f32 -inf, %v3797
        %v3847 = vsub.f32 -inf, %v3799
        %v3848 = vsub.f32 -inf, %v3801
        %v3849 = vsub.f32 -inf, %v3803
        %v3850 = vsub.f32 -inf, %v3805
        %v3851 = vsub.f32 -inf, %v3807
        %v3852 = vsub.f32 -inf, %v3809
        %v3853 = vsub.f32 -inf, %v3811
        %v3854 = vsub.f32 -inf, %v3813
        %v3855 = vsub.f32 -inf, %v3815
        %v3856 = vsub.f32 -inf, %v3817
        %v3857 = vsub.f32 -inf, %v3819
        %v3858 = vsub.f32 -inf, %v3821
        %v3859 = vsub.f32 -inf, %v3823
        %v3860 = vsub.f32 -inf, %v3825
        %v3861 = vsub.f32 -inf, %v3827
        %v3862 = vsub.f32 -inf, %v3829
        %v3863 = vsub.f32 -inf, %v3831
        %v3864 = vmul.f32 %v3832, 1.442695
        %v3865 = vpow.pop %v3864
        %v3866 = vmul.f32 %v3833, 1.442695
        %v3867 = vpow.pop %v3866
        %v3868 = vmul.f32 %v3834, 1.442695
        %v3869 = vpow.pop %v3868
        %v3870 = vmul.f32 %v3835, 1.442695
        %v3871 = vpow.pop %v3870
        %v3872 = vmul.f32 %v3836, 1.442695
        %v3873 = vpow.pop %v3872
        %v3874 = vmul.f32 %v3837, 1.442695
        %v3875 = vpow.pop %v3874
        %v3876 = vmul.f32 %v3838, 1.442695
        %v3877 = vpow.pop %v3876
        %v3878 = vmul.f32 %v3839, 1.442695
        %v3879 = vpow.pop %v3878
        %v3880 = vmul.f32 %v3840, 1.442695
        %v3881 = vpow.pop %v3880
        %v3882 = vmul.f32 %v3841, 1.442695
        %v3883 = vpow.pop %v3882
        %v3884 = vmul.f32 %v3842, 1.442695
        %v3885 = vpow.pop %v3884
        %v3886 = vmul.f32 %v3843, 1.442695
        %v3887 = vpow.pop %v3886
        %v3888 = vmul.f32 %v3844, 1.442695
        %v3889 = vpow.pop %v3888
        %v3890 = vmul.f32 %v3845, 1.442695
        %v3891 = vpow.pop %v3890
        %v3892 = vmul.f32 %v3846, 1.442695
        %v3893 = vpow.pop %v3892
        %v3894 = vmul.f32 %v3847, 1.442695
        %v3895 = vpow.pop %v3894
        %v3896 = vmul.f32 %v3848, 1.442695
        %v3897 = vpow.pop %v3896
        %v3898 = vmul.f32 %v3849, 1.442695
        %v3899 = vpow.pop %v3898
        %v3900 = vmul.f32 %v3850, 1.442695
        %v3901 = vpow.pop %v3900
        %v3902 = vmul.f32 %v3851, 1.442695
        %v3903 = vpow.pop %v3902
        %v3904 = vmul.f32 %v3852, 1.442695
        %v3905 = vpow.pop %v3904
        %v3906 = vmul.f32 %v3853, 1.442695
        %v3907 = vpow.pop %v3906
        %v3908 = vmul.f32 %v3854, 1.442695
        %v3909 = vpow.pop %v3908
        %v3910 = vmul.f32 %v3855, 1.442695
        %v3911 = vpow.pop %v3910
        %v3912 = vmul.f32 %v3856, 1.442695
        %v3913 = vpow.pop %v3912
        %v3914 = vmul.f32 %v3857, 1.442695
        %v3915 = vpow.pop %v3914
        %v3916 = vmul.f32 %v3858, 1.442695
        %v3917 = vpow.pop %v3916
        %v3918 = vmul.f32 %v3859, 1.442695
        %v3919 = vpow.pop %v3918
        %v3920 = vmul.f32 %v3860, 1.442695
        %v3921 = vpow.pop %v3920
        %v3922 = vmul.f32 %v3861, 1.442695
        %v3923 = vpow.pop %v3922
        %v3924 = vmul.f32 %v3862, 1.442695
        %v3925 = vpow.pop %v3924
        %v3926 = vmul.f32 %v3863, 1.442695
        %v3927 = vpow.pop %v3926
        %v3928 = vsub.f32 %v3642, %v3769
        %v3929 = vsub.f32 %v3645, %v3771
        %v3930 = vsub.f32 %v3650, %v3773
        %v3931 = vsub.f32 %v3653, %v3775
        %v3932 = vsub.f32 %v3658, %v3777
        %v3933 = vsub.f32 %v3661, %v3779
        %v3934 = vsub.f32 %v3666, %v3781
        %v3935 = vsub.f32 %v3669, %v3783
        %v3936 = vsub.f32 %v3674, %v3785
        %v3937 = vsub.f32 %v3677, %v3787
        %v3938 = vsub.f32 %v3682, %v3789
        %v3939 = vsub.f32 %v3685, %v3791
        %v3940 = vsub.f32 %v3690, %v3793
        %v3941 = vsub.f32 %v3693, %v3795
        %v3942 = vsub.f32 %v3698, %v3797
        %v3943 = vsub.f32 %v3701, %v3799
        %v3944 = vsub.f32 %v3706, %v3801
        %v3945 = vsub.f32 %v3709, %v3803
        %v3946 = vsub.f32 %v3714, %v3805
        %v3947 = vsub.f32 %v3717, %v3807
        %v3948 = vsub.f32 %v3722, %v3809
        %v3949 = vsub.f32 %v3725, %v3811
        %v3950 = vsub.f32 %v3730, %v3813
        %v3951 = vsub.f32 %v3733, %v3815
        %v3952 = vsub.f32 %v3738, %v3817
        %v3953 = vsub.f32 %v3741, %v3819
        %v3954 = vsub.f32 %v3746, %v3821
        %v3955 = vsub.f32 %v3749, %v3823
        %v3956 = vsub.f32 %v3754, %v3825
        %v3957 = vsub.f32 %v3757, %v3827
        %v3958 = vsub.f32 %v3762, %v3829
        %v3959 = vsub.f32 %v3765, %v3831
        %v3960 = vmul.f32 %v3928, 1.442695
        %v3961 = vpow.pop %v3960
        %v3962 = vmul.f32 %v3929, 1.442695
        %v3963 = vpow.pop %v3962
        %v3964 = vmul.f32 %v3930, 1.442695
        %v3965 = vpow.pop %v3964
        %v3966 = vmul.f32 %v3931, 1.442695
        %v3967 = vpow.pop %v3966
        %v3968 = vmul.f32 %v3932, 1.442695
        %v3969 = vpow.pop %v3968
        %v3970 = vmul.f32 %v3933, 1.442695
        %v3971 = vpow.pop %v3970
        %v3972 = vmul.f32 %v3934, 1.442695
        %v3973 = vpow.pop %v3972
        %v3974 = vmul.f32 %v3935, 1.442695
        %v3975 = vpow.pop %v3974
        %v3976 = vmul.f32 %v3936, 1.442695
        %v3977 = vpow.pop %v3976
        %v3978 = vmul.f32 %v3937, 1.442695
        %v3979 = vpow.pop %v3978
        %v3980 = vmul.f32 %v3938, 1.442695
        %v3981 = vpow.pop %v3980
        %v3982 = vmul.f32 %v3939, 1.442695
        %v3983 = vpow.pop %v3982
        %v3984 = vmul.f32 %v3940, 1.442695
        %v3985 = vpow.pop %v3984
        %v3986 = vmul.f32 %v3941, 1.442695
        %v3987 = vpow.pop %v3986
        %v3988 = vmul.f32 %v3942, 1.442695
        %v3989 = vpow.pop %v3988
        %v3990 = vmul.f32 %v3943, 1.442695
        %v3991 = vpow.pop %v3990
        %v3992 = vmul.f32 %v3944, 1.442695
        %v3993 = vpow.pop %v3992
        %v3994 = vmul.f32 %v3945, 1.442695
        %v3995 = vpow.pop %v3994
        %v3996 = vmul.f32 %v3946, 1.442695
        %v3997 = vpow.pop %v3996
        %v3998 = vmul.f32 %v3947, 1.442695
        %v3999 = vpow.pop %v3998
        %v4000 = vmul.f32 %v3948, 1.442695
        %v4001 = vpow.pop %v4000
        %v4002 = vmul.f32 %v3949, 1.442695
        %v4003 = vpow.pop %v4002
        %v4004 = vmul.f32 %v3950, 1.442695
        %v4005 = vpow.pop %v4004
        %v4006 = vmul.f32 %v3951, 1.442695
        %v4007 = vpow.pop %v4006
        %v4008 = vmul.f32 %v3952, 1.442695
        %v4009 = vpow.pop %v4008
        %v4010 = vmul.f32 %v3953, 1.442695
        %v4011 = vpow.pop %v4010
        %v4012 = vmul.f32 %v3954, 1.442695
        %v4013 = vpow.pop %v4012
        %v4014 = vmul.f32 %v3955, 1.442695
        %v4015 = vpow.pop %v4014
        %v4016 = vmul.f32 %v3956, 1.442695
        %v4017 = vpow.pop %v4016
        %v4018 = vmul.f32 %v3957, 1.442695
        %v4019 = vpow.pop %v4018
        %v4020 = vmul.f32 %v3958, 1.442695
        %v4021 = vpow.pop %v4020
        %v4022 = vmul.f32 %v3959, 1.442695
        %v4023 = vpow.pop %v4022
        %v4024 = vmul.f32 %v3865, 0.0
        %v4025 = vmul.f32 %v3867, 0.0
        %v4026 = vmul.f32 %v3869, 0.0
        %v4027 = vmul.f32 %v3871, 0.0
        %v4028 = vmul.f32 %v3873, 0.0
        %v4029 = vmul.f32 %v3875, 0.0
        %v4030 = vmul.f32 %v3877, 0.0
        %v4031 = vmul.f32 %v3879, 0.0
        %v4032 = vmul.f32 %v3881, 0.0
        %v4033 = vmul.f32 %v3883, 0.0
        %v4034 = vmul.f32 %v3885, 0.0
        %v4035 = vmul.f32 %v3887, 0.0
        %v4036 = vmul.f32 %v3889, 0.0
        %v4037 = vmul.f32 %v3891, 0.0
        %v4038 = vmul.f32 %v3893, 0.0
        %v4039 = vmul.f32 %v3895, 0.0
        %v4040 = vmul.f32 %v3897, 0.0
        %v4041 = vmul.f32 %v3899, 0.0
        %v4042 = vmul.f32 %v3901, 0.0
        %v4043 = vmul.f32 %v3903, 0.0
        %v4044 = vmul.f32 %v3905, 0.0
        %v4045 = vmul.f32 %v3907, 0.0
        %v4046 = vmul.f32 %v3909, 0.0
        %v4047 = vmul.f32 %v3911, 0.0
        %v4048 = vmul.f32 %v3913, 0.0
        %v4049 = vmul.f32 %v3915, 0.0
        %v4050 = vmul.f32 %v3917, 0.0
        %v4051 = vmul.f32 %v3919, 0.0
        %v4052 = vmul.f32 %v3921, 0.0
        %v4053 = vmul.f32 %v3923, 0.0
        %v4054 = vmul.f32 %v3925, 0.0
        %v4055 = vmul.f32 %v3927, 0.0
        %4056 = vadd.xlane.f32.xlu0 %v3961
        %v4057 = vpop.xlane.xlu0 %4056
        %4058 = vadd.xlane.f32.xlu0 %v3963
        %v4059 = vpop.xlane.xlu0 %4058
        %4060 = vadd.xlane.f32.xlu0 %v3965
        %v4061 = vpop.xlane.xlu0 %4060
        %4062 = vadd.xlane.f32.xlu0 %v3967
        %v4063 = vpop.xlane.xlu0 %4062
        %4064 = vadd.xlane.f32.xlu0 %v3969
        %v4065 = vpop.xlane.xlu0 %4064
        %4066 = vadd.xlane.f32.xlu0 %v3971
        %v4067 = vpop.xlane.xlu0 %4066
        %4068 = vadd.xlane.f32.xlu0 %v3973
        %v4069 = vpop.xlane.xlu0 %4068
        %4070 = vadd.xlane.f32.xlu0 %v3975
        %v4071 = vpop.xlane.xlu0 %4070
        %4072 = vadd.xlane.f32.xlu0 %v3977
        %v4073 = vpop.xlane.xlu0 %4072
        %4074 = vadd.xlane.f32.xlu0 %v3979
        %v4075 = vpop.xlane.xlu0 %4074
        %4076 = vadd.xlane.f32.xlu0 %v3981
        %v4077 = vpop.xlane.xlu0 %4076
        %4078 = vadd.xlane.f32.xlu0 %v3983
        %v4079 = vpop.xlane.xlu0 %4078
        %4080 = vadd.xlane.f32.xlu0 %v3985
        %v4081 = vpop.xlane.xlu0 %4080
        %4082 = vadd.xlane.f32.xlu0 %v3987
        %v4083 = vpop.xlane.xlu0 %4082
        %4084 = vadd.xlane.f32.xlu0 %v3989
        %v4085 = vpop.xlane.xlu0 %4084
        %4086 = vadd.xlane.f32.xlu0 %v3991
        %v4087 = vpop.xlane.xlu0 %4086
        %4088 = vadd.xlane.f32.xlu0 %v3993
        %v4089 = vpop.xlane.xlu0 %4088
        %4090 = vadd.xlane.f32.xlu0 %v3995
        %v4091 = vpop.xlane.xlu0 %4090
        %4092 = vadd.xlane.f32.xlu0 %v3997
        %v4093 = vpop.xlane.xlu0 %4092
        %4094 = vadd.xlane.f32.xlu0 %v3999
        %v4095 = vpop.xlane.xlu0 %4094
        %4096 = vadd.xlane.f32.xlu0 %v4001
        %v4097 = vpop.xlane.xlu0 %4096
        %4098 = vadd.xlane.f32.xlu0 %v4003
        %v4099 = vpop.xlane.xlu0 %4098
        %4100 = vadd.xlane.f32.xlu0 %v4005
        %v4101 = vpop.xlane.xlu0 %4100
        %4102 = vadd.xlane.f32.xlu0 %v4007
        %v4103 = vpop.xlane.xlu0 %4102
        %4104 = vadd.xlane.f32.xlu0 %v4009
        %v4105 = vpop.xlane.xlu0 %4104
        %4106 = vadd.xlane.f32.xlu0 %v4011
        %v4107 = vpop.xlane.xlu0 %4106
        %4108 = vadd.xlane.f32.xlu0 %v4013
        %v4109 = vpop.xlane.xlu0 %4108
        %4110 = vadd.xlane.f32.xlu0 %v4015
        %v4111 = vpop.xlane.xlu0 %4110
        %4112 = vadd.xlane.f32.xlu0 %v4017
        %v4113 = vpop.xlane.xlu0 %4112
        %4114 = vadd.xlane.f32.xlu0 %v4019
        %v4115 = vpop.xlane.xlu0 %4114
        %4116 = vadd.xlane.f32.xlu0 %v4021
        %v4117 = vpop.xlane.xlu0 %4116
        %4118 = vadd.xlane.f32.xlu0 %v4023
        %v4119 = vpop.xlane.xlu0 %4118
        %v4120 = vadd.f32 %v4024, %v4057
        %v4121 = vadd.f32 %v4025, %v4059
        %v4122 = vadd.f32 %v4026, %v4061
        %v4123 = vadd.f32 %v4027, %v4063
        %v4124 = vadd.f32 %v4028, %v4065
        %v4125 = vadd.f32 %v4029, %v4067
        %v4126 = vadd.f32 %v4030, %v4069
        %v4127 = vadd.f32 %v4031, %v4071
        %v4128 = vadd.f32 %v4032, %v4073
        %v4129 = vadd.f32 %v4033, %v4075
        %v4130 = vadd.f32 %v4034, %v4077
        %v4131 = vadd.f32 %v4035, %v4079
        %v4132 = vadd.f32 %v4036, %v4081
        %v4133 = vadd.f32 %v4037, %v4083
        %v4134 = vadd.f32 %v4038, %v4085
        %v4135 = vadd.f32 %v4039, %v4087
        %v4136 = vadd.f32 %v4040, %v4089
        %v4137 = vadd.f32 %v4041, %v4091
        %v4138 = vadd.f32 %v4042, %v4093
        %v4139 = vadd.f32 %v4043, %v4095
        %v4140 = vadd.f32 %v4044, %v4097
        %v4141 = vadd.f32 %v4045, %v4099
        %v4142 = vadd.f32 %v4046, %v4101
        %v4143 = vadd.f32 %v4047, %v4103
        %v4144 = vadd.f32 %v4048, %v4105
        %v4145 = vadd.f32 %v4049, %v4107
        %v4146 = vadd.f32 %v4050, %v4109
        %v4147 = vadd.f32 %v4051, %v4111
        %v4148 = vadd.f32 %v4052, %v4113
        %v4149 = vadd.f32 %v4053, %v4115
        %v4150 = vadd.f32 %v4054, %v4117
        %v4151 = vadd.f32 %v4055, %v4119
        %v4152 = vpack.c.bf16 %v3963, %v3961
        %v4153 = vpack.c.bf16 %v3967, %v3965
        %v4154 = vpack.c.bf16 %v3971, %v3969
        %v4155 = vpack.c.bf16 %v3975, %v3973
        %v4156 = vpack.c.bf16 %v3979, %v3977
        %v4157 = vpack.c.bf16 %v3983, %v3981
        %v4158 = vpack.c.bf16 %v3987, %v3985
        %v4159 = vpack.c.bf16 %v3991, %v3989
        %v4160 = vpack.c.bf16 %v3995, %v3993
        %v4161 = vpack.c.bf16 %v3999, %v3997
        %v4162 = vpack.c.bf16 %v4003, %v4001
        %v4163 = vpack.c.bf16 %v4007, %v4005
        %v4164 = vpack.c.bf16 %v4011, %v4009
        %v4165 = vpack.c.bf16 %v4015, %v4013
        %v4166 = vpack.c.bf16 %v4019, %v4017
        %v4167 = vpack.c.bf16 %v4023, %v4021
        %4168 = vmatprep.subr.bf16.mxu0 0
        %4169 = vmatpush1.bf16.msra.mxu0 %v3599
        %4170 = vmatprep.subr.bf16.mxu0 0
        %4171 = vmatpush1.bf16.msra.mxu0 %v3600
        %4172 = vmatprep.subr.bf16.mxu0 0
        %4173 = vmatpush1.bf16.msra.mxu0 %v3601
        %4174 = vmatprep.subr.bf16.mxu0 0
        %4175 = vmatpush1.bf16.msra.mxu0 %v3602
        %4176 = vmatprep.subr.bf16.mxu0 0
        %4177 = vmatpush1.bf16.msra.mxu0 %v3603
        %4178 = vmatprep.subr.bf16.mxu0 0
        %4179 = vmatpush1.bf16.msra.mxu0 %v3604
        %4180 = vmatprep.subr.bf16.mxu0 0
        %4181 = vmatpush1.bf16.msra.mxu0 %v3605
        %4182 = vmatprep.subr.bf16.mxu0 0
        %4183 = vmatpush1.bf16.msra.mxu0 %v3606
        %4184 = vmatprep.subr.bf16.mxu0 0
        %4185 = vmatpush1.bf16.msra.mxu0 0
        %4186 = vmatprep.subr.bf16.mxu0 0
        %4187 = vmatpush1.bf16.msra.mxu0 0
        %4188 = vmatprep.subr.bf16.mxu0 0
        %4189 = vmatpush1.bf16.msra.mxu0 0
        %4190 = vmatprep.subr.bf16.mxu0 0
        %4191 = vmatpush1.bf16.msra.mxu0 0
        %4192 = vmatprep.subr.bf16.mxu0 0
        %4193 = vmatpush1.bf16.msra.mxu0 0
        %4194 = vmatprep.subr.bf16.mxu0 0
        %4195 = vmatpush1.bf16.msra.mxu0 0
        %4196 = vmatprep.subr.bf16.mxu0 0
        %4197 = vmatpush1.bf16.msra.mxu0 0
        %4198 = vmatprep.subr.bf16.mxu0 0
        %4199 = vmatpush1.bf16.msra.mxu0 0
        %4200 = vmatprep.mubr.bf16.mxu0 0
        %4201 = vmatmul.mubr.bf16.gmra.mrb[0].mxu0 %v4152
        %v4202 = vpop.f32.mrb[0].mxu0
        %v4203 = vadd.f32 0.0, %v4202
        %v4204 = vpop.f32.mrb[0].mxu0
        %v4205 = vpop.f32.mrb[0].mxu0
        %v4206 = vadd.f32 0.0, %v4205
        %v4207 = vpop.f32.mrb[0].mxu0
        %4208 = vmatprep.mubr.bf16.mxu0 0
        %4209 = vmatmul.mubr.bf16.gmra.mrb[0].mxu0 %v4153
        %v4210 = vpop.f32.mrb[0].mxu0
        %v4211 = vadd.f32 0.0, %v4210
        %v4212 = vpop.f32.mrb[0].mxu0
        %v4213 = vpop.f32.mrb[0].mxu0
        %v4214 = vadd.f32 0.0, %v4213
        %v4215 = vpop.f32.mrb[0].mxu0
        %4216 = vmatprep.mubr.bf16.mxu0 0
        %4217 = vmatmul.mubr.bf16.gmra.mrb[0].mxu0 %v4154
        %v4218 = vpop.f32.mrb[0].mxu0
        %v4219 = vadd.f32 0.0, %v4218
        %v4220 = vpop.f32.mrb[0].mxu0
        %v4221 = vpop.f32.mrb[0].mxu0
        %v4222 = vadd.f32 0.0, %v4221
        %v4223 = vpop.f32.mrb[0].mxu0
        %4224 = vmatprep.mubr.bf16.mxu0 0
        %4225 = vmatmul.mubr.bf16.gmra.mrb[0].mxu0 %v4155
        %v4226 = vpop.f32.mrb[0].mxu0
        %v4227 = vadd.f32 0.0, %v4226
        %v4228 = vpop.f32.mrb[0].mxu0
        %v4229 = vpop.f32.mrb[0].mxu0
        %v4230 = vadd.f32 0.0, %v4229
        %v4231 = vpop.f32.mrb[0].mxu0
        %4232 = vmatprep.mubr.bf16.mxu0 0
        %4233 = vmatmul.mubr.bf16.gmra.mrb[0].mxu0 %v4156
        %v4234 = vpop.f32.mrb[0].mxu0
        %v4235 = vadd.f32 0.0, %v4234
        %v4236 = vpop.f32.mrb[0].mxu0
        %v4237 = vpop.f32.mrb[0].mxu0
        %v4238 = vadd.f32 0.0, %v4237
        %v4239 = vpop.f32.mrb[0].mxu0
        %4240 = vmatprep.mubr.bf16.mxu0 0
        %4241 = vmatmul.mubr.bf16.gmra.mrb[0].mxu0 %v4157
        %v4242 = vpop.f32.mrb[0].mxu0
        %v4243 = vadd.f32 0.0, %v4242
        %v4244 = vpop.f32.mrb[0].mxu0
        %v4245 = vpop.f32.mrb[0].mxu0
        %v4246 = vadd.f32 0.0, %v4245
        %v4247 = vpop.f32.mrb[0].mxu0
        %4248 = vmatprep.mubr.bf16.mxu0 0
        %4249 = vmatmul.mubr.bf16.gmra.mrb[0].mxu0 %v4158
        %v4250 = vpop.f32.mrb[0].mxu0
        %v4251 = vadd.f32 0.0, %v4250
        %v4252 = vpop.f32.mrb[0].mxu0
        %v4253 = vpop.f32.mrb[0].mxu0
        %v4254 = vadd.f32 0.0, %v4253
        %v4255 = vpop.f32.mrb[0].mxu0
        %4256 = vmatprep.mubr.bf16.mxu0 0
        %4257 = vmatmul.mubr.bf16.gmra.mrb[0].mxu0 %v4159
        %v4258 = vpop.f32.mrb[0].mxu0
        %v4259 = vadd.f32 0.0, %v4258
        %v4260 = vpop.f32.mrb[0].mxu0
        %v4261 = vpop.f32.mrb[0].mxu0
        %v4262 = vadd.f32 0.0, %v4261
        %v4263 = vpop.f32.mrb[0].mxu0
        %4264 = vmatprep.mubr.bf16.mxu0 0
        %4265 = vmatmul.mubr.bf16.gmra.mrb[0].mxu0 %v4160
        %v4266 = vpop.f32.mrb[0].mxu0
        %v4267 = vadd.f32 0.0, %v4266
        %v4268 = vpop.f32.mrb[0].mxu0
        %v4269 = vpop.f32.mrb[0].mxu0
        %v4270 = vadd.f32 0.0, %v4269
        %v4271 = vpop.f32.mrb[0].mxu0
        %4272 = vmatprep.mubr.bf16.mxu0 0
        %4273 = vmatmul.mubr.bf16.gmra.mrb[0].mxu0 %v4161
        %v4274 = vpop.f32.mrb[0].mxu0
        %v4275 = vadd.f32 0.0, %v4274
        %v4276 = vpop.f32.mrb[0].mxu0
        %v4277 = vpop.f32.mrb[0].mxu0
        %v4278 = vadd.f32 0.0, %v4277
        %v4279 = vpop.f32.mrb[0].mxu0
        %4280 = vmatprep.mubr.bf16.mxu0 0
        %4281 = vmatmul.mubr.bf16.gmra.mrb[0].mxu0 %v4162
        %v4282 = vpop.f32.mrb[0].mxu0
        %v4283 = vadd.f32 0.0, %v4282
        %v4284 = vpop.f32.mrb[0].mxu0
        %v4285 = vpop.f32.mrb[0].mxu0
        %v4286 = vadd.f32 0.0, %v4285
        %v4287 = vpop.f32.mrb[0].mxu0
        %4288 = vmatprep.mubr.bf16.mxu0 0
        %4289 = vmatmul.mubr.bf16.gmra.mrb[0].mxu0 %v4163
        %v4290 = vpop.f32.mrb[0].mxu0
        %v4291 = vadd.f32 0.0, %v4290
        %v4292 = vpop.f32.mrb[0].mxu0
        %v4293 = vpop.f32.mrb[0].mxu0
        %v4294 = vadd.f32 0.0, %v4293
        %v4295 = vpop.f32.mrb[0].mxu0
        %4296 = vmatprep.mubr.bf16.mxu0 0
        %4297 = vmatmul.mubr.bf16.gmra.mrb[0].mxu0 %v4164
        %v4298 = vpop.f32.mrb[0].mxu0
        %v4299 = vadd.f32 0.0, %v4298
        %v4300 = vpop.f32.mrb[0].mxu0
        %v4301 = vpop.f32.mrb[0].mxu0
        %v4302 = vadd.f32 0.0, %v4301
        %v4303 = vpop.f32.mrb[0].mxu0
        %4304 = vmatprep.mubr.bf16.mxu0 0
        %4305 = vmatmul.mubr.bf16.gmra.mrb[0].mxu0 %v4165
        %v4306 = vpop.f32.mrb[0].mxu0
        %v4307 = vadd.f32 0.0, %v4306
        %v4308 = vpop.f32.mrb[0].mxu0
        %v4309 = vpop.f32.mrb[0].mxu0
        %v4310 = vadd.f32 0.0, %v4309
        %v4311 = vpop.f32.mrb[0].mxu0
        %4312 = vmatprep.mubr.bf16.mxu0 0
        %4313 = vmatmul.mubr.bf16.gmra.mrb[0].mxu0 %v4166
        %v4314 = vpop.f32.mrb[0].mxu0
        %v4315 = vadd.f32 0.0, %v4314
        %v4316 = vpop.f32.mrb[0].mxu0
        %v4317 = vpop.f32.mrb[0].mxu0
        %v4318 = vadd.f32 0.0, %v4317
        %v4319 = vpop.f32.mrb[0].mxu0
        %4320 = vmatprep.mubr.bf16.mxu0 0
        %4321 = vmatmul.mubr.bf16.gmra.mrb[0].mxu0 %v4167
        %v4322 = vpop.f32.mrb[0].mxu0
        %v4323 = vadd.f32 0.0, %v4322
        %v4324 = vpop.f32.mrb[0].mxu0
        %v4325 = vpop.f32.mrb[0].mxu0
        %v4326 = vadd.f32 0.0, %v4325
        %v4327 = vpop.f32.mrb[0].mxu0
        %4328 = vdwg.mxu0
        %v4329 = vadd.f32 %v4024, %v4203
        %v4330 = vadd.f32 %v4025, %v4206
        %v4331 = vadd.f32 %v4026, %v4211
        %v4332 = vadd.f32 %v4027, %v4214
        %v4333 = vadd.f32 %v4028, %v4219
        %v4334 = vadd.f32 %v4029, %v4222
        %v4335 = vadd.f32 %v4030, %v4227
        %v4336 = vadd.f32 %v4031, %v4230
        %v4337 = vadd.f32 %v4032, %v4235
        %v4338 = vadd.f32 %v4033, %v4238
        %v4339 = vadd.f32 %v4034, %v4243
        %v4340 = vadd.f32 %v4035, %v4246
        %v4341 = vadd.f32 %v4036, %v4251
        %v4342 = vadd.f32 %v4037, %v4254
        %v4343 = vadd.f32 %v4038, %v4259
        %v4344 = vadd.f32 %v4039, %v4262
        %v4345 = vadd.f32 %v4040, %v4267
        %v4346 = vadd.f32 %v4041, %v4270
        %v4347 = vadd.f32 %v4042, %v4275
        %v4348 = vadd.f32 %v4043, %v4278
        %v4349 = vadd.f32 %v4044, %v4283
        %v4350 = vadd.f32 %v4045, %v4286
        %v4351 = vadd.f32 %v4046, %v4291
        %v4352 = vadd.f32 %v4047, %v4294
        %v4353 = vadd.f32 %v4048, %v4299
        %v4354 = vadd.f32 %v4049, %v4302
        %v4355 = vadd.f32 %v4050, %v4307
        %v4356 = vadd.f32 %v4051, %v4310
        %v4357 = vadd.f32 %v4052, %v4315
        %v4358 = vadd.f32 %v4053, %v4318
        %v4359 = vadd.f32 %v4054, %v4323
        %v4360 = vadd.f32 %v4055, %v4326
        %v4361 = vpack.c.bf16 %v3501, %v3497
        %v4362 = vpack.c.bf16 %v3511, %v3507
        %v4363 = vpack.c.bf16 %v3521, %v3517
        %v4364 = vpack.c.bf16 %v3531, %v3527
        %v4365 = vpack.c.bf16 %v3541, %v3537
        %v4366 = vpack.c.bf16 %v3551, %v3547
        %v4367 = vpack.c.bf16 %v3561, %v3557
        %v4368 = vpack.c.bf16 %v3571, %v3567
        %v4369 = vpack.c.bf16 %v3503, %v3499
        %v4370 = vpack.c.bf16 %v3513, %v3509
        %v4371 = vpack.c.bf16 %v3523, %v3519
        %v4372 = vpack.c.bf16 %v3533, %v3529
        %v4373 = vpack.c.bf16 %v3543, %v3539
        %v4374 = vpack.c.bf16 %v3553, %v3549
        %v4375 = vpack.c.bf16 %v3563, %v3559
        %v4376 = vpack.c.bf16 %v3573, %v3569
        %4377 = vmatprep.subr.bf16.mxu0 0
        %4378 = vmatpush1.bf16.xpose.msra.mxu0 %v4361
        %4379 = vmatprep.subr.bf16.mxu0 0
        %4380 = vmatpush1.bf16.xpose.msra.mxu0 %v4362
        %4381 = vmatprep.subr.bf16.mxu0 0
        %4382 = vmatpush1.bf16.xpose.msra.mxu0 %v4363
        %4383 = vmatprep.subr.bf16.mxu0 0
        %4384 = vmatpush1.bf16.xpose.msra.mxu0 %v4364
        %4385 = vmatprep.subr.bf16.mxu0 0
        %4386 = vmatpush1.bf16.xpose.msra.mxu0 %v4365
        %4387 = vmatprep.subr.bf16.mxu0 0
        %4388 = vmatpush1.bf16.xpose.msra.mxu0 %v4366
        %4389 = vmatprep.subr.bf16.mxu0 0
        %4390 = vmatpush1.bf16.xpose.msra.mxu0 %v4367
        %4391 = vmatprep.subr.bf16.mxu0 0
        %4392 = vmatpush1.bf16.xpose.msra.mxu0 %v4368
        %4393 = vmatprep.subr.bf16.mxu0 0
        %4394 = vmatpush1.bf16.xpose.msra.mxu0 0
        %4395 = vmatprep.subr.bf16.mxu0 0
        %4396 = vmatpush1.bf16.xpose.msra.mxu0 0
        %4397 = vmatprep.subr.bf16.mxu0 0
        %4398 = vmatpush1.bf16.xpose.msra.mxu0 0
        %4399 = vmatprep.subr.bf16.mxu0 0
        %4400 = vmatpush1.bf16.xpose.msra.mxu0 0
        %4401 = vmatprep.subr.bf16.mxu0 0
        %4402 = vmatpush1.bf16.xpose.msra.mxu0 0
        %4403 = vmatprep.subr.bf16.mxu0 0
        %4404 = vmatpush1.bf16.xpose.msra.mxu0 0
        %4405 = vmatprep.subr.bf16.mxu0 0
        %4406 = vmatpush1.bf16.xpose.msra.mxu0 0
        %4407 = vmatprep.subr.bf16.mxu0 0
        %4408 = vmatpush1.bf16.xpose.msra.mxu0 0
        %4409 = vmatprep.mubr.bf16.mxu0 0
        %4410 = vmatmul.mubr.bf16.gmra.mrb[0].mxu0 %v3575
        %v4411 = vpop.f32.mrb[0].mxu0
        %v4412 = vadd.f32 0.0, %v4411
        %v4413 = vpop.f32.mrb[0].mxu0
        %v4414 = vpop.f32.mrb[0].mxu0
        %v4415 = vadd.f32 0.0, %v4414
        %v4416 = vpop.f32.mrb[0].mxu0
        %4417 = vmatprep.mubr.bf16.mxu0 0
        %4418 = vmatmul.mubr.bf16.gmra.mrb[0].mxu0 %v3576
        %v4419 = vpop.f32.mrb[0].mxu0
        %v4420 = vadd.f32 0.0, %v4419
        %v4421 = vpop.f32.mrb[0].mxu0
        %v4422 = vpop.f32.mrb[0].mxu0
        %v4423 = vadd.f32 0.0, %v4422
        %v4424 = vpop.f32.mrb[0].mxu0
        %4425 = vmatprep.mubr.bf16.mxu0 0
        %4426 = vmatmul.mubr.bf16.gmra.mrb[0].mxu0 %v3577
        %v4427 = vpop.f32.mrb[0].mxu0
        %v4428 = vadd.f32 0.0, %v4427
        %v4429 = vpop.f32.mrb[0].mxu0
        %v4430 = vpop.f32.mrb[0].mxu0
        %v4431 = vadd.f32 0.0, %v4430
        %v4432 = vpop.f32.mrb[0].mxu0
        %4433 = vmatprep.mubr.bf16.mxu0 0
        %4434 = vmatmul.mubr.bf16.gmra.mrb[0].mxu0 %v3578
        %v4435 = vpop.f32.mrb[0].mxu0
        %v4436 = vadd.f32 0.0, %v4435
        %v4437 = vpop.f32.mrb[0].mxu0
        %v4438 = vpop.f32.mrb[0].mxu0
        %v4439 = vadd.f32 0.0, %v4438
        %v4440 = vpop.f32.mrb[0].mxu0
        %4441 = vmatprep.mubr.bf16.mxu0 0
        %4442 = vmatmul.mubr.bf16.gmra.mrb[0].mxu0 %v3579
        %v4443 = vpop.f32.mrb[0].mxu0
        %v4444 = vadd.f32 0.0, %v4443
        %v4445 = vpop.f32.mrb[0].mxu0
        %v4446 = vpop.f32.mrb[0].mxu0
        %v4447 = vadd.f32 0.0, %v4446
        %v4448 = vpop.f32.mrb[0].mxu0
        %4449 = vmatprep.mubr.bf16.mxu0 0
        %4450 = vmatmul.mubr.bf16.gmra.mrb[0].mxu0 %v3580
        %v4451 = vpop.f32.mrb[0].mxu0
        %v4452 = vadd.f32 0.0, %v4451
        %v4453 = vpop.f32.mrb[0].mxu0
        %v4454 = vpop.f32.mrb[0].mxu0
        %v4455 = vadd.f32 0.0, %v4454
        %v4456 = vpop.f32.mrb[0].mxu0
        %4457 = vmatprep.mubr.bf16.mxu0 0
        %4458 = vmatmul.mubr.bf16.gmra.mrb[0].mxu0 %v3581
        %v4459 = vpop.f32.mrb[0].mxu0
        %v4460 = vadd.f32 0.0, %v4459
        %v4461 = vpop.f32.mrb[0].mxu0
        %v4462 = vpop.f32.mrb[0].mxu0
        %v4463 = vadd.f32 0.0, %v4462
        %v4464 = vpop.f32.mrb[0].mxu0
        %4465 = vmatprep.mubr.bf16.mxu0 0
        %4466 = vmatmul.mubr.bf16.gmra.mrb[0].mxu0 %v3582
        %v4467 = vpop.f32.mrb[0].mxu0
        %v4468 = vadd.f32 0.0, %v4467
        %v4469 = vpop.f32.mrb[0].mxu0
        %v4470 = vpop.f32.mrb[0].mxu0
        %v4471 = vadd.f32 0.0, %v4470
        %v4472 = vpop.f32.mrb[0].mxu0
        %4473 = vmatprep.mubr.bf16.mxu0 0
        %4474 = vmatmul.mubr.bf16.gmra.mrb[0].mxu0 %v3583
        %v4475 = vpop.f32.mrb[0].mxu0
        %v4476 = vadd.f32 0.0, %v4475
        %v4477 = vpop.f32.mrb[0].mxu0
        %v4478 = vpop.f32.mrb[0].mxu0
        %v4479 = vadd.f32 0.0, %v4478
        %v4480 = vpop.f32.mrb[0].mxu0
        %4481 = vmatprep.mubr.bf16.mxu0 0
        %4482 = vmatmul.mubr.bf16.gmra.mrb[0].mxu0 %v3584
        %v4483 = vpop.f32.mrb[0].mxu0
        %v4484 = vadd.f32 0.0, %v4483
        %v4485 = vpop.f32.mrb[0].mxu0
        %v4486 = vpop.f32.mrb[0].mxu0
        %v4487 = vadd.f32 0.0, %v4486
        %v4488 = vpop.f32.mrb[0].mxu0
        %4489 = vmatprep.mubr.bf16.mxu0 0
        %4490 = vmatmul.mubr.bf16.gmra.mrb[0].mxu0 %v3585
        %v4491 = vpop.f32.mrb[0].mxu0
        %v4492 = vadd.f32 0.0, %v4491
        %v4493 = vpop.f32.mrb[0].mxu0
        %v4494 = vpop.f32.mrb[0].mxu0
        %v4495 = vadd.f32 0.0, %v4494
        %v4496 = vpop.f32.mrb[0].mxu0
        %4497 = vmatprep.mubr.bf16.mxu0 0
        %4498 = vmatmul.mubr.bf16.gmra.mrb[0].mxu0 %v3586
        %v4499 = vpop.f32.mrb[0].mxu0
        %v4500 = vadd.f32 0.0, %v4499
        %v4501 = vpop.f32.mrb[0].mxu0
        %v4502 = vpop.f32.mrb[0].mxu0
        %v4503 = vadd.f32 0.0, %v4502
        %v4504 = vpop.f32.mrb[0].mxu0
        %4505 = vmatprep.mubr.bf16.mxu0 0
        %4506 = vmatmul.mubr.bf16.gmra.mrb[0].mxu0 %v3587
        %v4507 = vpop.f32.mrb[0].mxu0
        %v4508 = vadd.f32 0.0, %v4507
        %v4509 = vpop.f32.mrb[0].mxu0
        %v4510 = vpop.f32.mrb[0].mxu0
        %v4511 = vadd.f32 0.0, %v4510
        %v4512 = vpop.f32.mrb[0].mxu0
        %4513 = vmatprep.mubr.bf16.mxu0 0
        %4514 = vmatmul.mubr.bf16.gmra.mrb[0].mxu0 %v3588
        %v4515 = vpop.f32.mrb[0].mxu0
        %v4516 = vadd.f32 0.0, %v4515
        %v4517 = vpop.f32.mrb[0].mxu0
        %v4518 = vpop.f32.mrb[0].mxu0
        %v4519 = vadd.f32 0.0, %v4518
        %v4520 = vpop.f32.mrb[0].mxu0
        %4521 = vmatprep.mubr.bf16.mxu0 0
        %4522 = vmatmul.mubr.bf16.gmra.mrb[0].mxu0 %v3589
        %v4523 = vpop.f32.mrb[0].mxu0
        %v4524 = vadd.f32 0.0, %v4523
        %v4525 = vpop.f32.mrb[0].mxu0
        %v4526 = vpop.f32.mrb[0].mxu0
        %v4527 = vadd.f32 0.0, %v4526
        %v4528 = vpop.f32.mrb[0].mxu0
        %4529 = vmatprep.mubr.bf16.mxu0 0
        %4530 = vmatmul.mubr.bf16.gmra.mrb[0].mxu0 %v3590
        %v4531 = vpop.f32.mrb[0].mxu0
        %v4532 = vadd.f32 0.0, %v4531
        %v4533 = vpop.f32.mrb[0].mxu0
        %v4534 = vpop.f32.mrb[0].mxu0
        %v4535 = vadd.f32 0.0, %v4534
        %v4536 = vpop.f32.mrb[0].mxu0
        %4537 = vdwg.mxu0
        %4538 = vmax.xlane.f32.xlu0 %v4412
        %v4539 = vpop.xlane.xlu0 %4538
        %4540 = vmax.xlane.f32.xlu0 %v4415
        %v4541 = vpop.xlane.xlu0 %4540
        %4542 = vmax.xlane.f32.xlu0 %v4420
        %v4543 = vpop.xlane.xlu0 %4542
        %4544 = vmax.xlane.f32.xlu0 %v4423
        %v4545 = vpop.xlane.xlu0 %4544
        %4546 = vmax.xlane.f32.xlu0 %v4428
        %v4547 = vpop.xlane.xlu0 %4546
        %4548 = vmax.xlane.f32.xlu0 %v4431
        %v4549 = vpop.xlane.xlu0 %4548
        %4550 = vmax.xlane.f32.xlu0 %v4436
        %v4551 = vpop.xlane.xlu0 %4550
        %4552 = vmax.xlane.f32.xlu0 %v4439
        %v4553 = vpop.xlane.xlu0 %4552
        %4554 = vmax.xlane.f32.xlu0 %v4444
        %v4555 = vpop.xlane.xlu0 %4554
        %4556 = vmax.xlane.f32.xlu0 %v4447
        %v4557 = vpop.xlane.xlu0 %4556
        %4558 = vmax.xlane.f32.xlu0 %v4452
        %v4559 = vpop.xlane.xlu0 %4558
        %4560 = vmax.xlane.f32.xlu0 %v4455
        %v4561 = vpop.xlane.xlu0 %4560
        %4562 = vmax.xlane.f32.xlu0 %v4460
        %v4563 = vpop.xlane.xlu0 %4562
        %4564 = vmax.xlane.f32.xlu0 %v4463
        %v4565 = vpop.xlane.xlu0 %4564
        %4566 = vmax.xlane.f32.xlu0 %v4468
        %v4567 = vpop.xlane.xlu0 %4566
        %4568 = vmax.xlane.f32.xlu0 %v4471
        %v4569 = vpop.xlane.xlu0 %4568
        %4570 = vmax.xlane.f32.xlu0 %v4476
        %v4571 = vpop.xlane.xlu0 %4570
        %4572 = vmax.xlane.f32.xlu0 %v4479
        %v4573 = vpop.xlane.xlu0 %4572
        %4574 = vmax.xlane.f32.xlu0 %v4484
        %v4575 = vpop.xlane.xlu0 %4574
        %4576 = vmax.xlane.f32.xlu0 %v4487
        %v4577 = vpop.xlane.xlu0 %4576
        %4578 = vmax.xlane.f32.xlu0 %v4492
        %v4579 = vpop.xlane.xlu0 %4578
        %4580 = vmax.xlane.f32.xlu0 %v4495
        %v4581 = vpop.xlane.xlu0 %4580
        %4582 = vmax.xlane.f32.xlu0 %v4500
        %v4583 = vpop.xlane.xlu0 %4582
        %4584 = vmax.xlane.f32.xlu0 %v4503
        %v4585 = vpop.xlane.xlu0 %4584
        %4586 = vmax.xlane.f32.xlu0 %v4508
        %v4587 = vpop.xlane.xlu0 %4586
        %4588 = vmax.xlane.f32.xlu0 %v4511
        %v4589 = vpop.xlane.xlu0 %4588
        %4590 = vmax.xlane.f32.xlu0 %v4516
        %v4591 = vpop.xlane.xlu0 %4590
        %4592 = vmax.xlane.f32.xlu0 %v4519
        %v4593 = vpop.xlane.xlu0 %4592
        %4594 = vmax.xlane.f32.xlu0 %v4524
        %v4595 = vpop.xlane.xlu0 %4594
        %4596 = vmax.xlane.f32.xlu0 %v4527
        %v4597 = vpop.xlane.xlu0 %4596
        %4598 = vmax.xlane.f32.xlu0 %v4532
        %v4599 = vpop.xlane.xlu0 %4598
        %4600 = vmax.xlane.f32.xlu0 %v4535
        %v4601 = vpop.xlane.xlu0 %4600
        %v4602 = vmax.f32 %v3769, %v4539
        %v4603 = vmax.f32 %v3771, %v4541
        %v4604 = vmax.f32 %v3773, %v4543
        %v4605 = vmax.f32 %v3775, %v4545
        %v4606 = vmax.f32 %v3777, %v4547
        %v4607 = vmax.f32 %v3779, %v4549
        %v4608 = vmax.f32 %v3781, %v4551
        %v4609 = vmax.f32 %v3783, %v4553
        %v4610 = vmax.f32 %v3785, %v4555
        %v4611 = vmax.f32 %v3787, %v4557
        %v4612 = vmax.f32 %v3789, %v4559
        %v4613 = vmax.f32 %v3791, %v4561
        %v4614 = vmax.f32 %v3793, %v4563
        %v4615 = vmax.f32 %v3795, %v4565
        %v4616 = vmax.f32 %v3797, %v4567
        %v4617 = vmax.f32 %v3799, %v4569
        %v4618 = vmax.f32 %v3801, %v4571
        %v4619 = vmax.f32 %v3803, %v4573
        %v4620 = vmax.f32 %v3805, %v4575
        %v4621 = vmax.f32 %v3807, %v4577
        %v4622 = vmax.f32 %v3809, %v4579
        %v4623 = vmax.f32 %v3811, %v4581
        %v4624 = vmax.f32 %v3813, %v4583
        %v4625 = vmax.f32 %v3815, %v4585
        %v4626 = vmax.f32 %v3817, %v4587
        %v4627 = vmax.f32 %v3819, %v4589
        %v4628 = vmax.f32 %v3821, %v4591
        %v4629 = vmax.f32 %v3823, %v4593
        %v4630 = vmax.f32 %v3825, %v4595
        %v4631 = vmax.f32 %v3827, %v4597
        %v4632 = vmax.f32 %v3829, %v4599
        %v4633 = vmax.f32 %v3831, %v4601
        %v4634 = vsub.f32 %v3769, %v4602
        %v4635 = vsub.f32 %v3771, %v4603
        %v4636 = vsub.f32 %v3773, %v4604
        %v4637 = vsub.f32 %v3775, %v4605
        %v4638 = vsub.f32 %v3777, %v4606
        %v4639 = vsub.f32 %v3779, %v4607
        %v4640 = vsub.f32 %v3781, %v4608
        %v4641 = vsub.f32 %v3783, %v4609
        %v4642 = vsub.f32 %v3785, %v4610
        %v4643 = vsub.f32 %v3787, %v4611
        %v4644 = vsub.f32 %v3789, %v4612
        %v4645 = vsub.f32 %v3791, %v4613
        %v4646 = vsub.f32 %v3793, %v4614
        %v4647 = vsub.f32 %v3795, %v4615
        %v4648 = vsub.f32 %v3797, %v4616
        %v4649 = vsub.f32 %v3799, %v4617
        %v4650 = vsub.f32 %v3801, %v4618
        %v4651 = vsub.f32 %v3803, %v4619
        %v4652 = vsub.f32 %v3805, %v4620
        %v4653 = vsub.f32 %v3807, %v4621
        %v4654 = vsub.f32 %v3809, %v4622
        %v4655 = vsub.f32 %v3811, %v4623
        %v4656 = vsub.f32 %v3813, %v4624
        %v4657 = vsub.f32 %v3815, %v4625
        %v4658 = vsub.f32 %v3817, %v4626
        %v4659 = vsub.f32 %v3819, %v4627
        %v4660 = vsub.f32 %v3821, %v4628
        %v4661 = vsub.f32 %v3823, %v4629
        %v4662 = vsub.f32 %v3825, %v4630
        %v4663 = vsub.f32 %v3827, %v4631
        %v4664 = vsub.f32 %v3829, %v4632
        %v4665 = vsub.f32 %v3831, %v4633
        %v4666 = vmul.f32 %v4634, 1.442695
        %v4667 = vpow.pop %v4666
        %v4668 = vmul.f32 %v4635, 1.442695
        %v4669 = vpow.pop %v4668
        %v4670 = vmul.f32 %v4636, 1.442695
        %v4671 = vpow.pop %v4670
        %v4672 = vmul.f32 %v4637, 1.442695
        %v4673 = vpow.pop %v4672
        %v4674 = vmul.f32 %v4638, 1.442695
        %v4675 = vpow.pop %v4674
        %v4676 = vmul.f32 %v4639, 1.442695
        %v4677 = vpow.pop %v4676
        %v4678 = vmul.f32 %v4640, 1.442695
        %v4679 = vpow.pop %v4678
        %v4680 = vmul.f32 %v4641, 1.442695
        %v4681 = vpow.pop %v4680
        %v4682 = vmul.f32 %v4642, 1.442695
        %v4683 = vpow.pop %v4682
        %v4684 = vmul.f32 %v4643, 1.442695
        %v4685 = vpow.pop %v4684
        %v4686 = vmul.f32 %v4644, 1.442695
        %v4687 = vpow.pop %v4686
        %v4688 = vmul.f32 %v4645, 1.442695
        %v4689 = vpow.pop %v4688
        %v4690 = vmul.f32 %v4646, 1.442695
        %v4691 = vpow.pop %v4690
        %v4692 = vmul.f32 %v4647, 1.442695
        %v4693 = vpow.pop %v4692
        %v4694 = vmul.f32 %v4648, 1.442695
        %v4695 = vpow.pop %v4694
        %v4696 = vmul.f32 %v4649, 1.442695
        %v4697 = vpow.pop %v4696
        %v4698 = vmul.f32 %v4650, 1.442695
        %v4699 = vpow.pop %v4698
        %v4700 = vmul.f32 %v4651, 1.442695
        %v4701 = vpow.pop %v4700
        %v4702 = vmul.f32 %v4652, 1.442695
        %v4703 = vpow.pop %v4702
        %v4704 = vmul.f32 %v4653, 1.442695
        %v4705 = vpow.pop %v4704
        %v4706 = vmul.f32 %v4654, 1.442695
        %v4707 = vpow.pop %v4706
        %v4708 = vmul.f32 %v4655, 1.442695
        %v4709 = vpow.pop %v4708
        %v4710 = vmul.f32 %v4656, 1.442695
        %v4711 = vpow.pop %v4710
        %v4712 = vmul.f32 %v4657, 1.442695
        %v4713 = vpow.pop %v4712
        %v4714 = vmul.f32 %v4658, 1.442695
        %v4715 = vpow.pop %v4714
        %v4716 = vmul.f32 %v4659, 1.442695
        %v4717 = vpow.pop %v4716
        %v4718 = vmul.f32 %v4660, 1.442695
        %v4719 = vpow.pop %v4718
        %v4720 = vmul.f32 %v4661, 1.442695
        %v4721 = vpow.pop %v4720
        %v4722 = vmul.f32 %v4662, 1.442695
        %v4723 = vpow.pop %v4722
        %v4724 = vmul.f32 %v4663, 1.442695
        %v4725 = vpow.pop %v4724
        %v4726 = vmul.f32 %v4664, 1.442695
        %v4727 = vpow.pop %v4726
        %v4728 = vmul.f32 %v4665, 1.442695
        %v4729 = vpow.pop %v4728
        %v4730 = vsub.f32 %v4412, %v4602
        %v4731 = vsub.f32 %v4415, %v4603
        %v4732 = vsub.f32 %v4420, %v4604
        %v4733 = vsub.f32 %v4423, %v4605
        %v4734 = vsub.f32 %v4428, %v4606
        %v4735 = vsub.f32 %v4431, %v4607
        %v4736 = vsub.f32 %v4436, %v4608
        %v4737 = vsub.f32 %v4439, %v4609
        %v4738 = vsub.f32 %v4444, %v4610
        %v4739 = vsub.f32 %v4447, %v4611
        %v4740 = vsub.f32 %v4452, %v4612
        %v4741 = vsub.f32 %v4455, %v4613
        %v4742 = vsub.f32 %v4460, %v4614
        %v4743 = vsub.f32 %v4463, %v4615
        %v4744 = vsub.f32 %v4468, %v4616
        %v4745 = vsub.f32 %v4471, %v4617
        %v4746 = vsub.f32 %v4476, %v4618
        %v4747 = vsub.f32 %v4479, %v4619
        %v4748 = vsub.f32 %v4484, %v4620
        %v4749 = vsub.f32 %v4487, %v4621
        %v4750 = vsub.f32 %v4492, %v4622
        %v4751 = vsub.f32 %v4495, %v4623
        %v4752 = vsub.f32 %v4500, %v4624
        %v4753 = vsub.f32 %v4503, %v4625
        %v4754 = vsub.f32 %v4508, %v4626
        %v4755 = vsub.f32 %v4511, %v4627
        %v4756 = vsub.f32 %v4516, %v4628
        %v4757 = vsub.f32 %v4519, %v4629
        %v4758 = vsub.f32 %v4524, %v4630
        %v4759 = vsub.f32 %v4527, %v4631
        %v4760 = vsub.f32 %v4532, %v4632
        %v4761 = vsub.f32 %v4535, %v4633
        %v4762 = vmul.f32 %v4730, 1.442695
        %v4763 = vpow.pop %v4762
        %v4764 = vmul.f32 %v4731, 1.442695
        %v4765 = vpow.pop %v4764
        %v4766 = vmul.f32 %v4732, 1.442695
        %v4767 = vpow.pop %v4766
        %v4768 = vmul.f32 %v4733, 1.442695
        %v4769 = vpow.pop %v4768
        %v4770 = vmul.f32 %v4734, 1.442695
        %v4771 = vpow.pop %v4770
        %v4772 = vmul.f32 %v4735, 1.442695
        %v4773 = vpow.pop %v4772
        %v4774 = vmul.f32 %v4736, 1.442695
        %v4775 = vpow.pop %v4774
        %v4776 = vmul.f32 %v4737, 1.442695
        %v4777 = vpow.pop %v4776
        %v4778 = vmul.f32 %v4738, 1.442695
        %v4779 = vpow.pop %v4778
        %v4780 = vmul.f32 %v4739, 1.442695
        %v4781 = vpow.pop %v4780
        %v4782 = vmul.f32 %v4740, 1.442695
        %v4783 = vpow.pop %v4782
        %v4784 = vmul.f32 %v4741, 1.442695
        %v4785 = vpow.pop %v4784
        %v4786 = vmul.f32 %v4742, 1.442695
        %v4787 = vpow.pop %v4786
        %v4788 = vmul.f32 %v4743, 1.442695
        %v4789 = vpow.pop %v4788
        %v4790 = vmul.f32 %v4744, 1.442695
        %v4791 = vpow.pop %v4790
        %v4792 = vmul.f32 %v4745, 1.442695
        %v4793 = vpow.pop %v4792
        %v4794 = vmul.f32 %v4746, 1.442695
        %v4795 = vpow.pop %v4794
        %v4796 = vmul.f32 %v4747, 1.442695
        %v4797 = vpow.pop %v4796
        %v4798 = vmul.f32 %v4748, 1.442695
        %v4799 = vpow.pop %v4798
        %v4800 = vmul.f32 %v4749, 1.442695
        %v4801 = vpow.pop %v4800
        %v4802 = vmul.f32 %v4750, 1.442695
        %v4803 = vpow.pop %v4802
        %v4804 = vmul.f32 %v4751, 1.442695
        %v4805 = vpow.pop %v4804
        %v4806 = vmul.f32 %v4752, 1.442695
        %v4807 = vpow.pop %v4806
        %v4808 = vmul.f32 %v4753, 1.442695
        %v4809 = vpow.pop %v4808
        %v4810 = vmul.f32 %v4754, 1.442695
        %v4811 = vpow.pop %v4810
        %v4812 = vmul.f32 %v4755, 1.442695
        %v4813 = vpow.pop %v4812
        %v4814 = vmul.f32 %v4756, 1.442695
        %v4815 = vpow.pop %v4814
        %v4816 = vmul.f32 %v4757, 1.442695
        %v4817 = vpow.pop %v4816
        %v4818 = vmul.f32 %v4758, 1.442695
        %v4819 = vpow.pop %v4818
        %v4820 = vmul.f32 %v4759, 1.442695
        %v4821 = vpow.pop %v4820
        %v4822 = vmul.f32 %v4760, 1.442695
        %v4823 = vpow.pop %v4822
        %v4824 = vmul.f32 %v4761, 1.442695
        %v4825 = vpow.pop %v4824
        %v4826 = vmul.f32 %v4667, %v4120
        %v4827 = vmul.f32 %v4669, %v4121
        %v4828 = vmul.f32 %v4671, %v4122
        %v4829 = vmul.f32 %v4673, %v4123
        %v4830 = vmul.f32 %v4675, %v4124
        %v4831 = vmul.f32 %v4677, %v4125
        %v4832 = vmul.f32 %v4679, %v4126
        %v4833 = vmul.f32 %v4681, %v4127
        %v4834 = vmul.f32 %v4683, %v4128
        %v4835 = vmul.f32 %v4685, %v4129
        %v4836 = vmul.f32 %v4687, %v4130
        %v4837 = vmul.f32 %v4689, %v4131
        %v4838 = vmul.f32 %v4691, %v4132
        %v4839 = vmul.f32 %v4693, %v4133
        %v4840 = vmul.f32 %v4695, %v4134
        %v4841 = vmul.f32 %v4697, %v4135
        %v4842 = vmul.f32 %v4699, %v4136
        %v4843 = vmul.f32 %v4701, %v4137
        %v4844 = vmul.f32 %v4703, %v4138
        %v4845 = vmul.f32 %v4705, %v4139
        %v4846 = vmul.f32 %v4707, %v4140
        %v4847 = vmul.f32 %v4709, %v4141
        %v4848 = vmul.f32 %v4711, %v4142
        %v4849 = vmul.f32 %v4713, %v4143
        %v4850 = vmul.f32 %v4715, %v4144
        %v4851 = vmul.f32 %v4717, %v4145
        %v4852 = vmul.f32 %v4719, %v4146
        %v4853 = vmul.f32 %v4721, %v4147
        %v4854 = vmul.f32 %v4723, %v4148
        %v4855 = vmul.f32 %v4725, %v4149
        %v4856 = vmul.f32 %v4727, %v4150
        %v4857 = vmul.f32 %v4729, %v4151
        %4858 = vadd.xlane.f32.xlu0 %v4763
        %v4859 = vpop.xlane.xlu0 %4858
        %4860 = vadd.xlane.f32.xlu0 %v4765
        %v4861 = vpop.xlane.xlu0 %4860
        %4862 = vadd.xlane.f32.xlu0 %v4767
        %v4863 = vpop.xlane.xlu0 %4862
        %4864 = vadd.xlane.f32.xlu0 %v4769
        %v4865 = vpop.xlane.xlu0 %4864
        %4866 = vadd.xlane.f32.xlu0 %v4771
        %v4867 = vpop.xlane.xlu0 %4866
        %4868 = vadd.xlane.f32.xlu0 %v4773
        %v4869 = vpop.xlane.xlu0 %4868
        %4870 = vadd.xlane.f32.xlu0 %v4775
        %v4871 = vpop.xlane.xlu0 %4870
        %4872 = vadd.xlane.f32.xlu0 %v4777
        %v4873 = vpop.xlane.xlu0 %4872
        %4874 = vadd.xlane.f32.xlu0 %v4779
        %v4875 = vpop.xlane.xlu0 %4874
        %4876 = vadd.xlane.f32.xlu0 %v4781
        %v4877 = vpop.xlane.xlu0 %4876
        %4878 = vadd.xlane.f32.xlu0 %v4783
        %v4879 = vpop.xlane.xlu0 %4878
        %4880 = vadd.xlane.f32.xlu0 %v4785
        %v4881 = vpop.xlane.xlu0 %4880
        %4882 = vadd.xlane.f32.xlu0 %v4787
        %v4883 = vpop.xlane.xlu0 %4882
        %4884 = vadd.xlane.f32.xlu0 %v4789
        %v4885 = vpop.xlane.xlu0 %4884
        %4886 = vadd.xlane.f32.xlu0 %v4791
        %v4887 = vpop.xlane.xlu0 %4886
        %4888 = vadd.xlane.f32.xlu0 %v4793
        %v4889 = vpop.xlane.xlu0 %4888
        %4890 = vadd.xlane.f32.xlu0 %v4795
        %v4891 = vpop.xlane.xlu0 %4890
        %4892 = vadd.xlane.f32.xlu0 %v4797
        %v4893 = vpop.xlane.xlu0 %4892
        %4894 = vadd.xlane.f32.xlu0 %v4799
        %v4895 = vpop.xlane.xlu0 %4894
        %4896 = vadd.xlane.f32.xlu0 %v4801
        %v4897 = vpop.xlane.xlu0 %4896
        %4898 = vadd.xlane.f32.xlu0 %v4803
        %v4899 = vpop.xlane.xlu0 %4898
        %4900 = vadd.xlane.f32.xlu0 %v4805
        %v4901 = vpop.xlane.xlu0 %4900
        %4902 = vadd.xlane.f32.xlu0 %v4807
        %v4903 = vpop.xlane.xlu0 %4902
        %4904 = vadd.xlane.f32.xlu0 %v4809
        %v4905 = vpop.xlane.xlu0 %4904
        %4906 = vadd.xlane.f32.xlu0 %v4811
        %v4907 = vpop.xlane.xlu0 %4906
        %4908 = vadd.xlane.f32.xlu0 %v4813
        %v4909 = vpop.xlane.xlu0 %4908
        %4910 = vadd.xlane.f32.xlu0 %v4815
        %v4911 = vpop.xlane.xlu0 %4910
        %4912 = vadd.xlane.f32.xlu0 %v4817
        %v4913 = vpop.xlane.xlu0 %4912
        %4914 = vadd.xlane.f32.xlu0 %v4819
        %v4915 = vpop.xlane.xlu0 %4914
        %4916 = vadd.xlane.f32.xlu0 %v4821
        %v4917 = vpop.xlane.xlu0 %4916
        %4918 = vadd.xlane.f32.xlu0 %v4823
        %v4919 = vpop.xlane.xlu0 %4918
        %4920 = vadd.xlane.f32.xlu0 %v4825
        %v4921 = vpop.xlane.xlu0 %4920
        %v4922 = vadd.f32 %v4826, %v4859
        %v4923 = vadd.f32 %v4827, %v4861
        %v4924 = vadd.f32 %v4828, %v4863
        %v4925 = vadd.f32 %v4829, %v4865
        %v4926 = vadd.f32 %v4830, %v4867
        %v4927 = vadd.f32 %v4831, %v4869
        %v4928 = vadd.f32 %v4832, %v4871
        %v4929 = vadd.f32 %v4833, %v4873
        %v4930 = vadd.f32 %v4834, %v4875
        %v4931 = vadd.f32 %v4835, %v4877
        %v4932 = vadd.f32 %v4836, %v4879
        %v4933 = vadd.f32 %v4837, %v4881
        %v4934 = vadd.f32 %v4838, %v4883
        %v4935 = vadd.f32 %v4839, %v4885
        %v4936 = vadd.f32 %v4840, %v4887
        %v4937 = vadd.f32 %v4841, %v4889
        %v4938 = vadd.f32 %v4842, %v4891
        %v4939 = vadd.f32 %v4843, %v4893
        %v4940 = vadd.f32 %v4844, %v4895
        %v4941 = vadd.f32 %v4845, %v4897
        %v4942 = vadd.f32 %v4846, %v4899
        %v4943 = vadd.f32 %v4847, %v4901
        %v4944 = vadd.f32 %v4848, %v4903
        %v4945 = vadd.f32 %v4849, %v4905
        %v4946 = vadd.f32 %v4850, %v4907
        %v4947 = vadd.f32 %v4851, %v4909
        %v4948 = vadd.f32 %v4852, %v4911
        %v4949 = vadd.f32 %v4853, %v4913
        %v4950 = vadd.f32 %v4854, %v4915
        %v4951 = vadd.f32 %v4855, %v4917
        %v4952 = vadd.f32 %v4856, %v4919
        %v4953 = vadd.f32 %v4857, %v4921
        %v4954 = vmul.f32 %v4667, %v4329
        %v4955 = vmul.f32 %v4669, %v4330
        %v4956 = vmul.f32 %v4671, %v4331
        %v4957 = vmul.f32 %v4673, %v4332
        %v4958 = vmul.f32 %v4675, %v4333
        %v4959 = vmul.f32 %v4677, %v4334
        %v4960 = vmul.f32 %v4679, %v4335
        %v4961 = vmul.f32 %v4681, %v4336
        %v4962 = vmul.f32 %v4683, %v4337
        %v4963 = vmul.f32 %v4685, %v4338
        %v4964 = vmul.f32 %v4687, %v4339
        %v4965 = vmul.f32 %v4689, %v4340
        %v4966 = vmul.f32 %v4691, %v4341
        %v4967 = vmul.f32 %v4693, %v4342
        %v4968 = vmul.f32 %v4695, %v4343
        %v4969 = vmul.f32 %v4697, %v4344
        %v4970 = vmul.f32 %v4699, %v4345
        %v4971 = vmul.f32 %v4701, %v4346
        %v4972 = vmul.f32 %v4703, %v4347
        %v4973 = vmul.f32 %v4705, %v4348
        %v4974 = vmul.f32 %v4707, %v4349
        %v4975 = vmul.f32 %v4709, %v4350
        %v4976 = vmul.f32 %v4711, %v4351
        %v4977 = vmul.f32 %v4713, %v4352
        %v4978 = vmul.f32 %v4715, %v4353
        %v4979 = vmul.f32 %v4717, %v4354
        %v4980 = vmul.f32 %v4719, %v4355
        %v4981 = vmul.f32 %v4721, %v4356
        %v4982 = vmul.f32 %v4723, %v4357
        %v4983 = vmul.f32 %v4725, %v4358
        %v4984 = vmul.f32 %v4727, %v4359
        %v4985 = vmul.f32 %v4729, %v4360
        %v4986 = vpack.c.bf16 %v4765, %v4763
        %v4987 = vpack.c.bf16 %v4769, %v4767
        %v4988 = vpack.c.bf16 %v4773, %v4771
        %v4989 = vpack.c.bf16 %v4777, %v4775
        %v4990 = vpack.c.bf16 %v4781, %v4779
        %v4991 = vpack.c.bf16 %v4785, %v4783
        %v4992 = vpack.c.bf16 %v4789, %v4787
        %v4993 = vpack.c.bf16 %v4793, %v4791
        %v4994 = vpack.c.bf16 %v4797, %v4795
        %v4995 = vpack.c.bf16 %v4801, %v4799
        %v4996 = vpack.c.bf16 %v4805, %v4803
        %v4997 = vpack.c.bf16 %v4809, %v4807
        %v4998 = vpack.c.bf16 %v4813, %v4811
        %v4999 = vpack.c.bf16 %v4817, %v4815
        %v5000 = vpack.c.bf16 %v4821, %v4819
        %v5001 = vpack.c.bf16 %v4825, %v4823
        %5002 = vmatprep.subr.bf16.mxu0 0
        %5003 = vmatpush1.bf16.msra.mxu0 %v4369
        %5004 = vmatprep.subr.bf16.mxu0 0
        %5005 = vmatpush1.bf16.msra.mxu0 %v4370
        %5006 = vmatprep.subr.bf16.mxu0 0
        %5007 = vmatpush1.bf16.msra.mxu0 %v4371
        %5008 = vmatprep.subr.bf16.mxu0 0
        %5009 = vmatpush1.bf16.msra.mxu0 %v4372
        %5010 = vmatprep.subr.bf16.mxu0 0
        %5011 = vmatpush1.bf16.msra.mxu0 %v4373
        %5012 = vmatprep.subr.bf16.mxu0 0
        %5013 = vmatpush1.bf16.msra.mxu0 %v4374
        %5014 = vmatprep.subr.bf16.mxu0 0
        %5015 = vmatpush1.bf16.msra.mxu0 %v4375
        %5016 = vmatprep.subr.bf16.mxu0 0
        %5017 = vmatpush1.bf16.msra.mxu0 %v4376
        %5018 = vmatprep.subr.bf16.mxu0 0
        %5019 = vmatpush1.bf16.msra.mxu0 0
        %5020 = vmatprep.subr.bf16.mxu0 0
        %5021 = vmatpush1.bf16.msra.mxu0 0
        %5022 = vmatprep.subr.bf16.mxu0 0
        %5023 = vmatpush1.bf16.msra.mxu0 0
        %5024 = vmatprep.subr.bf16.mxu0 0
        %5025 = vmatpush1.bf16.msra.mxu0 0
        %5026 = vmatprep.subr.bf16.mxu0 0
        %5027 = vmatpush1.bf16.msra.mxu0 0
        %5028 = vmatprep.subr.bf16.mxu0 0
        %5029 = vmatpush1.bf16.msra.mxu0 0
        %5030 = vmatprep.subr.bf16.mxu0 0
        %5031 = vmatpush1.bf16.msra.mxu0 0
        %5032 = vmatprep.subr.bf16.mxu0 0
        %5033 = vmatpush1.bf16.msra.mxu0 0
        %5034 = vmatprep.mubr.bf16.mxu0 0
        %5035 = vmatmul.mubr.bf16.gmra.mrb[0].mxu0 %v4986
        %v5036 = vpop.f32.mrb[0].mxu0
        %v5037 = vadd.f32 0.0, %v5036
        %v5038 = vpop.f32.mrb[0].mxu0
        %v5039 = vpop.f32.mrb[0].mxu0
        %v5040 = vadd.f32 0.0, %v5039
        %v5041 = vpop.f32.mrb[0].mxu0
        %5042 = vmatprep.mubr.bf16.mxu0 0
        %5043 = vmatmul.mubr.bf16.gmra.mrb[0].mxu0 %v4987
        %v5044 = vpop.f32.mrb[0].mxu0
        %v5045 = vadd.f32 0.0, %v5044
        %v5046 = vpop.f32.mrb[0].mxu0
        %v5047 = vpop.f32.mrb[0].mxu0
        %v5048 = vadd.f32 0.0, %v5047
        %v5049 = vpop.f32.mrb[0].mxu0
        %5050 = vmatprep.mubr.bf16.mxu0 0
        %5051 = vmatmul.mubr.bf16.gmra.mrb[0].mxu0 %v4988
        %v5052 = vpop.f32.mrb[0].mxu0
        %v5053 = vadd.f32 0.0, %v5052
        %v5054 = vpop.f32.mrb[0].mxu0
        %v5055 = vpop.f32.mrb[0].mxu0
        %v5056 = vadd.f32 0.0, %v5055
        %v5057 = vpop.f32.mrb[0].mxu0
        %5058 = vmatprep.mubr.bf16.mxu0 0
        %5059 = vmatmul.mubr.bf16.gmra.mrb[0].mxu0 %v4989
        %v5060 = vpop.f32.mrb[0].mxu0
        %v5061 = vadd.f32 0.0, %v5060
        %v5062 = vpop.f32.mrb[0].mxu0
        %v5063 = vpop.f32.mrb[0].mxu0
        %v5064 = vadd.f32 0.0, %v5063
        %v5065 = vpop.f32.mrb[0].mxu0
        %5066 = vmatprep.mubr.bf16.mxu0 0
        %5067 = vmatmul.mubr.bf16.gmra.mrb[0].mxu0 %v4990
        %v5068 = vpop.f32.mrb[0].mxu0
        %v5069 = vadd.f32 0.0, %v5068
        %v5070 = vpop.f32.mrb[0].mxu0
        %v5071 = vpop.f32.mrb[0].mxu0
        %v5072 = vadd.f32 0.0, %v5071
        %v5073 = vpop.f32.mrb[0].mxu0
        %5074 = vmatprep.mubr.bf16.mxu0 0
        %5075 = vmatmul.mubr.bf16.gmra.mrb[0].mxu0 %v4991
        %v5076 = vpop.f32.mrb[0].mxu0
        %v5077 = vadd.f32 0.0, %v5076
        %v5078 = vpop.f32.mrb[0].mxu0
        %v5079 = vpop.f32.mrb[0].mxu0
        %v5080 = vadd.f32 0.0, %v5079
        %v5081 = vpop.f32.mrb[0].mxu0
        %5082 = vmatprep.mubr.bf16.mxu0 0
        %5083 = vmatmul.mubr.bf16.gmra.mrb[0].mxu0 %v4992
        %v5084 = vpop.f32.mrb[0].mxu0
        %v5085 = vadd.f32 0.0, %v5084
        %v5086 = vpop.f32.mrb[0].mxu0
        %v5087 = vpop.f32.mrb[0].mxu0
        %v5088 = vadd.f32 0.0, %v5087
        %v5089 = vpop.f32.mrb[0].mxu0
        %5090 = vmatprep.mubr.bf16.mxu0 0
        %5091 = vmatmul.mubr.bf16.gmra.mrb[0].mxu0 %v4993
        %v5092 = vpop.f32.mrb[0].mxu0
        %v5093 = vadd.f32 0.0, %v5092
        %v5094 = vpop.f32.mrb[0].mxu0
        %v5095 = vpop.f32.mrb[0].mxu0
        %v5096 = vadd.f32 0.0, %v5095
        %v5097 = vpop.f32.mrb[0].mxu0
        %5098 = vmatprep.mubr.bf16.mxu0 0
        %5099 = vmatmul.mubr.bf16.gmra.mrb[0].mxu0 %v4994
        %v5100 = vpop.f32.mrb[0].mxu0
        %v5101 = vadd.f32 0.0, %v5100
        %v5102 = vpop.f32.mrb[0].mxu0
        %v5103 = vpop.f32.mrb[0].mxu0
        %v5104 = vadd.f32 0.0, %v5103
        %v5105 = vpop.f32.mrb[0].mxu0
        %5106 = vmatprep.mubr.bf16.mxu0 0
        %5107 = vmatmul.mubr.bf16.gmra.mrb[0].mxu0 %v4995
        %v5108 = vpop.f32.mrb[0].mxu0
        %v5109 = vadd.f32 0.0, %v5108
        %v5110 = vpop.f32.mrb[0].mxu0
        %v5111 = vpop.f32.mrb[0].mxu0
        %v5112 = vadd.f32 0.0, %v5111
        %v5113 = vpop.f32.mrb[0].mxu0
        %5114 = vmatprep.mubr.bf16.mxu0 0
        %5115 = vmatmul.mubr.bf16.gmra.mrb[0].mxu0 %v4996
        %v5116 = vpop.f32.mrb[0].mxu0
        %v5117 = vadd.f32 0.0, %v5116
        %v5118 = vpop.f32.mrb[0].mxu0
        %v5119 = vpop.f32.mrb[0].mxu0
        %v5120 = vadd.f32 0.0, %v5119
        %v5121 = vpop.f32.mrb[0].mxu0
        %5122 = vmatprep.mubr.bf16.mxu0 0
        %5123 = vmatmul.mubr.bf16.gmra.mrb[0].mxu0 %v4997
        %v5124 = vpop.f32.mrb[0].mxu0
        %v5125 = vadd.f32 0.0, %v5124
        %v5126 = vpop.f32.mrb[0].mxu0
        %v5127 = vpop.f32.mrb[0].mxu0
        %v5128 = vadd.f32 0.0, %v5127
        %v5129 = vpop.f32.mrb[0].mxu0
        %5130 = vmatprep.mubr.bf16.mxu0 0
        %5131 = vmatmul.mubr.bf16.gmra.mrb[0].mxu0 %v4998
        %v5132 = vpop.f32.mrb[0].mxu0
        %v5133 = vadd.f32 0.0, %v5132
        %v5134 = vpop.f32.mrb[0].mxu0
        %v5135 = vpop.f32.mrb[0].mxu0
        %v5136 = vadd.f32 0.0, %v5135
        %v5137 = vpop.f32.mrb[0].mxu0
        %5138 = vmatprep.mubr.bf16.mxu0 0
        %5139 = vmatmul.mubr.bf16.gmra.mrb[0].mxu0 %v4999
        %v5140 = vpop.f32.mrb[0].mxu0
        %v5141 = vadd.f32 0.0, %v5140
        %v5142 = vpop.f32.mrb[0].mxu0
        %v5143 = vpop.f32.mrb[0].mxu0
        %v5144 = vadd.f32 0.0, %v5143
        %v5145 = vpop.f32.mrb[0].mxu0
        %5146 = vmatprep.mubr.bf16.mxu0 0
        %5147 = vmatmul.mubr.bf16.gmra.mrb[0].mxu0 %v5000
        %v5148 = vpop.f32.mrb[0].mxu0
        %v5149 = vadd.f32 0.0, %v5148
        %v5150 = vpop.f32.mrb[0].mxu0
        %v5151 = vpop.f32.mrb[0].mxu0
        %v5152 = vadd.f32 0.0, %v5151
        %v5153 = vpop.f32.mrb[0].mxu0
        %5154 = vmatprep.mubr.bf16.mxu0 0
        %5155 = vmatmul.mubr.bf16.gmra.mrb[0].mxu0 %v5001
        %v5156 = vpop.f32.mrb[0].mxu0
        %v5157 = vadd.f32 0.0, %v5156
        %v5158 = vpop.f32.mrb[0].mxu0
        %v5159 = vpop.f32.mrb[0].mxu0
        %v5160 = vadd.f32 0.0, %v5159
        %v5161 = vpop.f32.mrb[0].mxu0
        %5162 = vdwg.mxu0
        %v5163 = vadd.f32 %v4954, %v5037
        %v5164 = vadd.f32 %v4955, %v5040
        %v5165 = vadd.f32 %v4956, %v5045
        %v5166 = vadd.f32 %v4957, %v5048
        %v5167 = vadd.f32 %v4958, %v5053
        %v5168 = vadd.f32 %v4959, %v5056
        %v5169 = vadd.f32 %v4960, %v5061
        %v5170 = vadd.f32 %v4961, %v5064
        %v5171 = vadd.f32 %v4962, %v5069
        %v5172 = vadd.f32 %v4963, %v5072
        %v5173 = vadd.f32 %v4964, %v5077
        %v5174 = vadd.f32 %v4965, %v5080
        %v5175 = vadd.f32 %v4966, %v5085
        %v5176 = vadd.f32 %v4967, %v5088
        %v5177 = vadd.f32 %v4968, %v5093
        %v5178 = vadd.f32 %v4969, %v5096
        %v5179 = vadd.f32 %v4970, %v5101
        %v5180 = vadd.f32 %v4971, %v5104
        %v5181 = vadd.f32 %v4972, %v5109
        %v5182 = vadd.f32 %v4973, %v5112
        %v5183 = vadd.f32 %v4974, %v5117
        %v5184 = vadd.f32 %v4975, %v5120
        %v5185 = vadd.f32 %v4976, %v5125
        %v5186 = vadd.f32 %v4977, %v5128
        %v5187 = vadd.f32 %v4978, %v5133
        %v5188 = vadd.f32 %v4979, %v5136
        %v5189 = vadd.f32 %v4980, %v5141
        %v5190 = vadd.f32 %v4981, %v5144
        %v5191 = vadd.f32 %v4982, %v5149
        %v5192 = vadd.f32 %v4983, %v5152
        %v5193 = vadd.f32 %v4984, %v5157
        %v5194 = vadd.f32 %v4985, %v5160
        %v5195 = vrcp.pop %v4922
        %v5196 = vrcp.pop %v4923
        %v5197 = vrcp.pop %v4924
        %v5198 = vrcp.pop %v4925
        %v5199 = vrcp.pop %v4926
        %v5200 = vrcp.pop %v4927
        %v5201 = vrcp.pop %v4928
        %v5202 = vrcp.pop %v4929
        %v5203 = vrcp.pop %v4930
        %v5204 = vrcp.pop %v4931
        %v5205 = vrcp.pop %v4932
        %v5206 = vrcp.pop %v4933
        %v5207 = vrcp.pop %v4934
        %v5208 = vrcp.pop %v4935
        %v5209 = vrcp.pop %v4936
        %v5210 = vrcp.pop %v4937
        %v5211 = vrcp.pop %v4938
        %v5212 = vrcp.pop %v4939
        %v5213 = vrcp.pop %v4940
        %v5214 = vrcp.pop %v4941
        %v5215 = vrcp.pop %v4942
        %v5216 = vrcp.pop %v4943
        %v5217 = vrcp.pop %v4944
        %v5218 = vrcp.pop %v4945
        %v5219 = vrcp.pop %v4946
        %v5220 = vrcp.pop %v4947
        %v5221 = vrcp.pop %v4948
        %v5222 = vrcp.pop %v4949
        %v5223 = vrcp.pop %v4950
        %v5224 = vrcp.pop %v4951
        %v5225 = vrcp.pop %v4952
        %v5226 = vrcp.pop %v4953
        %v5227 = vmul.f32 %v5163, %v5195
        %v5228 = vmul.f32 %v5164, %v5196
        %v5229 = vmul.f32 %v5165, %v5197
        %v5230 = vmul.f32 %v5166, %v5198
        %v5231 = vmul.f32 %v5167, %v5199
        %v5232 = vmul.f32 %v5168, %v5200
        %v5233 = vmul.f32 %v5169, %v5201
        %v5234 = vmul.f32 %v5170, %v5202
        %v5235 = vmul.f32 %v5171, %v5203
        %v5236 = vmul.f32 %v5172, %v5204
        %v5237 = vmul.f32 %v5173, %v5205
        %v5238 = vmul.f32 %v5174, %v5206
        %v5239 = vmul.f32 %v5175, %v5207
        %v5240 = vmul.f32 %v5176, %v5208
        %v5241 = vmul.f32 %v5177, %v5209
        %v5242 = vmul.f32 %v5178, %v5210
        %v5243 = vmul.f32 %v5179, %v5211
        %v5244 = vmul.f32 %v5180, %v5212
        %v5245 = vmul.f32 %v5181, %v5213
        %v5246 = vmul.f32 %v5182, %v5214
        %v5247 = vmul.f32 %v5183, %v5215
        %v5248 = vmul.f32 %v5184, %v5216
        %v5249 = vmul.f32 %v5185, %v5217
        %v5250 = vmul.f32 %v5186, %v5218
        %v5251 = vmul.f32 %v5187, %v5219
        %v5252 = vmul.f32 %v5188, %v5220
        %v5253 = vmul.f32 %v5189, %v5221
        %v5254 = vmul.f32 %v5190, %v5222
        %v5255 = vmul.f32 %v5191, %v5223
        %v5256 = vmul.f32 %v5192, %v5224
        %v5257 = vmul.f32 %v5193, %v5225
        %v5258 = vmul.f32 %v5194, %v5226
        %v5259 = vadd.f32 %v5227, %v5228
        %v5260 = vadd.f32 %v5259, %v5229
        %v5261 = vadd.f32 %v5260, %v5230
        %v5262 = vadd.f32 %v5261, %v5231
        %v5263 = vadd.f32 %v5262, %v5232
        %v5264 = vadd.f32 %v5263, %v5233
        %v5265 = vadd.f32 %v5264, %v5234
        %v5266 = vadd.f32 %v5265, %v5235
        %v5267 = vadd.f32 %v5266, %v5236
        %v5268 = vadd.f32 %v5267, %v5237
        %v5269 = vadd.f32 %v5268, %v5238
        %v5270 = vadd.f32 %v5269, %v5239
        %v5271 = vadd.f32 %v5270, %v5240
        %v5272 = vadd.f32 %v5271, %v5241
        %v5273 = vadd.f32 %v5272, %v5242
        %v5274 = vadd.f32 %v5273, %v5243
        %v5275 = vadd.f32 %v5274, %v5244
        %v5276 = vadd.f32 %v5275, %v5245
        %v5277 = vadd.f32 %v5276, %v5246
        %v5278 = vadd.f32 %v5277, %v5247
        %v5279 = vadd.f32 %v5278, %v5248
        %v5280 = vadd.f32 %v5279, %v5249
        %v5281 = vadd.f32 %v5280, %v5250
        %v5282 = vadd.f32 %v5281, %v5251
        %v5283 = vadd.f32 %v5282, %v5252
        %v5284 = vadd.f32 %v5283, %v5253
        %v5285 = vadd.f32 %v5284, %v5254
        %v5286 = vadd.f32 %v5285, %v5255
        %v5287 = vadd.f32 %v5286, %v5256
        %v5288 = vadd.f32 %v5287, %v5257
        %v5289 = vadd.f32 %v5288, %v5258
        %v5290 = vrot.slane %v5289, 4
        %v5291 = vadd.f32 %v5289, %v5290
        %v5292 = vrot.slane %v5291, 2
        %v5293 = vadd.f32 %v5291, %v5292
        %v5294 = vrot.slane %v5293, 1
        %v5295 = vadd.f32 %v5293, %v5294
        %v5296 = vmul.f32 %v5295, 0.00390625
        %v5297 = vsub.f32 %v5227, %v5296
        %v5298 = vsub.f32 %v5228, %v5296
        %v5299 = vsub.f32 %v5229, %v5296
        %v5300 = vsub.f32 %v5230, %v5296
        %v5301 = vsub.f32 %v5231, %v5296
        %v5302 = vsub.f32 %v5232, %v5296
        %v5303 = vsub.f32 %v5233, %v5296
        %v5304 = vsub.f32 %v5234, %v5296
        %v5305 = vsub.f32 %v5235, %v5296
        %v5306 = vsub.f32 %v5236, %v5296
        %v5307 = vsub.f32 %v5237, %v5296
        %v5308 = vsub.f32 %v5238, %v5296
        %v5309 = vsub.f32 %v5239, %v5296
        %v5310 = vsub.f32 %v5240, %v5296
        %v5311 = vsub.f32 %v5241, %v5296
        %v5312 = vsub.f32 %v5242, %v5296
        %v5313 = vsub.f32 %v5243, %v5296
        %v5314 = vsub.f32 %v5244, %v5296
        %v5315 = vsub.f32 %v5245, %v5296
        %v5316 = vsub.f32 %v5246, %v5296
        %v5317 = vsub.f32 %v5247, %v5296
        %v5318 = vsub.f32 %v5248, %v5296
        %v5319 = vsub.f32 %v5249, %v5296
        %v5320 = vsub.f32 %v5250, %v5296
        %v5321 = vsub.f32 %v5251, %v5296
        %v5322 = vsub.f32 %v5252, %v5296
        %v5323 = vsub.f32 %v5253, %v5296
        %v5324 = vsub.f32 %v5254, %v5296
        %v5325 = vsub.f32 %v5255, %v5296
        %v5326 = vsub.f32 %v5256, %v5296
        %v5327 = vsub.f32 %v5257, %v5296
        %v5328 = vsub.f32 %v5258, %v5296
        %v5329 = vmul.f32 %v5297, %v5297
        %v5330 = vmul.f32 %v5298, %v5298
        %v5331 = vmul.f32 %v5299, %v5299
        %v5332 = vmul.f32 %v5300, %v5300
        %v5333 = vmul.f32 %v5301, %v5301
        %v5334 = vmul.f32 %v5302, %v5302
        %v5335 = vmul.f32 %v5303, %v5303
        %v5336 = vmul.f32 %v5304, %v5304
        %v5337 = vmul.f32 %v5305, %v5305
        %v5338 = vmul.f32 %v5306, %v5306
        %v5339 = vmul.f32 %v5307, %v5307
        %v5340 = vmul.f32 %v5308, %v5308
        %v5341 = vmul.f32 %v5309, %v5309
        %v5342 = vmul.f32 %v5310, %v5310
        %v5343 = vmul.f32 %v5311, %v5311
        %v5344 = vmul.f32 %v5312, %v5312
        %v5345 = vmul.f32 %v5313, %v5313
        %v5346 = vmul.f32 %v5314, %v5314
        %v5347 = vmul.f32 %v5315, %v5315
        %v5348 = vmul.f32 %v5316, %v5316
        %v5349 = vmul.f32 %v5317, %v5317
        %v5350 = vmul.f32 %v5318, %v5318
        %v5351 = vmul.f32 %v5319, %v5319
        %v5352 = vmul.f32 %v5320, %v5320
        %v5353 = vmul.f32 %v5321, %v5321
        %v5354 = vmul.f32 %v5322, %v5322
        %v5355 = vmul.f32 %v5323, %v5323
        %v5356 = vmul.f32 %v5324, %v5324
        %v5357 = vmul.f32 %v5325, %v5325
        %v5358 = vmul.f32 %v5326, %v5326
        %v5359 = vmul.f32 %v5327, %v5327
        %v5360 = vmul.f32 %v5328, %v5328
        %v5361 = vadd.f32 %v5329, %v5330
        %v5362 = vadd.f32 %v5361, %v5331
        %v5363 = vadd.f32 %v5362, %v5332
        %v5364 = vadd.f32 %v5363, %v5333
        %v5365 = vadd.f32 %v5364, %v5334
        %v5366 = vadd.f32 %v5365, %v5335
        %v5367 = vadd.f32 %v5366, %v5336
        %v5368 = vadd.f32 %v5367, %v5337
        %v5369 = vadd.f32 %v5368, %v5338
        %v5370 = vadd.f32 %v5369, %v5339
        %v5371 = vadd.f32 %v5370, %v5340
        %v5372 = vadd.f32 %v5371, %v5341
        %v5373 = vadd.f32 %v5372, %v5342
        %v5374 = vadd.f32 %v5373, %v5343
        %v5375 = vadd.f32 %v5374, %v5344
        %v5376 = vadd.f32 %v5375, %v5345
        %v5377 = vadd.f32 %v5376, %v5346
        %v5378 = vadd.f32 %v5377, %v5347
        %v5379 = vadd.f32 %v5378, %v5348
        %v5380 = vadd.f32 %v5379, %v5349
        %v5381 = vadd.f32 %v5380, %v5350
        %v5382 = vadd.f32 %v5381, %v5351
        %v5383 = vadd.f32 %v5382, %v5352
        %v5384 = vadd.f32 %v5383, %v5353
        %v5385 = vadd.f32 %v5384, %v5354
        %v5386 = vadd.f32 %v5385, %v5355
        %v5387 = vadd.f32 %v5386, %v5356
        %v5388 = vadd.f32 %v5387, %v5357
        %v5389 = vadd.f32 %v5388, %v5358
        %v5390 = vadd.f32 %v5389, %v5359
        %v5391 = vadd.f32 %v5390, %v5360
        %v5392 = vrot.slane %v5391, 4
        %v5393 = vadd.f32 %v5391, %v5392
        %v5394 = vrot.slane %v5393, 2
        %v5395 = vadd.f32 %v5393, %v5394
        %v5396 = vrot.slane %v5395, 1
        %v5397 = vadd.f32 %v5395, %v5396
        %v5398 = vmul.f32 %v5397, 0.003921569
        %v5399 = vadd.f32 %v5398, 1e-05
        %v5400 = vrsqrt.pop %v5399
        %v5401 = vmul.f32 %v5399, %v5400
        %vm5402 = vcmp.eq.f32.partialorder %v5399, inf
        %v5403 = vsel %vm5402, %v5399, %v5401
        %vm5404 = vcmp.eq.f32.partialorder %v5399, 0.0
        %v5405 = vand.u32 %v5399, 2147483648
        %v5406 = vsel %vm5404, %v5405, %v5403
        %v5407 = vadd.f32 %v2946, %v2947
        %v5408 = vadd.f32 %v5407, %v2948
        %v5409 = vadd.f32 %v5408, %v2949
        %v5410 = vadd.f32 %v5409, %v2950
        %v5411 = vadd.f32 %v5410, %v2951
        %v5412 = vadd.f32 %v5411, %v2952
        %v5413 = vadd.f32 %v5412, %v2953
        %v5414 = vadd.f32 %v5413, %v2954
        %v5415 = vadd.f32 %v5414, %v2955
        %v5416 = vadd.f32 %v5415, %v2956
        %v5417 = vadd.f32 %v5416, %v2957
        %v5418 = vadd.f32 %v5417, %v2958
        %v5419 = vadd.f32 %v5418, %v2959
        %v5420 = vadd.f32 %v5419, %v2960
        %v5421 = vadd.f32 %v5420, %v2961
        %v5422 = vadd.f32 %v5421, %v2962
        %v5423 = vadd.f32 %v5422, %v2963
        %v5424 = vadd.f32 %v5423, %v2964
        %v5425 = vadd.f32 %v5424, %v2965
        %v5426 = vadd.f32 %v5425, %v2966
        %v5427 = vadd.f32 %v5426, %v2967
        %v5428 = vadd.f32 %v5427, %v2968
        %v5429 = vadd.f32 %v5428, %v2969
        %v5430 = vadd.f32 %v5429, %v2970
        %v5431 = vadd.f32 %v5430, %v2971
        %v5432 = vadd.f32 %v5431, %v2972
        %v5433 = vadd.f32 %v5432, %v2973
        %v5434 = vadd.f32 %v5433, %v2974
        %v5435 = vadd.f32 %v5434, %v2975
        %v5436 = vadd.f32 %v5435, %v2976
        %v5437 = vadd.f32 %v5436, %v2977
        %v5438 = vrot.slane %v5437, 4
        %v5439 = vadd.f32 %v5437, %v5438
        %v5440 = vrot.slane %v5439, 2
        %v5441 = vadd.f32 %v5439, %v5440
        %v5442 = vrot.slane %v5441, 1
        %v5443 = vadd.f32 %v5441, %v5442
        %v5444 = vmul.f32 %v5443, 0.00390625
        %v5445 = vsub.f32 %v2946, %v5444
        %v5446 = vsub.f32 %v2947, %v5444
        %v5447 = vsub.f32 %v2948, %v5444
        %v5448 = vsub.f32 %v2949, %v5444
        %v5449 = vsub.f32 %v2950, %v5444
        %v5450 = vsub.f32 %v2951, %v5444
        %v5451 = vsub.f32 %v2952, %v5444
        %v5452 = vsub.f32 %v2953, %v5444
        %v5453 = vsub.f32 %v2954, %v5444
        %v5454 = vsub.f32 %v2955, %v5444
        %v5455 = vsub.f32 %v2956, %v5444
        %v5456 = vsub.f32 %v2957, %v5444
        %v5457 = vsub.f32 %v2958, %v5444
        %v5458 = vsub.f32 %v2959, %v5444
        %v5459 = vsub.f32 %v2960, %v5444
        %v5460 = vsub.f32 %v2961, %v5444
        %v5461 = vsub.f32 %v2962, %v5444
        %v5462 = vsub.f32 %v2963, %v5444
        %v5463 = vsub.f32 %v2964, %v5444
        %v5464 = vsub.f32 %v2965, %v5444
        %v5465 = vsub.f32 %v2966, %v5444
        %v5466 = vsub.f32 %v2967, %v5444
        %v5467 = vsub.f32 %v2968, %v5444
        %v5468 = vsub.f32 %v2969, %v5444
        %v5469 = vsub.f32 %v2970, %v5444
        %v5470 = vsub.f32 %v2971, %v5444
        %v5471 = vsub.f32 %v2972, %v5444
        %v5472 = vsub.f32 %v2973, %v5444
        %v5473 = vsub.f32 %v2974, %v5444
        %v5474 = vsub.f32 %v2975, %v5444
        %v5475 = vsub.f32 %v2976, %v5444
        %v5476 = vsub.f32 %v2977, %v5444
        %v5477 = vmul.f32 %v5445, %v5445
        %v5478 = vmul.f32 %v5446, %v5446
        %v5479 = vmul.f32 %v5447, %v5447
        %v5480 = vmul.f32 %v5448, %v5448
        %v5481 = vmul.f32 %v5449, %v5449
        %v5482 = vmul.f32 %v5450, %v5450
        %v5483 = vmul.f32 %v5451, %v5451
        %v5484 = vmul.f32 %v5452, %v5452
        %v5485 = vmul.f32 %v5453, %v5453
        %v5486 = vmul.f32 %v5454, %v5454
        %v5487 = vmul.f32 %v5455, %v5455
        %v5488 = vmul.f32 %v5456, %v5456
        %v5489 = vmul.f32 %v5457, %v5457
        %v5490 = vmul.f32 %v5458, %v5458
        %v5491 = vmul.f32 %v5459, %v5459
        %v5492 = vmul.f32 %v5460, %v5460
        %v5493 = vmul.f32 %v5461, %v5461
        %v5494 = vmul.f32 %v5462, %v5462
        %v5495 = vmul.f32 %v5463, %v5463
        %v5496 = vmul.f32 %v5464, %v5464
        %v5497 = vmul.f32 %v5465, %v5465
        %v5498 = vmul.f32 %v5466, %v5466
        %v5499 = vmul.f32 %v5467, %v5467
        %v5500 = vmul.f32 %v5468, %v5468
        %v5501 = vmul.f32 %v5469, %v5469
        %v5502 = vmul.f32 %v5470, %v5470
        %v5503 = vmul.f32 %v5471, %v5471
        %v5504 = vmul.f32 %v5472, %v5472
        %v5505 = vmul.f32 %v5473, %v5473
        %v5506 = vmul.f32 %v5474, %v5474
        %v5507 = vmul.f32 %v5475, %v5475
        %v5508 = vmul.f32 %v5476, %v5476
        %v5509 = vadd.f32 %v5477, %v5478
        %v5510 = vadd.f32 %v5509, %v5479
        %v5511 = vadd.f32 %v5510, %v5480
        %v5512 = vadd.f32 %v5511, %v5481
        %v5513 = vadd.f32 %v5512, %v5482
        %v5514 = vadd.f32 %v5513, %v5483
        %v5515 = vadd.f32 %v5514, %v5484
        %v5516 = vadd.f32 %v5515, %v5485
        %v5517 = vadd.f32 %v5516, %v5486
        %v5518 = vadd.f32 %v5517, %v5487
        %v5519 = vadd.f32 %v5518, %v5488
        %v5520 = vadd.f32 %v5519, %v5489
        %v5521 = vadd.f32 %v5520, %v5490
        %v5522 = vadd.f32 %v5521, %v5491
        %v5523 = vadd.f32 %v5522, %v5492
        %v5524 = vadd.f32 %v5523, %v5493
        %v5525 = vadd.f32 %v5524, %v5494
        %v5526 = vadd.f32 %v5525, %v5495
        %v5527 = vadd.f32 %v5526, %v5496
        %v5528 = vadd.f32 %v5527, %v5497
        %v5529 = vadd.f32 %v5528, %v5498
        %v5530 = vadd.f32 %v5529, %v5499
        %v5531 = vadd.f32 %v5530, %v5500
        %v5532 = vadd.f32 %v5531, %v5501
        %v5533 = vadd.f32 %v5532, %v5502
        %v5534 = vadd.f32 %v5533, %v5503
        %v5535 = vadd.f32 %v5534, %v5504
        %v5536 = vadd.f32 %v5535, %v5505
        %v5537 = vadd.f32 %v5536, %v5506
        %v5538 = vadd.f32 %v5537, %v5507
        %v5539 = vadd.f32 %v5538, %v5508
        %v5540 = vrot.slane %v5539, 4
        %v5541 = vadd.f32 %v5539, %v5540
        %v5542 = vrot.slane %v5541, 2
        %v5543 = vadd.f32 %v5541, %v5542
        %v5544 = vrot.slane %v5543, 1
        %v5545 = vadd.f32 %v5543, %v5544
        %v5546 = vmul.f32 %v5545, 0.003921569
        %v5547 = vadd.f32 %v5546, 1e-05
        %v5548 = vrsqrt.pop %v5547
        %v5549 = vmul.f32 %v5547, %v5548
        %vm5550 = vcmp.eq.f32.partialorder %v5547, inf
        %v5551 = vsel %vm5550, %v5547, %v5549
        %vm5552 = vcmp.eq.f32.partialorder %v5547, 0.0
        %v5553 = vand.u32 %v5547, 2147483648
        %v5554 = vsel %vm5552, %v5553, %v5551
        %s5555 = sld [smem:[#allocation3]]
        %v5556 = vrcp.pop %v5554
        %v5557 = vmul.f32 %v5406, %v5556
        %v5558 = vmul.f32 %v2946, %v5557
        %v5559 = vmul.f32 %v2947, %v5557
        %v5560 = vmul.f32 %v2948, %v5557
        %v5561 = vmul.f32 %v2949, %v5557
        %v5562 = vmul.f32 %v2950, %v5557
        %v5563 = vmul.f32 %v2951, %v5557
        %v5564 = vmul.f32 %v2952, %v5557
        %v5565 = vmul.f32 %v2953, %v5557
        %v5566 = vmul.f32 %v2954, %v5557
        %v5567 = vmul.f32 %v2955, %v5557
        %v5568 = vmul.f32 %v2956, %v5557
        %v5569 = vmul.f32 %v2957, %v5557
        %v5570 = vmul.f32 %v2958, %v5557
        %v5571 = vmul.f32 %v2959, %v5557
        %v5572 = vmul.f32 %v2960, %v5557
        %v5573 = vmul.f32 %v2961, %v5557
        %v5574 = vmul.f32 %v2962, %v5557
        %v5575 = vmul.f32 %v2963, %v5557
        %v5576 = vmul.f32 %v2964, %v5557
        %v5577 = vmul.f32 %v2965, %v5557
        %v5578 = vmul.f32 %v2966, %v5557
        %v5579 = vmul.f32 %v2967, %v5557
        %v5580 = vmul.f32 %v2968, %v5557
        %v5581 = vmul.f32 %v2969, %v5557
        %v5582 = vmul.f32 %v2970, %v5557
        %v5583 = vmul.f32 %v2971, %v5557
        %v5584 = vmul.f32 %v2972, %v5557
        %v5585 = vmul.f32 %v2973, %v5557
        %v5586 = vmul.f32 %v2974, %v5557
        %v5587 = vmul.f32 %v2975, %v5557
        %v5588 = vmul.f32 %v2976, %v5557
        %v5589 = vmul.f32 %v2977, %v5557
        %v5590 = vstv %s5555
        %v5591 = vmul.f32 %v5590, %v5558
        %v5592 = vmul.f32 %v5590, %v5559
        %v5593 = vmul.f32 %v5590, %v5560
        %v5594 = vmul.f32 %v5590, %v5561
        %v5595 = vmul.f32 %v5590, %v5562
        %v5596 = vmul.f32 %v5590, %v5563
        %v5597 = vmul.f32 %v5590, %v5564
        %v5598 = vmul.f32 %v5590, %v5565
        %v5599 = vmul.f32 %v5590, %v5566
        %v5600 = vmul.f32 %v5590, %v5567
        %v5601 = vmul.f32 %v5590, %v5568
        %v5602 = vmul.f32 %v5590, %v5569
        %v5603 = vmul.f32 %v5590, %v5570
        %v5604 = vmul.f32 %v5590, %v5571
        %v5605 = vmul.f32 %v5590, %v5572
        %v5606 = vmul.f32 %v5590, %v5573
        %v5607 = vmul.f32 %v5590, %v5574
        %v5608 = vmul.f32 %v5590, %v5575
        %v5609 = vmul.f32 %v5590, %v5576
        %v5610 = vmul.f32 %v5590, %v5577
        %v5611 = vmul.f32 %v5590, %v5578
        %v5612 = vmul.f32 %v5590, %v5579
        %v5613 = vmul.f32 %v5590, %v5580
        %v5614 = vmul.f32 %v5590, %v5581
        %v5615 = vmul.f32 %v5590, %v5582
        %v5616 = vmul.f32 %v5590, %v5583
        %v5617 = vmul.f32 %v5590, %v5584
        %v5618 = vmul.f32 %v5590, %v5585
        %v5619 = vmul.f32 %v5590, %v5586
        %v5620 = vmul.f32 %v5590, %v5587
        %v5621 = vmul.f32 %v5590, %v5588
        %v5622 = vmul.f32 %v5590, %v5589
        %v5623 = vadd.f32 %v2722, %v5591
        %v5624 = vadd.f32 %v2723, %v5592
        %v5625 = vadd.f32 %v2724, %v5593
        %v5626 = vadd.f32 %v2725, %v5594
        %v5627 = vadd.f32 %v2726, %v5595
        %v5628 = vadd.f32 %v2727, %v5596
        %v5629 = vadd.f32 %v2728, %v5597
        %v5630 = vadd.f32 %v2729, %v5598
        %v5631 = vadd.f32 %v2730, %v5599
        %v5632 = vadd.f32 %v2731, %v5600
        %v5633 = vadd.f32 %v2732, %v5601
        %v5634 = vadd.f32 %v2733, %v5602
        %v5635 = vadd.f32 %v2734, %v5603
        %v5636 = vadd.f32 %v2735, %v5604
        %v5637 = vadd.f32 %v2736, %v5605
        %v5638 = vadd.f32 %v2737, %v5606
        %v5639 = vadd.f32 %v2738, %v5607
        %v5640 = vadd.f32 %v2739, %v5608
        %v5641 = vadd.f32 %v2740, %v5609
        %v5642 = vadd.f32 %v2741, %v5610
        %v5643 = vadd.f32 %v2742, %v5611
        %v5644 = vadd.f32 %v2743, %v5612
        %v5645 = vadd.f32 %v2744, %v5613
        %v5646 = vadd.f32 %v2745, %v5614
        %v5647 = vadd.f32 %v2746, %v5615
        %v5648 = vadd.f32 %v2747, %v5616
        %v5649 = vadd.f32 %v2748, %v5617
        %v5650 = vadd.f32 %v2749, %v5618
        %v5651 = vadd.f32 %v2750, %v5619
        %v5652 = vadd.f32 %v2751, %v5620
        %v5653 = vadd.f32 %v2752, %v5621
        %v5654 = vadd.f32 %v2753, %v5622
        %5655 = vst [vmem:[%s413] sm:$0xff] %v5623
        %5656 = vst [vmem:[%s413 + $0x8] sm:$0xff] %v5624
        %5657 = vst [vmem:[%s413 + $0x10] sm:$0xff] %v5625
        %5658 = vst [vmem:[%s413 + $0x18] sm:$0xff] %v5626
        %5659 = vst [vmem:[%s413 + $0x20] sm:$0xff] %v5627
        %5660 = vst [vmem:[%s413 + $0x28] sm:$0xff] %v5628
        %5661 = vst [vmem:[%s413 + $0x30] sm:$0xff] %v5629
        %5662 = vst [vmem:[%s413 + $0x38] sm:$0xff] %v5630
        %5663 = vst [vmem:[%s413 + $0x40] sm:$0xff] %v5631
        %5664 = vst [vmem:[%s413 + $0x48] sm:$0xff] %v5632
        %5665 = vst [vmem:[%s413 + $0x50] sm:$0xff] %v5633
        %5666 = vst [vmem:[%s413 + $0x58] sm:$0xff] %v5634
        %5667 = vst [vmem:[%s413 + $0x60] sm:$0xff] %v5635
        %5668 = vst [vmem:[%s413 + $0x68] sm:$0xff] %v5636
        %5669 = vst [vmem:[%s413 + $0x70] sm:$0xff] %v5637
        %5670 = vst [vmem:[%s413 + $0x78] sm:$0xff] %v5638
        %5671 = vst [vmem:[%s413 + $0x80] sm:$0xff] %v5639
        %5672 = vst [vmem:[%s413 + $0x88] sm:$0xff] %v5640
        %5673 = vst [vmem:[%s413 + $0x90] sm:$0xff] %v5641
        %5674 = vst [vmem:[%s413 + $0x98] sm:$0xff] %v5642
        %5675 = vst [vmem:[%s413 + $0xa0] sm:$0xff] %v5643
        %5676 = vst [vmem:[%s413 + $0xa8] sm:$0xff] %v5644
        %5677 = vst [vmem:[%s413 + $0xb0] sm:$0xff] %v5645
        %5678 = vst [vmem:[%s413 + $0xb8] sm:$0xff] %v5646
        %5679 = vst [vmem:[%s413 + $0xc0] sm:$0xff] %v5647
        %5680 = vst [vmem:[%s413 + $0xc8] sm:$0xff] %v5648
        %5681 = vst [vmem:[%s413 + $0xd0] sm:$0xff] %v5649
        %5682 = vst [vmem:[%s413 + $0xd8] sm:$0xff] %v5650
        %5683 = vst [vmem:[%s413 + $0xe0] sm:$0xff] %v5651
        %5684 = vst [vmem:[%s413 + $0xe8] sm:$0xff] %v5652
        %5685 = vst [vmem:[%s413 + $0xf0] sm:$0xff] %v5653
        %5686 = vst [vmem:[%s413 + $0xf8] sm:$0xff] %v5654
        %s5687 = sand.u32 %s256, 1
        %s5688 = scalar_lea.sflag [#allocation6], %s5687
        %s5689 = sand.u32 %s256, 1
        %s5690 = smul.addr %s5689, 256
        %s5691 = scalar_lea.vmem [#allocation10], %s5690
        // Predicated region
        $region73: #{tpu_custom_call.1} parent=59 // pred_check
          %p5692 = pneg %p266
        $region74: #{tpu_custom_call.1} parent=59 // pred_check_branch
          %5694 = sbr.rel (%p5692) target = $region76
        $region75: #{tpu_custom_call.1} parent=59 // pred_region
          %s5696 = ssub.s32 4096, 4096
          %5697 = vsyncadd %s5688, %s5696
          %s5698 = smul.addr %s28, 32
          %s5699 = smul.addr %s5698, 128
          %s5700 = scalar_lea.hbm %s10, %s5699
          %s5701 = sshll.u32 %s5691, 4
          %s5702 = int_to_ptr.vmem [resolvable:$true] %s5701
          %5707 = dma.vmem_to_hbm [thread:$0]  %s5702, 4096, %s5700, %s5688, 128, 128, 8
        $region76: #{tpu_custom_call.1} parent=59 // pred_fallthru
          _
      $region60: #{tpu_custom_call.1} parent=5 // pred_fallthru
        _
      %p5708 = scmp.le.s32.totalorder 2, %s23
      // Predicated region
      $region77: #{tpu_custom_call.1} parent=5 // pred_check
        %p5709 = pneg %p5708
      $region78: #{tpu_custom_call.1} parent=5 // pred_check_branch
        %5711 = sbr.rel (%p5709) target = $region80
      $region79: #{tpu_custom_call.1} parent=5 // pred_region
        %s5712 = ssub.s32 %s23, 2
        // Predicated region
        $region81: #{tpu_custom_call.1} parent=79 // pred_check
          %p5713 = pneg %p272
        $region82: #{tpu_custom_call.1} parent=79 // pred_check_branch
          %5715 = sbr.rel (%p5713) target = $region84
        $region83: #{tpu_custom_call.1} parent=79 // pred_region
          %s5716 = sand.u32 %s257, 1
          %s5717 = scalar_lea.sflag [#allocation6], %s5716
          %s5718 = sand.u32 %s257, 1
          %s5719 = smul.addr %s5718, 256
          %s5720 = scalar_lea.vmem [#allocation10], %s5719
          %5721 = dma.done %s5717, 4096
        $region84: #{tpu_custom_call.1} parent=79 // pred_fallthru
          _
      $region80: #{tpu_custom_call.1} parent=5 // pred_fallthru
        _
    $region6: #{tpu_custom_call.1} parent=1 // loop_footer
      %s27 = sadd.s32 1, %s23
    $region7: #{tpu_custom_call.1} parent=1 // loop_footer_branch
      %22 = sbr.rel target = $region3
    $region8: #{tpu_custom_call.1} parent=1 // loop_exit
      _
    %5722 = vsyncpa [#allocation5], 1
    %s5723 = scalar_lea.sflag [#allocation5], 1
    %5724 = vsyncpa %s5723, 1
    %5725 = vsyncpa [#allocation8], 1
    %5726 = vsyncpa [#allocation6], 1
    %s5727 = scalar_lea.sflag [#allocation6], 1
    %5728 = vsyncpa %s5727, 1

</llo_original>
